<compile_context>
chip_gen: v5e
topology: v5e:2x2
jax: 0.10.0
libtpu: 0.0.40
codegen_flags: <defaults>
</compile_context>

<pallas_src>
import math
from functools import partial

import jax
import jax.numpy as jnp
from jax.experimental import pallas as pl
from jax.experimental.pallas import tpu as pltpu


# ----------------------------------------------------------------------------- helpers
def _round_up(v, m):
    return ((v + m - 1) // m) * m


def _pad2d(a, rows, cols):
    r, c = a.shape
    return jnp.pad(a, ((0, rows - r), (0, cols - c)))


def _row_tiling(n, block_rows):
    """Row tile (multiple of 16 for bf16 sublane packing) and padded node count."""
    tm = max(16, _round_up(min(block_rows, n), 16))
    n_pad = _round_up(n, tm)
    return tm, n_pad


# ----------------------------------------------------------------------------- kernels
def support_kernel(x_ref, w_ref, o_ref):
    # support = x @ W  (bf16 inputs, f32 MXU accumulation)
    o_ref[...] = jnp.dot(
        x_ref[...], w_ref[...], preferred_element_type=jnp.float32
    ).astype(o_ref.dtype)


def aggregate_kernel(adj_ref, s_ref, b_ref, o_ref, *, apply_relu):
    # out = adj_tile @ support + bias  (bias added exactly once per output tile)
    acc = jnp.dot(adj_ref[...], s_ref[...], preferred_element_type=jnp.float32)
    acc = acc + b_ref[...]
    if apply_relu:
        acc = jnp.maximum(acc, 0.0)
    o_ref[...] = acc.astype(o_ref.dtype)


# ----------------------------------------------------------------------------- one GCN layer
def graph_convolution(x_bf, adj_bf, w_bf, bias2d, *, tm, apply_relu, out_dtype):
    """One GraphConvolution layer on pre-padded operands.

    x_bf   : [N_pad, IN_pad]   bf16
    adj_bf : [N_pad, N_pad]    bf16
    w_bf   : [IN_pad, OUT_pad] bf16
    bias2d : [1, OUT_pad]      f32
    returns [N_pad, OUT_pad]   out_dtype
    """
    n_pad, in_pad = x_bf.shape
    out_pad = w_bf.shape[1]
    grid = (n_pad // tm,)

    params = pltpu.CompilerParams(
        dimension_semantics=("parallel",),
        vmem_limit_bytes=48 * 1024 * 1024,
    )

    # ---- (1) support = x @ W : x row-tiled, W fully resident -------------------
    support = pl.pallas_call(
        support_kernel,
        out_shape=jax.ShapeDtypeStruct((n_pad, out_pad), jnp.bfloat16),
        grid=grid,
        in_specs=[
            pl.BlockSpec((tm, in_pad), lambda i: (i, 0)),
            pl.BlockSpec((in_pad, out_pad), lambda i: (0, 0)),
        ],
        out_specs=pl.BlockSpec((tm, out_pad), lambda i: (i, 0)),
        compiler_params=params,
        cost_estimate=pl.CostEstimate(
            flops=2 * n_pad * in_pad * out_pad,
            transcendentals=0,
            bytes_accessed=2 * (n_pad * in_pad + in_pad * out_pad + n_pad * out_pad),
        ),
    )(x_bf, w_bf)

    # ---- (2) out = adj @ support + bias : adj row-tiled (HBM-heavy stream) -----
    out_itemsize = jnp.dtype(out_dtype).itemsize
    out = pl.pallas_call(
        partial(aggregate_kernel, apply_relu=apply_relu),
        out_shape=jax.ShapeDtypeStruct((n_pad, out_pad), out_dtype),
        grid=grid,
        in_specs=[
            pl.BlockSpec((tm, n_pad), lambda i: (i, 0)),       # adj row tile (streamed)
            pl.BlockSpec((n_pad, out_pad), lambda i: (0, 0)),  # support (VMEM-resident)
            pl.BlockSpec((1, out_pad), lambda i: (0, 0)),      # bias    (VMEM-resident)
        ],
        out_specs=pl.BlockSpec((tm, out_pad), lambda i: (i, 0)),
        compiler_params=params,
        cost_estimate=pl.CostEstimate(
            flops=2 * n_pad * n_pad * out_pad,
            transcendentals=0,
            bytes_accessed=2 * n_pad * n_pad
            + 2 * n_pad * out_pad
            + 4 * out_pad
            + out_itemsize * n_pad * out_pad,
        ),
    )(adj_bf, support, bias2d)
    return out


# ----------------------------------------------------------------------------- full GCN
def gcn_forward(x, adj, w1, b1, w2, b2, *, block_rows=256):
    """GCN.forward: relu(gc1(x, adj)) -> gc2(., adj). Returns f32 [N, out_dim]."""
    n, nfeat = x.shape
    nhid = w1.shape[1]
    nout = w2.shape[1]

    tm, n_pad = _row_tiling(n, block_rows)
    f_in = _round_up(nfeat, 128)   # lane-dense feature dims (multiples of 128)
    f_hid = _round_up(nhid, 128)
    f_out = _round_up(nout, 128)

    # Pad once in the wrapper; padded rows/cols are zero so they never pollute
    # the sliced result (zero adj columns kill padded-row contributions).
    x_bf = _pad2d(x, n_pad, f_in).astype(jnp.bfloat16)
    adj_bf = _pad2d(adj, n_pad, n_pad).astype(jnp.bfloat16)
    w1_bf = _pad2d(w1, f_in, f_hid).astype(jnp.bfloat16)
    w2_bf = _pad2d(w2, f_hid, f_out).astype(jnp.bfloat16)
    b1_p = _pad2d(b1.reshape(1, -1).astype(jnp.float32), 1, f_hid)
    b2_p = _pad2d(b2.reshape(1, -1).astype(jnp.float32), 1, f_out)

    h1 = graph_convolution(x_bf, adj_bf, w1_bf, b1_p,
                           tm=tm, apply_relu=True, out_dtype=jnp.bfloat16)
    h2 = graph_convolution(h1, adj_bf, w2_bf, b2_p,
                           tm=tm, apply_relu=False, out_dtype=jnp.float32)
    return h2[:n, :nout]


# ----------------------------------------------------------------------------- reference
def gcn_reference(x, adj, w1, b1, w2, b2):
    """Plain-JAX reference with the same bf16-input / f32-accumulate math."""
    xb = x.astype(jnp.bfloat16)
    ab = adj.astype(jnp.bfloat16)
    w1b = w1.astype(jnp.bfloat16)
    w2b = w2.astype(jnp.bfloat16)

    s1 = jnp.dot(xb, w1b, preferred_element_type=jnp.float32).astype(jnp.bfloat16)
    h1 = jnp.dot(ab, s1, preferred_element_type=jnp.float32) + b1
    h1 = jnp.maximum(h1, 0.0).astype(jnp.bfloat16)

    s2 = jnp.dot(h1, w2b, preferred_element_type=jnp.float32).astype(jnp.bfloat16)
    out = jnp.dot(ab, s2, preferred_element_type=jnp.float32) + b2
    return out


if __name__ == "__main__":
    # TextEncoder's GCN: nfeat=600 -> nhid=600 -> output_dim=1024, 18 graph nodes.
    N, NFEAT, NHID, NOUT = 18, 600, 600, 1024

    key = jax.random.PRNGKey(0)
    kx, kadj, kw1, kb1, kw2, kb2 = jax.random.split(key, 6)

    # reset_parameters(): uniform(-stdv, stdv) with stdv = 1/sqrt(out_features)
    std1 = 1.0 / math.sqrt(NHID)
    std2 = 1.0 / math.sqrt(NOUT)
    w1 = jax.random.uniform(kw1, (NFEAT, NHID), minval=-std1, maxval=std1, dtype=jnp.float32)
    b1 = jax.random.uniform(kb1, (NHID,), minval=-std1, maxval=std1, dtype=jnp.float32)
    w2 = jax.random.uniform(kw2, (NHID, NOUT), minval=-std2, maxval=std2, dtype=jnp.float32)
    b2 = jax.random.uniform(kb2, (NOUT,), minval=-std2, maxval=std2, dtype=jnp.float32)

    x = jax.random.normal(kx, (N, NFEAT), dtype=jnp.float32)
    adj_raw = jax.random.uniform(kadj, (N, N), dtype=jnp.float32)
    adj = 0.5 * (adj_raw + adj_raw.T)   # symmetric dense adjacency

    # block_rows=16 so the tiny demo graph still exercises a multi-step grid.
    run = jax.jit(partial(gcn_forward, block_rows=16))
    out = run(x, adj, w1, b1, w2, b2)
    out = jax.block_until_ready(out)

    ref = gcn_reference(x, adj, w1, b1, w2, b2)
    assert out.shape == (N, NOUT)
    assert jnp.allclose(out, ref, atol=5e-3, rtol=5e-3), float(jnp.max(jnp.abs(out - ref)))

    print("KERNEL_OK")
</pallas_src>

<mosaic_0001>
module attributes {stable_mosaic.version = 11 : i64} {
  func.func @support_kernel(%arg0: i32, %arg1: memref<16x640xbf16, #tpu.memory_space<vmem>>, %arg2: memref<640x640xbf16, #tpu.memory_space<vmem>>, %arg3: memref<16x640xbf16, #tpu.memory_space<vmem>>) attributes {dimension_semantics = [#tpu.dimension_semantics<parallel>], iteration_bounds = array<i64: 2>, scalar_prefetch = 0 : i64, scratch_operands = 0 : i64, tpu.core_type = #tpu.core_type<tc>, window_params = [{transform_indices = @transform_0, window_bounds = array<i64: 16, 640>}, {pipeline_mode = #tpu.pipeline_mode<synchronous>, transform_indices = @transform_1, window_bounds = array<i64: 640, 640>}, {transform_indices = @transform_2, window_bounds = array<i64: 16, 640>}]} {
    %c0 = arith.constant 0 : index
    %c0_0 = arith.constant 0 : index
    %0 = vector.load %arg1[%c0, %c0_0] : memref<16x640xbf16, #tpu.memory_space<vmem>>, vector<16x640xbf16>
    %c0_1 = arith.constant 0 : index
    %c0_2 = arith.constant 0 : index
    %1 = vector.load %arg2[%c0_1, %c0_2] : memref<640x640xbf16, #tpu.memory_space<vmem>>, vector<640x640xbf16>
    %cst = arith.constant dense<0.000000e+00> : vector<16x640xf32>
    %2 = tpu.matmul %0, %1, %cst {dimension_numbers = #tpu.dot_dimension_numbers<[1], [0], [0], [1], [0, 0, 1, 1], [], []>} : vector<16x640xbf16>, vector<640x640xbf16>, vector<16x640xf32> -> vector<16x640xf32>
    %3 = arith.truncf %2 : vector<16x640xf32> to vector<16x640xbf16>
    %c0_3 = arith.constant 0 : index
    %c0_4 = arith.constant 0 : index
    %4 = vector.load %arg3[%c0_3, %c0_4] : memref<16x640xbf16, #tpu.memory_space<vmem>>, vector<16x640xbf16>
    tpu.vector_store %arg3[%c0_3, %c0_4], %3 {strides = array<i32>} : memref<16x640xbf16, #tpu.memory_space<vmem>>, vector<16x640xbf16>,
    return
  }
  func.func @transform_0(%arg0: i32) -> (i32, i32) {
    %c0_i32 = arith.constant 0 : i32
    %c0_i32_0 = arith.constant 0 : i32
    return %arg0, %c0_i32 : i32, i32
  }
  func.func @transform_1(%arg0: i32) -> (i32, i32) {
    %c0_i32 = arith.constant 0 : i32
    %c0_i32_0 = arith.constant 0 : i32
    %c0_i32_1 = arith.constant 0 : i32
    return %c0_i32, %c0_i32_0 : i32, i32
  }
  func.func @transform_2(%arg0: i32) -> (i32, i32) {
    %c0_i32 = arith.constant 0 : i32
    %c0_i32_0 = arith.constant 0 : i32
    return %arg0, %c0_i32 : i32, i32
  }
}

module attributes {stable_mosaic.version = 11 : i64} {
  func.func @aggregate_kernel(%arg0: i32, %arg1: memref<16x32xbf16, #tpu.memory_space<vmem>>, %arg2: memref<32x640xbf16, #tpu.memory_space<vmem>>, %arg3: memref<1x640xf32, #tpu.memory_space<vmem>>, %arg4: memref<16x640xbf16, #tpu.memory_space<vmem>>) attributes {dimension_semantics = [#tpu.dimension_semantics<parallel>], iteration_bounds = array<i64: 2>, scalar_prefetch = 0 : i64, scratch_operands = 0 : i64, tpu.core_type = #tpu.core_type<tc>, window_params = [{transform_indices = @transform_0, window_bounds = array<i64: 16, 32>}, {pipeline_mode = #tpu.pipeline_mode<synchronous>, transform_indices = @transform_1, window_bounds = array<i64: 32, 640>}, {pipeline_mode = #tpu.pipeline_mode<synchronous>, transform_indices = @transform_2, window_bounds = array<i64: 1, 640>}, {transform_indices = @transform_3, window_bounds = array<i64: 16, 640>}]} {
    %c0 = arith.constant 0 : index
    %c0_0 = arith.constant 0 : index
    %0 = vector.load %arg1[%c0, %c0_0] : memref<16x32xbf16, #tpu.memory_space<vmem>>, vector<16x32xbf16>
    %c0_1 = arith.constant 0 : index
    %c0_2 = arith.constant 0 : index
    %1 = vector.load %arg2[%c0_1, %c0_2] : memref<32x640xbf16, #tpu.memory_space<vmem>>, vector<32x640xbf16>
    %cst = arith.constant dense<0.000000e+00> : vector<16x640xf32>
    %2 = tpu.matmul %0, %1, %cst {dimension_numbers = #tpu.dot_dimension_numbers<[1], [0], [0], [1], [0, 0, 1, 1], [], []>} : vector<16x32xbf16>, vector<32x640xbf16>, vector<16x640xf32> -> vector<16x640xf32>
    %c0_3 = arith.constant 0 : index
    %c0_4 = arith.constant 0 : index
    %3 = vector.load %arg3[%c0_3, %c0_4] : memref<1x640xf32, #tpu.memory_space<vmem>>, vector<1x640xf32>
    %4 = vector.broadcast %3 : vector<1x640xf32> to vector<16x640xf32>
    %5 = arith.addf %2, %4 : vector<16x640xf32>
    %cst_5 = arith.constant 0.000000e+00 : f32
    %6 = vector.broadcast %cst_5 : f32 to vector<16x640xf32>
    %7 = arith.maximumf %5, %6 : vector<16x640xf32>
    %8 = arith.truncf %7 : vector<16x640xf32> to vector<16x640xbf16>
    %c0_6 = arith.constant 0 : index
    %c0_7 = arith.constant 0 : index
    %9 = vector.load %arg4[%c0_6, %c0_7] : memref<16x640xbf16, #tpu.memory_space<vmem>>, vector<16x640xbf16>
    tpu.vector_store %arg4[%c0_6, %c0_7], %8 {strides = array<i32>} : memref<16x640xbf16, #tpu.memory_space<vmem>>, vector<16x640xbf16>,
    return
  }
  func.func @transform_0(%arg0: i32) -> (i32, i32) {
    %c0_i32 = arith.constant 0 : i32
    %c0_i32_0 = arith.constant 0 : i32
    return %arg0, %c0_i32 : i32, i32
  }
  func.func @transform_1(%arg0: i32) -> (i32, i32) {
    %c0_i32 = arith.constant 0 : i32
    %c0_i32_0 = arith.constant 0 : i32
    %c0_i32_1 = arith.constant 0 : i32
    return %c0_i32, %c0_i32_0 : i32, i32
  }
  func.func @transform_2(%arg0: i32) -> (i32, i32) {
    %c0_i32 = arith.constant 0 : i32
    %c0_i32_0 = arith.constant 0 : i32
    %c0_i32_1 = arith.constant 0 : i32
    return %c0_i32, %c0_i32_0 : i32, i32
  }
  func.func @transform_3(%arg0: i32) -> (i32, i32) {
    %c0_i32 = arith.constant 0 : i32
    %c0_i32_0 = arith.constant 0 : i32
    return %arg0, %c0_i32 : i32, i32
  }
}

module attributes {stable_mosaic.version = 11 : i64} {
  func.func @support_kernel(%arg0: i32, %arg1: memref<16x640xbf16, #tpu.memory_space<vmem>>, %arg2: memref<640x1024xbf16, #tpu.memory_space<vmem>>, %arg3: memref<16x1024xbf16, #tpu.memory_space<vmem>>) attributes {dimension_semantics = [#tpu.dimension_semantics<parallel>], iteration_bounds = array<i64: 2>, scalar_prefetch = 0 : i64, scratch_operands = 0 : i64, tpu.core_type = #tpu.core_type<tc>, window_params = [{transform_indices = @transform_0, window_bounds = array<i64: 16, 640>}, {pipeline_mode = #tpu.pipeline_mode<synchronous>, transform_indices = @transform_1, window_bounds = array<i64: 640, 1024>}, {transform_indices = @transform_2, window_bounds = array<i64: 16, 1024>}]} {
    %c0 = arith.constant 0 : index
    %c0_0 = arith.constant 0 : index
    %0 = vector.load %arg1[%c0, %c0_0] : memref<16x640xbf16, #tpu.memory_space<vmem>>, vector<16x640xbf16>
    %c0_1 = arith.constant 0 : index
    %c0_2 = arith.constant 0 : index
    %1 = vector.load %arg2[%c0_1, %c0_2] : memref<640x1024xbf16, #tpu.memory_space<vmem>>, vector<640x1024xbf16>
    %cst = arith.constant dense<0.000000e+00> : vector<16x1024xf32>
    %2 = tpu.matmul %0, %1, %cst {dimension_numbers = #tpu.dot_dimension_numbers<[1], [0], [0], [1], [0, 0, 1, 1], [], []>} : vector<16x640xbf16>, vector<640x1024xbf16>, vector<16x1024xf32> -> vector<16x1024xf32>
    %3 = arith.truncf %2 : vector<16x1024xf32> to vector<16x1024xbf16>
    %c0_3 = arith.constant 0 : index
    %c0_4 = arith.constant 0 : index
    %4 = vector.load %arg3[%c0_3, %c0_4] : memref<16x1024xbf16, #tpu.memory_space<vmem>>, vector<16x1024xbf16>
    tpu.vector_store %arg3[%c0_3, %c0_4], %3 {strides = array<i32>} : memref<16x1024xbf16, #tpu.memory_space<vmem>>, vector<16x1024xbf16>,
    return
  }
  func.func @transform_0(%arg0: i32) -> (i32, i32) {
    %c0_i32 = arith.constant 0 : i32
    %c0_i32_0 = arith.constant 0 : i32
    return %arg0, %c0_i32 : i32, i32
  }
  func.func @transform_1(%arg0: i32) -> (i32, i32) {
    %c0_i32 = arith.constant 0 : i32
    %c0_i32_0 = arith.constant 0 : i32
    %c0_i32_1 = arith.constant 0 : i32
    return %c0_i32, %c0_i32_0 : i32, i32
  }
  func.func @transform_2(%arg0: i32) -> (i32, i32) {
    %c0_i32 = arith.constant 0 : i32
    %c0_i32_0 = arith.constant 0 : i32
    return %arg0, %c0_i32 : i32, i32
  }
}

module attributes {stable_mosaic.version = 11 : i64} {
  func.func @aggregate_kernel(%arg0: i32, %arg1: memref<16x32xbf16, #tpu.memory_space<vmem>>, %arg2: memref<32x1024xbf16, #tpu.memory_space<vmem>>, %arg3: memref<1x1024xf32, #tpu.memory_space<vmem>>, %arg4: memref<16x1024xf32, #tpu.memory_space<vmem>>) attributes {dimension_semantics = [#tpu.dimension_semantics<parallel>], iteration_bounds = array<i64: 2>, scalar_prefetch = 0 : i64, scratch_operands = 0 : i64, tpu.core_type = #tpu.core_type<tc>, window_params = [{transform_indices = @transform_0, window_bounds = array<i64: 16, 32>}, {pipeline_mode = #tpu.pipeline_mode<synchronous>, transform_indices = @transform_1, window_bounds = array<i64: 32, 1024>}, {pipeline_mode = #tpu.pipeline_mode<synchronous>, transform_indices = @transform_2, window_bounds = array<i64: 1, 1024>}, {transform_indices = @transform_3, window_bounds = array<i64: 16, 1024>}]} {
    %c0 = arith.constant 0 : index
    %c0_0 = arith.constant 0 : index
    %0 = vector.load %arg1[%c0, %c0_0] : memref<16x32xbf16, #tpu.memory_space<vmem>>, vector<16x32xbf16>
    %c0_1 = arith.constant 0 : index
    %c0_2 = arith.constant 0 : index
    %1 = vector.load %arg2[%c0_1, %c0_2] : memref<32x1024xbf16, #tpu.memory_space<vmem>>, vector<32x1024xbf16>
    %cst = arith.constant dense<0.000000e+00> : vector<16x1024xf32>
    %2 = tpu.matmul %0, %1, %cst {dimension_numbers = #tpu.dot_dimension_numbers<[1], [0], [0], [1], [0, 0, 1, 1], [], []>} : vector<16x32xbf16>, vector<32x1024xbf16>, vector<16x1024xf32> -> vector<16x1024xf32>
    %c0_3 = arith.constant 0 : index
    %c0_4 = arith.constant 0 : index
    %3 = vector.load %arg3[%c0_3, %c0_4] : memref<1x1024xf32, #tpu.memory_space<vmem>>, vector<1x1024xf32>
    %4 = vector.broadcast %3 : vector<1x1024xf32> to vector<16x1024xf32>
    %5 = arith.addf %2, %4 : vector<16x1024xf32>
    %c0_5 = arith.constant 0 : index
    %c0_6 = arith.constant 0 : index
    %6 = vector.load %arg4[%c0_5, %c0_6] : memref<16x1024xf32, #tpu.memory_space<vmem>>, vector<16x1024xf32>
    tpu.vector_store %arg4[%c0_5, %c0_6], %5 {strides = array<i32>} : memref<16x1024xf32, #tpu.memory_space<vmem>>, vector<16x1024xf32>,
    return
  }
  func.func @transform_0(%arg0: i32) -> (i32, i32) {
    %c0_i32 = arith.constant 0 : i32
    %c0_i32_0 = arith.constant 0 : i32
    return %arg0, %c0_i32 : i32, i32
  }
  func.func @transform_1(%arg0: i32) -> (i32, i32) {
    %c0_i32 = arith.constant 0 : i32
    %c0_i32_0 = arith.constant 0 : i32
    %c0_i32_1 = arith.constant 0 : i32
    return %c0_i32, %c0_i32_0 : i32, i32
  }
  func.func @transform_2(%arg0: i32) -> (i32, i32) {
    %c0_i32 = arith.constant 0 : i32
    %c0_i32_0 = arith.constant 0 : i32
    %c0_i32_1 = arith.constant 0 : i32
    return %c0_i32, %c0_i32_0 : i32, i32
  }
  func.func @transform_3(%arg0: i32) -> (i32, i32) {
    %c0_i32 = arith.constant 0 : i32
    %c0_i32_0 = arith.constant 0 : i32
    return %arg0, %c0_i32 : i32, i32
  }
}

</mosaic_0001>

<llo_original>
// kernel: gcn_forward.5
$region0: #{gcn_forward.5}
  #allocation0 [shape = 'u32[]', space=smem, size = 0x4, offset = 0x4, fixed_abs, tag = 'smem constant byte address 0x4 - core index']
  #allocation1 [shape = 'u32[72,128]{1,0:T(1,128)}', space=vmem, size = 0x9000, scoped, tag = 'internal scratch']
  %s0 = inlined_call_operand.vmem [shape: bf16[32,32], index: 0, kind: input, shape index: {}]
  %s1 = inlined_call_operand.vmem [shape: bf16[32,640], index: 1, kind: input, shape index: {}]
  %s2 = inlined_call_operand.vmem [shape: f32[1,640], index: 2, kind: input, shape index: {}]
  %s3 = inlined_call_operand.vmem [shape: bf16[32,640], index: 3, kind: output, shape index: {}]
  %s4 = sld [smem:[#allocation0]]
  $region45: #{gcn_forward.5} parent=0
    _
  %s6 = ssub.s32 1, %s4
  %s7 = scalar_select 0, %s6, %s4
  loop: start=0, step=1, limit=4
  $region2: #{gcn_forward.5} parent=0 // loop_pre_header
    _
  $region3: #{gcn_forward.5} parent=0 // loop_header
    %s9 = sphi 0, %s13
    %p10 = scmp.ge.s32.totalorder %s9, 4
    %s19 = sphi 0, %s21
    %s22 = sphi 0, %s19
    %s23 = sphi 0, %s22
    %s39 = sphi 0, %s23
    %s43 = sphi 0, %s43
    %s45 = sphi 0, %s43
    %s46 = sphi 0, %s45
    %s60 = sphi 0, %s46
    %s64 = sphi 0, %s64
    %s66 = sphi 0, %s64
    %s67 = sphi 0, %s66
    %s81 = sphi 0, %s67
    %s87 = sphi 0, %s89
    %s90 = sphi 0, %s87
    %s91 = sphi 0, %s90
    %s107 = sphi 0, %s91
  $region4: #{gcn_forward.5} parent=0 // loop_header_branch
    %12 = sbr.rel (%p10) target = $region8
  $region5: #{gcn_forward.5} parent=0 // loop_body
    %s14 = ssub.s32 %s9, 1
    %s15 = ssub.s32 %s9, 2
    %s16 = sadd.s32 %s9, 1
    %s17 = ssub.s32 %s9, %s16
    %p18 = scmp.eq.s32.totalorder %s17, 0
    %s20 = sadd.s32 %s19, 1
    %s21 = scalar_select %p18, %s19, %s20
    %p24 = pneg %p18
    %p25 = scmp.eq.s32.totalorder %s9, 1
    %p26 = por %p24, %p25
    %p27 = scmp.ne.s32.totalorder %s19, %s22
    %p28 = scmp.eq.s32.totalorder %s9, 0
    %p29 = por %p27, %p28
    %p30 = scmp.ne.s32.totalorder %s19, %s22
    %p31 = scmp.eq.s32.totalorder %s14, 1
    %p32 = por %p30, %p31
    %p33 = scmp.ne.s32.totalorder %s22, %s23
    %p34 = scmp.eq.s32.totalorder %s14, 0
    %p35 = por %p33, %p34
    %p36 = scmp.ne.s32.totalorder %s22, %s23
    %p37 = scmp.eq.s32.totalorder %s15, 1
    %p38 = por %p36, %p37
    %p40 = scmp.ne.s32.totalorder %s23, %s39
    %p41 = scmp.eq.s32.totalorder %s15, 0
    %p42 = por %p40, %p41
    %s44 = sadd.s32 %s43, 1
    %p47 = scmp.eq.s32.totalorder %s9, 1
    %p48 = scmp.ne.s32.totalorder %s43, %s45
    %p49 = scmp.eq.s32.totalorder %s9, 0
    %p50 = por %p48, %p49
    %p51 = scmp.ne.s32.totalorder %s43, %s45
    %p52 = scmp.eq.s32.totalorder %s14, 1
    %p53 = por %p51, %p52
    %p54 = scmp.ne.s32.totalorder %s45, %s46
    %p55 = scmp.eq.s32.totalorder %s14, 0
    %p56 = por %p54, %p55
    %p57 = scmp.ne.s32.totalorder %s45, %s46
    %p58 = scmp.eq.s32.totalorder %s15, 1
    %p59 = por %p57, %p58
    %p61 = scmp.ne.s32.totalorder %s46, %s60
    %p62 = scmp.eq.s32.totalorder %s15, 0
    %p63 = por %p61, %p62
    %s65 = sadd.s32 %s64, 1
    %p68 = scmp.eq.s32.totalorder %s9, 1
    %p69 = scmp.ne.s32.totalorder %s64, %s66
    %p70 = scmp.eq.s32.totalorder %s9, 0
    %p71 = por %p69, %p70
    %p72 = scmp.ne.s32.totalorder %s64, %s66
    %p73 = scmp.eq.s32.totalorder %s14, 1
    %p74 = por %p72, %p73
    %p75 = scmp.ne.s32.totalorder %s66, %s67
    %p76 = scmp.eq.s32.totalorder %s14, 0
    %p77 = por %p75, %p76
    %p78 = scmp.ne.s32.totalorder %s66, %s67
    %p79 = scmp.eq.s32.totalorder %s15, 1
    %p80 = por %p78, %p79
    %p82 = scmp.ne.s32.totalorder %s67, %s81
    %p83 = scmp.eq.s32.totalorder %s15, 0
    %p84 = por %p82, %p83
    %s85 = ssub.s32 %s9, %s16
    %p86 = scmp.eq.s32.totalorder %s85, 0
    %s88 = sadd.s32 %s87, 1
    %s89 = scalar_select %p86, %s87, %s88
    %p92 = pneg %p86
    %p93 = scmp.eq.s32.totalorder %s9, 1
    %p94 = por %p92, %p93
    %p95 = scmp.ne.s32.totalorder %s87, %s90
    %p96 = scmp.eq.s32.totalorder %s9, 0
    %p97 = por %p95, %p96
    %p98 = scmp.ne.s32.totalorder %s87, %s90
    %p99 = scmp.eq.s32.totalorder %s14, 1
    %p100 = por %p98, %p99
    %p101 = scmp.ne.s32.totalorder %s90, %s91
    %p102 = scmp.eq.s32.totalorder %s14, 0
    %p103 = por %p101, %p102
    %p104 = scmp.ne.s32.totalorder %s90, %s91
    %p105 = scmp.eq.s32.totalorder %s15, 1
    %p106 = por %p104, %p105
    %p108 = scmp.ne.s32.totalorder %s91, %s107
    %p109 = scmp.eq.s32.totalorder %s15, 0
    %p110 = por %p108, %p109
    %p111 = scmp.le.s32.totalorder 1, %s9
    %p112 = scmp.lt.s32.totalorder %s9, 3
    %p113 = pnand %p111, %p112
    %p114 = pneg %p113
    // Predicated region
    $region9: #{gcn_forward.5} parent=5 // pred_check
      _
    $region10: #{gcn_forward.5} parent=5 // pred_check_branch
      %116 = sbr.rel (%p113) target = $region12
    $region11: #{gcn_forward.5} parent=5 // pred_region
      %s117 = ssub.s32 %s9, 1
      // Predicated region
      $region13: #{gcn_forward.5} parent=11 // pred_check
        %p118 = pneg %p56
      $region14: #{gcn_forward.5} parent=11 // pred_check_branch
        %120 = sbr.rel (%p118) target = $region16
      $region15: #{gcn_forward.5} parent=11 // pred_region
        _
      $region16: #{gcn_forward.5} parent=11 // pred_fallthru
        _
      // Predicated region
      $region17: #{gcn_forward.5} parent=11 // pred_check
        %p121 = pneg %p77
      $region18: #{gcn_forward.5} parent=11 // pred_check_branch
        %123 = sbr.rel (%p121) target = $region20
      $region19: #{gcn_forward.5} parent=11 // pred_region
        _
      $region20: #{gcn_forward.5} parent=11 // pred_fallthru
        _
    $region12: #{gcn_forward.5} parent=5 // pred_fallthru
      _
    %p124 = scmp.lt.s32.totalorder %s9, 2
    // Predicated region
    $region21: #{gcn_forward.5} parent=5 // pred_check
      %p125 = pneg %p124
    $region22: #{gcn_forward.5} parent=5 // pred_check_branch
      %127 = sbr.rel (%p125) target = $region24
    $region23: #{gcn_forward.5} parent=5 // pred_region
      // Predicated region
      $region25: #{gcn_forward.5} parent=23 // pred_check
        %p128 = pneg %p29
      $region26: #{gcn_forward.5} parent=23 // pred_check_branch
        %130 = sbr.rel (%p128) target = $region28
      $region27: #{gcn_forward.5} parent=23 // pred_region
        %s131 = smul.u32 2, %s9
        %p132 = scmp.lt.s32.totalorder %s131, 3
        %s133 = scalar_select %p132, %s131, 3
        %s134 = smul.addr %s133, 4
        %s135 = scalar_lea.vmem %s0, %s134
        %s136 = smul.u32 2, %s9
      $region28: #{gcn_forward.5} parent=23 // pred_fallthru
        _
    $region24: #{gcn_forward.5} parent=5 // pred_fallthru
      _
    %p137 = scmp.le.s32.totalorder 1, %s9
    %p138 = scmp.lt.s32.totalorder %s9, 3
    %p139 = pnand %p137, %p138
    %p140 = pneg %p139
    // Predicated region
    $region29: #{gcn_forward.5} parent=5 // pred_check
      _
    $region30: #{gcn_forward.5} parent=5 // pred_check_branch
      %142 = sbr.rel (%p139) target = $region32
    $region31: #{gcn_forward.5} parent=5 // pred_region
      %s143 = ssub.s32 %s9, 1
      %s144 = smul.u32 2, %s14
      %p145 = scmp.lt.s32.totalorder %s144, 3
      %s146 = scalar_select %p145, %s144, 3
      %s147 = smul.addr %s146, 4
      %s148 = scalar_lea.vmem %s0, %s147
      %p149 = pneg %p35
      %p150 = pneg %p32
      %p151 = pneg %p56
      %p152 = pneg %p53
      %p153 = pneg %p77
      %p154 = pneg %p74
      %p155 = pneg %p103
      %p156 = pneg %p100
      %s157 = smul.u32 2, %s14
      %p158 = scmp.lt.s32.totalorder %s157, 3
      %s159 = scalar_select %p158, %s157, 3
      %s160 = smul.addr %s159, 5
      %s161 = smul.addr %s160, 4
      %s162 = scalar_lea.vmem %s3, %s161
      %s163 = smul.u32 2, %s14
      %p164 = scmp.lt.s32.totalorder %s163, 3
      %s165 = scalar_select %p164, %s163, 3
      %s166 = smul.addr %s165, 4
      %s167 = scalar_lea.vmem %s0, %s166
      %s168 = smul.u32 2, %s14
      %s169 = smul.u32 2, %s14
      %p170 = scmp.lt.s32.totalorder %s169, 3
      %s171 = scalar_select %p170, %s169, 3
      %s172 = smul.addr %s171, 5
      %s173 = smul.addr %s172, 4
      %s174 = scalar_lea.vmem %s3, %s173
      %s175 = smul.u32 2, %s14
      %v177 = vld [vmem:[%s167] sm:$0xf]
      %v178 = vld [vmem:[%s167 + $0x4] sm:$0xf]
      %v179 = vld [vmem:[%s1] sm:$0xff]
      %v180 = vld [vmem:[%s1 + $0x8] sm:$0xff]
      %v181 = vld [vmem:[%s1 + $0x10] sm:$0xf]
      %v182 = vld [vmem:[%s1 + $0x14] sm:$0xff]
      %v183 = vld [vmem:[%s1 + $0x1c] sm:$0xff]
      %v184 = vld [vmem:[%s1 + $0x24] sm:$0xf]
      %v185 = vld [vmem:[%s1 + $0x28] sm:$0xff]
      %v186 = vld [vmem:[%s1 + $0x30] sm:$0xff]
      %v187 = vld [vmem:[%s1 + $0x38] sm:$0xf]
      %v188 = vld [vmem:[%s1 + $0x3c] sm:$0xff]
      %v189 = vld [vmem:[%s1 + $0x44] sm:$0xff]
      %v190 = vld [vmem:[%s1 + $0x4c] sm:$0xf]
      %v191 = vld [vmem:[%s2] sm:$0x1f]
      %v193 = vperm.slane %v191, 0
      %v194 = vperm.slane %v191, 1
      %v195 = vperm.slane %v191, 2
      %v196 = vperm.slane %v191, 3
      %v197 = vperm.slane %v191, 4
      %v205 = vunpack.c.l.b16 %v177
      %v206 = vunpack.c.l.b16 %v178
      %v207 = vpack.c.b16 %v206, %v205
      %v220 = vunpack.c.l.b16 %v179
      %v221 = vunpack.c.h.b16 %v179
      %v222 = vunpack.c.l.b16 %v180
      %v223 = vunpack.c.h.b16 %v180
      %v224 = vunpack.c.l.b16 %v181
      %v225 = vunpack.c.l.b16 %v182
      %v226 = vunpack.c.h.b16 %v182
      %v227 = vunpack.c.l.b16 %v183
      %v228 = vunpack.c.h.b16 %v183
      %v229 = vunpack.c.l.b16 %v184
      %v230 = vunpack.c.l.b16 %v185
      %v231 = vunpack.c.h.b16 %v185
      %v232 = vunpack.c.l.b16 %v186
      %v233 = vunpack.c.h.b16 %v186
      %v234 = vunpack.c.l.b16 %v187
      %v235 = vunpack.c.l.b16 %v188
      %v236 = vunpack.c.h.b16 %v188
      %v237 = vunpack.c.l.b16 %v189
      %v238 = vunpack.c.h.b16 %v189
      %v239 = vunpack.c.l.b16 %v190
      %v240 = vpack.c.b16 %v225, %v220
      %v241 = vpack.c.b16 %v226, %v221
      %v242 = vpack.c.b16 %v227, %v222
      %v243 = vpack.c.b16 %v228, %v223
      %v244 = vpack.c.b16 %v229, %v224
      %v245 = vpack.c.b16 %v235, %v230
      %v246 = vpack.c.b16 %v236, %v231
      %v247 = vpack.c.b16 %v237, %v232
      %v248 = vpack.c.b16 %v238, %v233
      %v249 = vpack.c.b16 %v239, %v234
      %vm260 = vcmask 261120
      %v262 = vsel %vm260, %v207, 0
      %264 = vmatpush.bf16.msra.mxu0 0
      %265 = vmatpush.bf16.msra.mxu0 0
      %266 = vmatpush.bf16.msra.mxu0 0
      %267 = vmatpush.bf16.msra.mxu0 0
      %268 = vmatpush.bf16.msra.mxu0 0
      %269 = vmatpush.bf16.msra.mxu0 0
      %270 = vmatpush.bf16.msra.mxu0 %v245
      %271 = vmatpush.bf16.msra.mxu0 %v240
      %272 = vmatmul.bf16.gmra.mxu0 %v262
      %v273 = vpop.f32.mrf.mxu0
      %v274 = vadd.f32 %v193, %v273
      %v275 = vpop.f32.mrf.mxu0
      %v276 = vadd.f32 %v193, %v275
      %277 = vdwg.mxu0
      %278 = vmatpush.bf16.msra.mxu0 0
      %279 = vmatpush.bf16.msra.mxu0 0
      %280 = vmatpush.bf16.msra.mxu0 0
      %281 = vmatpush.bf16.msra.mxu0 0
      %282 = vmatpush.bf16.msra.mxu0 0
      %283 = vmatpush.bf16.msra.mxu0 0
      %284 = vmatpush.bf16.msra.mxu0 %v246
      %285 = vmatpush.bf16.msra.mxu0 %v241
      %286 = vmatmul.bf16.gmra.mxu0 %v262
      %v287 = vpop.f32.mrf.mxu0
      %v288 = vadd.f32 %v194, %v287
      %v289 = vpop.f32.mrf.mxu0
      %v290 = vadd.f32 %v194, %v289
      %291 = vdwg.mxu0
      %292 = vmatpush.bf16.msra.mxu0 0
      %293 = vmatpush.bf16.msra.mxu0 0
      %294 = vmatpush.bf16.msra.mxu0 0
      %295 = vmatpush.bf16.msra.mxu0 0
      %296 = vmatpush.bf16.msra.mxu0 0
      %297 = vmatpush.bf16.msra.mxu0 0
      %298 = vmatpush.bf16.msra.mxu0 %v247
      %299 = vmatpush.bf16.msra.mxu0 %v242
      %300 = vmatmul.bf16.gmra.mxu0 %v262
      %v301 = vpop.f32.mrf.mxu0
      %v302 = vadd.f32 %v195, %v301
      %v303 = vpop.f32.mrf.mxu0
      %v304 = vadd.f32 %v195, %v303
      %305 = vdwg.mxu0
      %306 = vmatpush.bf16.msra.mxu0 0
      %307 = vmatpush.bf16.msra.mxu0 0
      %308 = vmatpush.bf16.msra.mxu0 0
      %309 = vmatpush.bf16.msra.mxu0 0
      %310 = vmatpush.bf16.msra.mxu0 0
      %311 = vmatpush.bf16.msra.mxu0 0
      %312 = vmatpush.bf16.msra.mxu0 %v248
      %313 = vmatpush.bf16.msra.mxu0 %v243
      %314 = vmatmul.bf16.gmra.mxu0 %v262
      %v315 = vpop.f32.mrf.mxu0
      %v316 = vadd.f32 %v196, %v315
      %v317 = vpop.f32.mrf.mxu0
      %v318 = vadd.f32 %v196, %v317
      %319 = vdwg.mxu0
      %320 = vmatpush.bf16.msra.mxu0 0
      %321 = vmatpush.bf16.msra.mxu0 0
      %322 = vmatpush.bf16.msra.mxu0 0
      %323 = vmatpush.bf16.msra.mxu0 0
      %324 = vmatpush.bf16.msra.mxu0 0
      %325 = vmatpush.bf16.msra.mxu0 0
      %326 = vmatpush.bf16.msra.mxu0 %v249
      %327 = vmatpush.bf16.msra.mxu0 %v244
      %328 = vmatmul.bf16.gmra.mxu0 %v262
      %v329 = vpop.f32.mrf.mxu0
      %v330 = vadd.f32 %v197, %v329
      %v331 = vpop.f32.mrf.mxu0
      %v332 = vadd.f32 %v197, %v331
      %333 = vdwg.mxu0
      %v334 = vmax.f32 %v274, 0.0
      %v335 = vmax.f32 %v288, 0.0
      %v336 = vmax.f32 %v302, 0.0
      %v337 = vmax.f32 %v316, 0.0
      %v338 = vmax.f32 %v330, 0.0
      %v339 = vmax.f32 %v276, 0.0
      %v340 = vmax.f32 %v290, 0.0
      %v341 = vmax.f32 %v304, 0.0
      %v342 = vmax.f32 %v318, 0.0
      %v343 = vmax.f32 %v332, 0.0
      %v344 = vpack.c.bf16 %v335, %v334
      %v345 = vpack.c.bf16 %v337, %v336
      %v346 = vpack.c.bf16 %v338, %v338
      %v347 = vpack.c.bf16 %v340, %v339
      %v348 = vpack.c.bf16 %v342, %v341
      %v349 = vpack.c.bf16 %v343, %v343
      %350 = vst [vmem:[%s174] sm:$0xff] %v344
      %351 = vst [vmem:[%s174 + $0x8] sm:$0xff] %v345
      %352 = vst [vmem:[%s174 + $0x10] sm:$0xf] %v346
      %353 = vst [vmem:[%s174 + $0x14] sm:$0xff] %v347
      %354 = vst [vmem:[%s174 + $0x1c] sm:$0xff] %v348
      %355 = vst [vmem:[%s174 + $0x24] sm:$0xf] %v349
      %s356 = smul.u32 2, %s14
      %p357 = scmp.lt.s32.totalorder %s356, 3
      %s358 = scalar_select %p357, %s356, 3
      %s359 = smul.addr %s358, 5
      %s360 = smul.addr %s359, 4
      %s361 = scalar_lea.vmem %s3, %s360
      // Predicated region
      $region33: #{gcn_forward.5} parent=31 // pred_check
        %p362 = pneg %p100
      $region34: #{gcn_forward.5} parent=31 // pred_check_branch
        %364 = sbr.rel (%p362) target = $region36
      $region35: #{gcn_forward.5} parent=31 // pred_region
        %s365 = smul.u32 2, %s14
      $region36: #{gcn_forward.5} parent=31 // pred_fallthru
        _
    $region32: #{gcn_forward.5} parent=5 // pred_fallthru
      _
    %p366 = scmp.le.s32.totalorder 2, %s9
    // Predicated region
    $region37: #{gcn_forward.5} parent=5 // pred_check
      %p367 = pneg %p366
    $region38: #{gcn_forward.5} parent=5 // pred_check_branch
      %369 = sbr.rel (%p367) target = $region40
    $region39: #{gcn_forward.5} parent=5 // pred_region
      %s370 = ssub.s32 %s9, 2
      // Predicated region
      $region41: #{gcn_forward.5} parent=39 // pred_check
        %p371 = pneg %p106
      $region42: #{gcn_forward.5} parent=39 // pred_check_branch
        %373 = sbr.rel (%p371) target = $region44
      $region43: #{gcn_forward.5} parent=39 // pred_region
        %s374 = smul.u32 2, %s15
        %p375 = scmp.lt.s32.totalorder %s374, 3
        %s376 = scalar_select %p375, %s374, 3
        %s377 = smul.addr %s376, 5
        %s378 = smul.addr %s377, 4
        %s379 = scalar_lea.vmem %s3, %s378
      $region44: #{gcn_forward.5} parent=39 // pred_fallthru
        _
    $region40: #{gcn_forward.5} parent=5 // pred_fallthru
      _
  $region6: #{gcn_forward.5} parent=0 // loop_footer
    %s13 = sadd.s32 1, %s9
  $region7: #{gcn_forward.5} parent=0 // loop_footer_branch
    %8 = sbr.rel target = $region3
  $region8: #{gcn_forward.5} parent=0 // loop_exit
    _

// kernel: gcn_forward.4
$region0: #{gcn_forward.4}
  #allocation0 [shape = 'u32[]', space=smem, size = 0x4, offset = 0x4, fixed_abs, tag = 'smem constant byte address 0x4 - core index']
  #allocation1 [shape = 'u32[72,128]{1,0:T(1,128)}', space=vmem, size = 0x9000, scoped, tag = 'internal scratch']
  %s0 = inlined_call_operand.vmem [shape: bf16[32,640], index: 0, kind: input, shape index: {}]
  %s1 = inlined_call_operand.vmem [shape: bf16[640,640], index: 1, kind: input, shape index: {}]
  %s2 = inlined_call_operand.vmem [shape: bf16[32,640], index: 2, kind: output, shape index: {}]
  %s3 = sld [smem:[#allocation0]]
  $region41: #{gcn_forward.4} parent=0
    _
  %s5 = ssub.s32 1, %s3
  %s6 = scalar_select 0, %s5, %s3
  loop: start=0, step=1, limit=4
  $region2: #{gcn_forward.4} parent=0 // loop_pre_header
    _
  $region3: #{gcn_forward.4} parent=0 // loop_header
    %s8 = sphi 0, %s12
    %p9 = scmp.ge.s32.totalorder %s8, 4
    %s18 = sphi 0, %s20
    %s21 = sphi 0, %s18
    %s22 = sphi 0, %s21
    %s38 = sphi 0, %s22
    %s42 = sphi 0, %s42
    %s44 = sphi 0, %s42
    %s45 = sphi 0, %s44
    %s59 = sphi 0, %s45
    %s65 = sphi 0, %s67
    %s68 = sphi 0, %s65
    %s69 = sphi 0, %s68
    %s85 = sphi 0, %s69
  $region4: #{gcn_forward.4} parent=0 // loop_header_branch
    %11 = sbr.rel (%p9) target = $region8
  $region5: #{gcn_forward.4} parent=0 // loop_body
    %s13 = ssub.s32 %s8, 1
    %s14 = ssub.s32 %s8, 2
    %s15 = sadd.s32 %s8, 1
    %s16 = ssub.s32 %s8, %s15
    %p17 = scmp.eq.s32.totalorder %s16, 0
    %s19 = sadd.s32 %s18, 1
    %s20 = scalar_select %p17, %s18, %s19
    %p23 = pneg %p17
    %p24 = scmp.eq.s32.totalorder %s8, 1
    %p25 = por %p23, %p24
    %p26 = scmp.ne.s32.totalorder %s18, %s21
    %p27 = scmp.eq.s32.totalorder %s8, 0
    %p28 = por %p26, %p27
    %p29 = scmp.ne.s32.totalorder %s18, %s21
    %p30 = scmp.eq.s32.totalorder %s13, 1
    %p31 = por %p29, %p30
    %p32 = scmp.ne.s32.totalorder %s21, %s22
    %p33 = scmp.eq.s32.totalorder %s13, 0
    %p34 = por %p32, %p33
    %p35 = scmp.ne.s32.totalorder %s21, %s22
    %p36 = scmp.eq.s32.totalorder %s14, 1
    %p37 = por %p35, %p36
    %p39 = scmp.ne.s32.totalorder %s22, %s38
    %p40 = scmp.eq.s32.totalorder %s14, 0
    %p41 = por %p39, %p40
    %s43 = sadd.s32 %s42, 1
    %p46 = scmp.eq.s32.totalorder %s8, 1
    %p47 = scmp.ne.s32.totalorder %s42, %s44
    %p48 = scmp.eq.s32.totalorder %s8, 0
    %p49 = por %p47, %p48
    %p50 = scmp.ne.s32.totalorder %s42, %s44
    %p51 = scmp.eq.s32.totalorder %s13, 1
    %p52 = por %p50, %p51
    %p53 = scmp.ne.s32.totalorder %s44, %s45
    %p54 = scmp.eq.s32.totalorder %s13, 0
    %p55 = por %p53, %p54
    %p56 = scmp.ne.s32.totalorder %s44, %s45
    %p57 = scmp.eq.s32.totalorder %s14, 1
    %p58 = por %p56, %p57
    %p60 = scmp.ne.s32.totalorder %s45, %s59
    %p61 = scmp.eq.s32.totalorder %s14, 0
    %p62 = por %p60, %p61
    %s63 = ssub.s32 %s8, %s15
    %p64 = scmp.eq.s32.totalorder %s63, 0
    %s66 = sadd.s32 %s65, 1
    %s67 = scalar_select %p64, %s65, %s66
    %p70 = pneg %p64
    %p71 = scmp.eq.s32.totalorder %s8, 1
    %p72 = por %p70, %p71
    %p73 = scmp.ne.s32.totalorder %s65, %s68
    %p74 = scmp.eq.s32.totalorder %s8, 0
    %p75 = por %p73, %p74
    %p76 = scmp.ne.s32.totalorder %s65, %s68
    %p77 = scmp.eq.s32.totalorder %s13, 1
    %p78 = por %p76, %p77
    %p79 = scmp.ne.s32.totalorder %s68, %s69
    %p80 = scmp.eq.s32.totalorder %s13, 0
    %p81 = por %p79, %p80
    %p82 = scmp.ne.s32.totalorder %s68, %s69
    %p83 = scmp.eq.s32.totalorder %s14, 1
    %p84 = por %p82, %p83
    %p86 = scmp.ne.s32.totalorder %s69, %s85
    %p87 = scmp.eq.s32.totalorder %s14, 0
    %p88 = por %p86, %p87
    %p89 = scmp.le.s32.totalorder 1, %s8
    %p90 = scmp.lt.s32.totalorder %s8, 3
    %p91 = pnand %p89, %p90
    %p92 = pneg %p91
    // Predicated region
    $region9: #{gcn_forward.4} parent=5 // pred_check
      _
    $region10: #{gcn_forward.4} parent=5 // pred_check_branch
      %94 = sbr.rel (%p91) target = $region12
    $region11: #{gcn_forward.4} parent=5 // pred_region
      %s95 = ssub.s32 %s8, 1
      // Predicated region
      $region13: #{gcn_forward.4} parent=11 // pred_check
        %p96 = pneg %p55
      $region14: #{gcn_forward.4} parent=11 // pred_check_branch
        %98 = sbr.rel (%p96) target = $region16
      $region15: #{gcn_forward.4} parent=11 // pred_region
        _
      $region16: #{gcn_forward.4} parent=11 // pred_fallthru
        _
    $region12: #{gcn_forward.4} parent=5 // pred_fallthru
      _
    %p99 = scmp.lt.s32.totalorder %s8, 2
    // Predicated region
    $region17: #{gcn_forward.4} parent=5 // pred_check
      %p100 = pneg %p99
    $region18: #{gcn_forward.4} parent=5 // pred_check_branch
      %102 = sbr.rel (%p100) target = $region20
    $region19: #{gcn_forward.4} parent=5 // pred_region
      // Predicated region
      $region21: #{gcn_forward.4} parent=19 // pred_check
        %p103 = pneg %p28
      $region22: #{gcn_forward.4} parent=19 // pred_check_branch
        %105 = sbr.rel (%p103) target = $region24
      $region23: #{gcn_forward.4} parent=19 // pred_region
        %s106 = smul.u32 2, %s8
        %p107 = scmp.lt.s32.totalorder %s106, 3
        %s108 = scalar_select %p107, %s106, 3
        %s109 = smul.addr %s108, 5
        %s110 = smul.addr %s109, 4
        %s111 = scalar_lea.vmem %s0, %s110
        %s112 = smul.u32 2, %s8
      $region24: #{gcn_forward.4} parent=19 // pred_fallthru
        _
    $region20: #{gcn_forward.4} parent=5 // pred_fallthru
      _
    %p113 = scmp.le.s32.totalorder 1, %s8
    %p114 = scmp.lt.s32.totalorder %s8, 3
    %p115 = pnand %p113, %p114
    %p116 = pneg %p115
    // Predicated region
    $region25: #{gcn_forward.4} parent=5 // pred_check
      _
    $region26: #{gcn_forward.4} parent=5 // pred_check_branch
      %118 = sbr.rel (%p115) target = $region28
    $region27: #{gcn_forward.4} parent=5 // pred_region
      %s119 = ssub.s32 %s8, 1
      %s120 = smul.u32 2, %s13
      %p121 = scmp.lt.s32.totalorder %s120, 3
      %s122 = scalar_select %p121, %s120, 3
      %s123 = smul.addr %s122, 5
      %s124 = smul.addr %s123, 4
      %s125 = scalar_lea.vmem %s0, %s124
      %p126 = pneg %p34
      %p127 = pneg %p31
      %p128 = pneg %p55
      %p129 = pneg %p52
      %p130 = pneg %p81
      %p131 = pneg %p78
      %s132 = smul.u32 2, %s13
      %p133 = scmp.lt.s32.totalorder %s132, 3
      %s134 = scalar_select %p133, %s132, 3
      %s135 = smul.addr %s134, 5
      %s136 = smul.addr %s135, 4
      %s137 = scalar_lea.vmem %s2, %s136
      %s138 = smul.u32 2, %s13
      %p139 = scmp.lt.s32.totalorder %s138, 3
      %s140 = scalar_select %p139, %s138, 3
      %s141 = smul.addr %s140, 5
      %s142 = smul.addr %s141, 4
      %s143 = scalar_lea.vmem %s0, %s142
      %s144 = smul.u32 2, %s13
      %s145 = smul.u32 2, %s13
      %p146 = scmp.lt.s32.totalorder %s145, 3
      %s147 = scalar_select %p146, %s145, 3
      %s148 = smul.addr %s147, 5
      %s149 = smul.addr %s148, 4
      %s150 = scalar_lea.vmem %s2, %s149
      %s151 = smul.u32 2, %s13
      %v152 = vld [vmem:[%s143] sm:$0xff]
      %v153 = vld [vmem:[%s143 + $0x8] sm:$0xff]
      %v154 = vld [vmem:[%s143 + $0x10] sm:$0xf]
      %v155 = vld [vmem:[%s143 + $0x14] sm:$0xff]
      %v156 = vld [vmem:[%s143 + $0x1c] sm:$0xff]
      %v157 = vld [vmem:[%s143 + $0x24] sm:$0xf]
      %v158 = vld [vmem:[%s1] sm:$0xff]
      %v159 = vld [vmem:[%s1 + $0x8] sm:$0xff]
      %v160 = vld [vmem:[%s1 + $0x10] sm:$0xf]
      %v161 = vld [vmem:[%s1 + $0x14] sm:$0xff]
      %v162 = vld [vmem:[%s1 + $0x1c] sm:$0xff]
      %v163 = vld [vmem:[%s1 + $0x24] sm:$0xf]
      %v164 = vld [vmem:[%s1 + $0x28] sm:$0xff]
      %v165 = vld [vmem:[%s1 + $0x30] sm:$0xff]
      %v166 = vld [vmem:[%s1 + $0x38] sm:$0xf]
      %v167 = vld [vmem:[%s1 + $0x3c] sm:$0xff]
      %v168 = vld [vmem:[%s1 + $0x44] sm:$0xff]
      %v169 = vld [vmem:[%s1 + $0x4c] sm:$0xf]
      %v170 = vld [vmem:[%s1 + $0x50] sm:$0xff]
      %v171 = vld [vmem:[%s1 + $0x58] sm:$0xff]
      %v172 = vld [vmem:[%s1 + $0x60] sm:$0xf]
      %v173 = vld [vmem:[%s1 + $0x64] sm:$0xff]
      %v174 = vld [vmem:[%s1 + $0x6c] sm:$0xff]
      %v175 = vld [vmem:[%s1 + $0x74] sm:$0xf]
      %v176 = vld [vmem:[%s1 + $0x78] sm:$0xff]
      %v177 = vld [vmem:[%s1 + $0x80] sm:$0xff]
      %v178 = vld [vmem:[%s1 + $0x88] sm:$0xf]
      %v179 = vld [vmem:[%s1 + $0x8c] sm:$0xff]
      %v180 = vld [vmem:[%s1 + $0x94] sm:$0xff]
      %v181 = vld [vmem:[%s1 + $0x9c] sm:$0xf]
      %v182 = vld [vmem:[%s1 + $0xa0] sm:$0xff]
      %v183 = vld [vmem:[%s1 + $0xa8] sm:$0xff]
      %v184 = vld [vmem:[%s1 + $0xb0] sm:$0xf]
      %v185 = vld [vmem:[%s1 + $0xb4] sm:$0xff]
      %v186 = vld [vmem:[%s1 + $0xbc] sm:$0xff]
      %v187 = vld [vmem:[%s1 + $0xc4] sm:$0xf]
      %v188 = vld [vmem:[%s1 + $0xc8] sm:$0xff]
      %v189 = vld [vmem:[%s1 + $0xd0] sm:$0xff]
      %v190 = vld [vmem:[%s1 + $0xd8] sm:$0xf]
      %v191 = vld [vmem:[%s1 + $0xdc] sm:$0xff]
      %v192 = vld [vmem:[%s1 + $0xe4] sm:$0xff]
      %v193 = vld [vmem:[%s1 + $0xec] sm:$0xf]
      %v194 = vld [vmem:[%s1 + $0xf0] sm:$0xff]
      %v195 = vld [vmem:[%s1 + $0xf8] sm:$0xff]
      %v196 = vld [vmem:[%s1 + $0x100] sm:$0xf]
      %v197 = vld [vmem:[%s1 + $0x104] sm:$0xff]
      %v198 = vld [vmem:[%s1 + $0x10c] sm:$0xff]
      %v199 = vld [vmem:[%s1 + $0x114] sm:$0xf]
      %v200 = vld [vmem:[%s1 + $0x118] sm:$0xff]
      %v201 = vld [vmem:[%s1 + $0x120] sm:$0xff]
      %v202 = vld [vmem:[%s1 + $0x128] sm:$0xf]
      %v203 = vld [vmem:[%s1 + $0x12c] sm:$0xff]
      %v204 = vld [vmem:[%s1 + $0x134] sm:$0xff]
      %v205 = vld [vmem:[%s1 + $0x13c] sm:$0xf]
      %v206 = vld [vmem:[%s1 + $0x140] sm:$0xff]
      %v207 = vld [vmem:[%s1 + $0x148] sm:$0xff]
      %v208 = vld [vmem:[%s1 + $0x150] sm:$0xf]
      %v209 = vld [vmem:[%s1 + $0x154] sm:$0xff]
      %v210 = vld [vmem:[%s1 + $0x15c] sm:$0xff]
      %v211 = vld [vmem:[%s1 + $0x164] sm:$0xf]
      %v212 = vld [vmem:[%s1 + $0x168] sm:$0xff]
      %v213 = vld [vmem:[%s1 + $0x170] sm:$0xff]
      %v214 = vld [vmem:[%s1 + $0x178] sm:$0xf]
      %v215 = vld [vmem:[%s1 + $0x17c] sm:$0xff]
      %v216 = vld [vmem:[%s1 + $0x184] sm:$0xff]
      %v217 = vld [vmem:[%s1 + $0x18c] sm:$0xf]
      %v218 = vld [vmem:[%s1 + $0x190] sm:$0xff]
      %v219 = vld [vmem:[%s1 + $0x198] sm:$0xff]
      %v220 = vld [vmem:[%s1 + $0x1a0] sm:$0xf]
      %v221 = vld [vmem:[%s1 + $0x1a4] sm:$0xff]
      %v222 = vld [vmem:[%s1 + $0x1ac] sm:$0xff]
      %v223 = vld [vmem:[%s1 + $0x1b4] sm:$0xf]
      %v224 = vld [vmem:[%s1 + $0x1b8] sm:$0xff]
      %v225 = vld [vmem:[%s1 + $0x1c0] sm:$0xff]
      %v226 = vld [vmem:[%s1 + $0x1c8] sm:$0xf]
      %v227 = vld [vmem:[%s1 + $0x1cc] sm:$0xff]
      %v228 = vld [vmem:[%s1 + $0x1d4] sm:$0xff]
      %v229 = vld [vmem:[%s1 + $0x1dc] sm:$0xf]
      %v230 = vld [vmem:[%s1 + $0x1e0] sm:$0xff]
      %v231 = vld [vmem:[%s1 + $0x1e8] sm:$0xff]
      %v232 = vld [vmem:[%s1 + $0x1f0] sm:$0xf]
      %v233 = vld [vmem:[%s1 + $0x1f4] sm:$0xff]
      %v234 = vld [vmem:[%s1 + $0x1fc] sm:$0xff]
      %v235 = vld [vmem:[%s1 + $0x204] sm:$0xf]
      %v236 = vld [vmem:[%s1 + $0x208] sm:$0xff]
      %v237 = vld [vmem:[%s1 + $0x210] sm:$0xff]
      %v238 = vld [vmem:[%s1 + $0x218] sm:$0xf]
      %v239 = vld [vmem:[%s1 + $0x21c] sm:$0xff]
      %v240 = vld [vmem:[%s1 + $0x224] sm:$0xff]
      %v241 = vld [vmem:[%s1 + $0x22c] sm:$0xf]
      %v242 = vld [vmem:[%s1 + $0x230] sm:$0xff]
      %v243 = vld [vmem:[%s1 + $0x238] sm:$0xff]
      %v244 = vld [vmem:[%s1 + $0x240] sm:$0xf]
      %v245 = vld [vmem:[%s1 + $0x244] sm:$0xff]
      %v246 = vld [vmem:[%s1 + $0x24c] sm:$0xff]
      %v247 = vld [vmem:[%s1 + $0x254] sm:$0xf]
      %v248 = vld [vmem:[%s1 + $0x258] sm:$0xff]
      %v249 = vld [vmem:[%s1 + $0x260] sm:$0xff]
      %v250 = vld [vmem:[%s1 + $0x268] sm:$0xf]
      %v251 = vld [vmem:[%s1 + $0x26c] sm:$0xff]
      %v252 = vld [vmem:[%s1 + $0x274] sm:$0xff]
      %v253 = vld [vmem:[%s1 + $0x27c] sm:$0xf]
      %v254 = vld [vmem:[%s1 + $0x280] sm:$0xff]
      %v255 = vld [vmem:[%s1 + $0x288] sm:$0xff]
      %v256 = vld [vmem:[%s1 + $0x290] sm:$0xf]
      %v257 = vld [vmem:[%s1 + $0x294] sm:$0xff]
      %v258 = vld [vmem:[%s1 + $0x29c] sm:$0xff]
      %v259 = vld [vmem:[%s1 + $0x2a4] sm:$0xf]
      %v260 = vld [vmem:[%s1 + $0x2a8] sm:$0xff]
      %v261 = vld [vmem:[%s1 + $0x2b0] sm:$0xff]
      %v262 = vld [vmem:[%s1 + $0x2b8] sm:$0xf]
      %v263 = vld [vmem:[%s1 + $0x2bc] sm:$0xff]
      %v264 = vld [vmem:[%s1 + $0x2c4] sm:$0xff]
      %v265 = vld [vmem:[%s1 + $0x2cc] sm:$0xf]
      %v266 = vld [vmem:[%s1 + $0x2d0] sm:$0xff]
      %v267 = vld [vmem:[%s1 + $0x2d8] sm:$0xff]
      %v268 = vld [vmem:[%s1 + $0x2e0] sm:$0xf]
      %v269 = vld [vmem:[%s1 + $0x2e4] sm:$0xff]
      %v270 = vld [vmem:[%s1 + $0x2ec] sm:$0xff]
      %v271 = vld [vmem:[%s1 + $0x2f4] sm:$0xf]
      %v272 = vld [vmem:[%s1 + $0x2f8] sm:$0xff]
      %v273 = vld [vmem:[%s1 + $0x300] sm:$0xff]
      %v274 = vld [vmem:[%s1 + $0x308] sm:$0xf]
      %v275 = vld [vmem:[%s1 + $0x30c] sm:$0xff]
      %v276 = vld [vmem:[%s1 + $0x314] sm:$0xff]
      %v277 = vld [vmem:[%s1 + $0x31c] sm:$0xf]
      %v278 = vld [vmem:[%s1 + $0x320] sm:$0xff]
      %v279 = vld [vmem:[%s1 + $0x328] sm:$0xff]
      %v280 = vld [vmem:[%s1 + $0x330] sm:$0xf]
      %v281 = vld [vmem:[%s1 + $0x334] sm:$0xff]
      %v282 = vld [vmem:[%s1 + $0x33c] sm:$0xff]
      %v283 = vld [vmem:[%s1 + $0x344] sm:$0xf]
      %v284 = vld [vmem:[%s1 + $0x348] sm:$0xff]
      %v285 = vld [vmem:[%s1 + $0x350] sm:$0xff]
      %v286 = vld [vmem:[%s1 + $0x358] sm:$0xf]
      %v287 = vld [vmem:[%s1 + $0x35c] sm:$0xff]
      %v288 = vld [vmem:[%s1 + $0x364] sm:$0xff]
      %v289 = vld [vmem:[%s1 + $0x36c] sm:$0xf]
      %v290 = vld [vmem:[%s1 + $0x370] sm:$0xff]
      %v291 = vld [vmem:[%s1 + $0x378] sm:$0xff]
      %v292 = vld [vmem:[%s1 + $0x380] sm:$0xf]
      %v293 = vld [vmem:[%s1 + $0x384] sm:$0xff]
      %v294 = vld [vmem:[%s1 + $0x38c] sm:$0xff]
      %v295 = vld [vmem:[%s1 + $0x394] sm:$0xf]
      %v296 = vld [vmem:[%s1 + $0x398] sm:$0xff]
      %v297 = vld [vmem:[%s1 + $0x3a0] sm:$0xff]
      %v298 = vld [vmem:[%s1 + $0x3a8] sm:$0xf]
      %v299 = vld [vmem:[%s1 + $0x3ac] sm:$0xff]
      %v300 = vld [vmem:[%s1 + $0x3b4] sm:$0xff]
      %v301 = vld [vmem:[%s1 + $0x3bc] sm:$0xf]
      %v302 = vld [vmem:[%s1 + $0x3c0] sm:$0xff]
      %v303 = vld [vmem:[%s1 + $0x3c8] sm:$0xff]
      %v304 = vld [vmem:[%s1 + $0x3d0] sm:$0xf]
      %v305 = vld [vmem:[%s1 + $0x3d4] sm:$0xff]
      %v306 = vld [vmem:[%s1 + $0x3dc] sm:$0xff]
      %v307 = vld [vmem:[%s1 + $0x3e4] sm:$0xf]
      %v308 = vld [vmem:[%s1 + $0x3e8] sm:$0xff]
      %v309 = vld [vmem:[%s1 + $0x3f0] sm:$0xff]
      %v310 = vld [vmem:[%s1 + $0x3f8] sm:$0xf]
      %v311 = vld [vmem:[%s1 + $0x3fc] sm:$0xff]
      %v312 = vld [vmem:[%s1 + $0x404] sm:$0xff]
      %v313 = vld [vmem:[%s1 + $0x40c] sm:$0xf]
      %v314 = vld [vmem:[%s1 + $0x410] sm:$0xff]
      %v315 = vld [vmem:[%s1 + $0x418] sm:$0xff]
      %v316 = vld [vmem:[%s1 + $0x420] sm:$0xf]
      %v317 = vld [vmem:[%s1 + $0x424] sm:$0xff]
      %v318 = vld [vmem:[%s1 + $0x42c] sm:$0xff]
      %v319 = vld [vmem:[%s1 + $0x434] sm:$0xf]
      %v320 = vld [vmem:[%s1 + $0x438] sm:$0xff]
      %v321 = vld [vmem:[%s1 + $0x440] sm:$0xff]
      %v322 = vld [vmem:[%s1 + $0x448] sm:$0xf]
      %v323 = vld [vmem:[%s1 + $0x44c] sm:$0xff]
      %v324 = vld [vmem:[%s1 + $0x454] sm:$0xff]
      %v325 = vld [vmem:[%s1 + $0x45c] sm:$0xf]
      %v326 = vld [vmem:[%s1 + $0x460] sm:$0xff]
      %v327 = vld [vmem:[%s1 + $0x468] sm:$0xff]
      %v328 = vld [vmem:[%s1 + $0x470] sm:$0xf]
      %v329 = vld [vmem:[%s1 + $0x474] sm:$0xff]
      %v330 = vld [vmem:[%s1 + $0x47c] sm:$0xff]
      %v331 = vld [vmem:[%s1 + $0x484] sm:$0xf]
      %v332 = vld [vmem:[%s1 + $0x488] sm:$0xff]
      %v333 = vld [vmem:[%s1 + $0x490] sm:$0xff]
      %v334 = vld [vmem:[%s1 + $0x498] sm:$0xf]
      %v335 = vld [vmem:[%s1 + $0x49c] sm:$0xff]
      %v336 = vld [vmem:[%s1 + $0x4a4] sm:$0xff]
      %v337 = vld [vmem:[%s1 + $0x4ac] sm:$0xf]
      %v338 = vld [vmem:[%s1 + $0x4b0] sm:$0xff]
      %v339 = vld [vmem:[%s1 + $0x4b8] sm:$0xff]
      %v340 = vld [vmem:[%s1 + $0x4c0] sm:$0xf]
      %v341 = vld [vmem:[%s1 + $0x4c4] sm:$0xff]
      %v342 = vld [vmem:[%s1 + $0x4cc] sm:$0xff]
      %v343 = vld [vmem:[%s1 + $0x4d4] sm:$0xf]
      %v344 = vld [vmem:[%s1 + $0x4d8] sm:$0xff]
      %v345 = vld [vmem:[%s1 + $0x4e0] sm:$0xff]
      %v346 = vld [vmem:[%s1 + $0x4e8] sm:$0xf]
      %v347 = vld [vmem:[%s1 + $0x4ec] sm:$0xff]
      %v348 = vld [vmem:[%s1 + $0x4f4] sm:$0xff]
      %v349 = vld [vmem:[%s1 + $0x4fc] sm:$0xf]
      %v350 = vld [vmem:[%s1 + $0x500] sm:$0xff]
      %v351 = vld [vmem:[%s1 + $0x508] sm:$0xff]
      %v352 = vld [vmem:[%s1 + $0x510] sm:$0xf]
      %v353 = vld [vmem:[%s1 + $0x514] sm:$0xff]
      %v354 = vld [vmem:[%s1 + $0x51c] sm:$0xff]
      %v355 = vld [vmem:[%s1 + $0x524] sm:$0xf]
      %v356 = vld [vmem:[%s1 + $0x528] sm:$0xff]
      %v357 = vld [vmem:[%s1 + $0x530] sm:$0xff]
      %v358 = vld [vmem:[%s1 + $0x538] sm:$0xf]
      %v359 = vld [vmem:[%s1 + $0x53c] sm:$0xff]
      %v360 = vld [vmem:[%s1 + $0x544] sm:$0xff]
      %v361 = vld [vmem:[%s1 + $0x54c] sm:$0xf]
      %v362 = vld [vmem:[%s1 + $0x550] sm:$0xff]
      %v363 = vld [vmem:[%s1 + $0x558] sm:$0xff]
      %v364 = vld [vmem:[%s1 + $0x560] sm:$0xf]
      %v365 = vld [vmem:[%s1 + $0x564] sm:$0xff]
      %v366 = vld [vmem:[%s1 + $0x56c] sm:$0xff]
      %v367 = vld [vmem:[%s1 + $0x574] sm:$0xf]
      %v368 = vld [vmem:[%s1 + $0x578] sm:$0xff]
      %v369 = vld [vmem:[%s1 + $0x580] sm:$0xff]
      %v370 = vld [vmem:[%s1 + $0x588] sm:$0xf]
      %v371 = vld [vmem:[%s1 + $0x58c] sm:$0xff]
      %v372 = vld [vmem:[%s1 + $0x594] sm:$0xff]
      %v373 = vld [vmem:[%s1 + $0x59c] sm:$0xf]
      %v374 = vld [vmem:[%s1 + $0x5a0] sm:$0xff]
      %v375 = vld [vmem:[%s1 + $0x5a8] sm:$0xff]
      %v376 = vld [vmem:[%s1 + $0x5b0] sm:$0xf]
      %v377 = vld [vmem:[%s1 + $0x5b4] sm:$0xff]
      %v378 = vld [vmem:[%s1 + $0x5bc] sm:$0xff]
      %v379 = vld [vmem:[%s1 + $0x5c4] sm:$0xf]
      %v380 = vld [vmem:[%s1 + $0x5c8] sm:$0xff]
      %v381 = vld [vmem:[%s1 + $0x5d0] sm:$0xff]
      %v382 = vld [vmem:[%s1 + $0x5d8] sm:$0xf]
      %v383 = vld [vmem:[%s1 + $0x5dc] sm:$0xff]
      %v384 = vld [vmem:[%s1 + $0x5e4] sm:$0xff]
      %v385 = vld [vmem:[%s1 + $0x5ec] sm:$0xf]
      %v386 = vld [vmem:[%s1 + $0x5f0] sm:$0xff]
      %v387 = vld [vmem:[%s1 + $0x5f8] sm:$0xff]
      %v388 = vld [vmem:[%s1 + $0x600] sm:$0xf]
      %v389 = vld [vmem:[%s1 + $0x604] sm:$0xff]
      %v390 = vld [vmem:[%s1 + $0x60c] sm:$0xff]
      %v391 = vld [vmem:[%s1 + $0x614] sm:$0xf]
      %v392 = vld [vmem:[%s1 + $0x618] sm:$0xff]
      %v393 = vld [vmem:[%s1 + $0x620] sm:$0xff]
      %v394 = vld [vmem:[%s1 + $0x628] sm:$0xf]
      %v395 = vld [vmem:[%s1 + $0x62c] sm:$0xff]
      %v396 = vld [vmem:[%s1 + $0x634] sm:$0xff]
      %v397 = vld [vmem:[%s1 + $0x63c] sm:$0xf]
      %v404 = vunpack.c.l.b16 %v152
      %v405 = vunpack.c.h.b16 %v152
      %v406 = vunpack.c.l.b16 %v153
      %v407 = vunpack.c.h.b16 %v153
      %v408 = vunpack.c.l.b16 %v154
      %v409 = vunpack.c.l.b16 %v155
      %v410 = vunpack.c.h.b16 %v155
      %v411 = vunpack.c.l.b16 %v156
      %v412 = vunpack.c.h.b16 %v156
      %v413 = vunpack.c.l.b16 %v157
      %v414 = vpack.c.b16 %v409, %v404
      %v415 = vpack.c.b16 %v410, %v405
      %v416 = vpack.c.b16 %v411, %v406
      %v417 = vpack.c.b16 %v412, %v407
      %v418 = vpack.c.b16 %v413, %v408
      %v664 = vunpack.c.l.b16 %v158
      %v665 = vunpack.c.h.b16 %v158
      %v666 = vunpack.c.l.b16 %v159
      %v667 = vunpack.c.h.b16 %v159
      %v668 = vunpack.c.l.b16 %v160
      %v669 = vunpack.c.l.b16 %v161
      %v670 = vunpack.c.h.b16 %v161
      %v671 = vunpack.c.l.b16 %v162
      %v672 = vunpack.c.h.b16 %v162
      %v673 = vunpack.c.l.b16 %v163
      %v674 = vunpack.c.l.b16 %v164
      %v675 = vunpack.c.h.b16 %v164
      %v676 = vunpack.c.l.b16 %v165
      %v677 = vunpack.c.h.b16 %v165
      %v678 = vunpack.c.l.b16 %v166
      %v679 = vunpack.c.l.b16 %v167
      %v680 = vunpack.c.h.b16 %v167
      %v681 = vunpack.c.l.b16 %v168
      %v682 = vunpack.c.h.b16 %v168
      %v683 = vunpack.c.l.b16 %v169
      %v684 = vunpack.c.l.b16 %v170
      %v685 = vunpack.c.h.b16 %v170
      %v686 = vunpack.c.l.b16 %v171
      %v687 = vunpack.c.h.b16 %v171
      %v688 = vunpack.c.l.b16 %v172
      %v689 = vunpack.c.l.b16 %v173
      %v690 = vunpack.c.h.b16 %v173
      %v691 = vunpack.c.l.b16 %v174
      %v692 = vunpack.c.h.b16 %v174
      %v693 = vunpack.c.l.b16 %v175
      %v694 = vunpack.c.l.b16 %v176
      %v695 = vunpack.c.h.b16 %v176
      %v696 = vunpack.c.l.b16 %v177
      %v697 = vunpack.c.h.b16 %v177
      %v698 = vunpack.c.l.b16 %v178
      %v699 = vunpack.c.l.b16 %v179
      %v700 = vunpack.c.h.b16 %v179
      %v701 = vunpack.c.l.b16 %v180
      %v702 = vunpack.c.h.b16 %v180
      %v703 = vunpack.c.l.b16 %v181
      %v704 = vunpack.c.l.b16 %v182
      %v705 = vunpack.c.h.b16 %v182
      %v706 = vunpack.c.l.b16 %v183
      %v707 = vunpack.c.h.b16 %v183
      %v708 = vunpack.c.l.b16 %v184
      %v709 = vunpack.c.l.b16 %v185
      %v710 = vunpack.c.h.b16 %v185
      %v711 = vunpack.c.l.b16 %v186
      %v712 = vunpack.c.h.b16 %v186
      %v713 = vunpack.c.l.b16 %v187
      %v714 = vunpack.c.l.b16 %v188
      %v715 = vunpack.c.h.b16 %v188
      %v716 = vunpack.c.l.b16 %v189
      %v717 = vunpack.c.h.b16 %v189
      %v718 = vunpack.c.l.b16 %v190
      %v719 = vunpack.c.l.b16 %v191
      %v720 = vunpack.c.h.b16 %v191
      %v721 = vunpack.c.l.b16 %v192
      %v722 = vunpack.c.h.b16 %v192
      %v723 = vunpack.c.l.b16 %v193
      %v724 = vunpack.c.l.b16 %v194
      %v725 = vunpack.c.h.b16 %v194
      %v726 = vunpack.c.l.b16 %v195
      %v727 = vunpack.c.h.b16 %v195
      %v728 = vunpack.c.l.b16 %v196
      %v729 = vunpack.c.l.b16 %v197
      %v730 = vunpack.c.h.b16 %v197
      %v731 = vunpack.c.l.b16 %v198
      %v732 = vunpack.c.h.b16 %v198
      %v733 = vunpack.c.l.b16 %v199
      %v734 = vunpack.c.l.b16 %v200
      %v735 = vunpack.c.h.b16 %v200
      %v736 = vunpack.c.l.b16 %v201
      %v737 = vunpack.c.h.b16 %v201
      %v738 = vunpack.c.l.b16 %v202
      %v739 = vunpack.c.l.b16 %v203
      %v740 = vunpack.c.h.b16 %v203
      %v741 = vunpack.c.l.b16 %v204
      %v742 = vunpack.c.h.b16 %v204
      %v743 = vunpack.c.l.b16 %v205
      %v744 = vunpack.c.l.b16 %v206
      %v745 = vunpack.c.h.b16 %v206
      %v746 = vunpack.c.l.b16 %v207
      %v747 = vunpack.c.h.b16 %v207
      %v748 = vunpack.c.l.b16 %v208
      %v749 = vunpack.c.l.b16 %v209
      %v750 = vunpack.c.h.b16 %v209
      %v751 = vunpack.c.l.b16 %v210
      %v752 = vunpack.c.h.b16 %v210
      %v753 = vunpack.c.l.b16 %v211
      %v754 = vunpack.c.l.b16 %v212
      %v755 = vunpack.c.h.b16 %v212
      %v756 = vunpack.c.l.b16 %v213
      %v757 = vunpack.c.h.b16 %v213
      %v758 = vunpack.c.l.b16 %v214
      %v759 = vunpack.c.l.b16 %v215
      %v760 = vunpack.c.h.b16 %v215
      %v761 = vunpack.c.l.b16 %v216
      %v762 = vunpack.c.h.b16 %v216
      %v763 = vunpack.c.l.b16 %v217
      %v764 = vunpack.c.l.b16 %v218
      %v765 = vunpack.c.h.b16 %v218
      %v766 = vunpack.c.l.b16 %v219
      %v767 = vunpack.c.h.b16 %v219
      %v768 = vunpack.c.l.b16 %v220
      %v769 = vunpack.c.l.b16 %v221
      %v770 = vunpack.c.h.b16 %v221
      %v771 = vunpack.c.l.b16 %v222
      %v772 = vunpack.c.h.b16 %v222
      %v773 = vunpack.c.l.b16 %v223
      %v774 = vunpack.c.l.b16 %v224
      %v775 = vunpack.c.h.b16 %v224
      %v776 = vunpack.c.l.b16 %v225
      %v777 = vunpack.c.h.b16 %v225
      %v778 = vunpack.c.l.b16 %v226
      %v779 = vunpack.c.l.b16 %v227
      %v780 = vunpack.c.h.b16 %v227
      %v781 = vunpack.c.l.b16 %v228
      %v782 = vunpack.c.h.b16 %v228
      %v783 = vunpack.c.l.b16 %v229
      %v784 = vunpack.c.l.b16 %v230
      %v785 = vunpack.c.h.b16 %v230
      %v786 = vunpack.c.l.b16 %v231
      %v787 = vunpack.c.h.b16 %v231
      %v788 = vunpack.c.l.b16 %v232
      %v789 = vunpack.c.l.b16 %v233
      %v790 = vunpack.c.h.b16 %v233
      %v791 = vunpack.c.l.b16 %v234
      %v792 = vunpack.c.h.b16 %v234
      %v793 = vunpack.c.l.b16 %v235
      %v794 = vunpack.c.l.b16 %v236
      %v795 = vunpack.c.h.b16 %v236
      %v796 = vunpack.c.l.b16 %v237
      %v797 = vunpack.c.h.b16 %v237
      %v798 = vunpack.c.l.b16 %v238
      %v799 = vunpack.c.l.b16 %v239
      %v800 = vunpack.c.h.b16 %v239
      %v801 = vunpack.c.l.b16 %v240
      %v802 = vunpack.c.h.b16 %v240
      %v803 = vunpack.c.l.b16 %v241
      %v804 = vunpack.c.l.b16 %v242
      %v805 = vunpack.c.h.b16 %v242
      %v806 = vunpack.c.l.b16 %v243
      %v807 = vunpack.c.h.b16 %v243
      %v808 = vunpack.c.l.b16 %v244
      %v809 = vunpack.c.l.b16 %v245
      %v810 = vunpack.c.h.b16 %v245
      %v811 = vunpack.c.l.b16 %v246
      %v812 = vunpack.c.h.b16 %v246
      %v813 = vunpack.c.l.b16 %v247
      %v814 = vunpack.c.l.b16 %v248
      %v815 = vunpack.c.h.b16 %v248
      %v816 = vunpack.c.l.b16 %v249
      %v817 = vunpack.c.h.b16 %v249
      %v818 = vunpack.c.l.b16 %v250
      %v819 = vunpack.c.l.b16 %v251
      %v820 = vunpack.c.h.b16 %v251
      %v821 = vunpack.c.l.b16 %v252
      %v822 = vunpack.c.h.b16 %v252
      %v823 = vunpack.c.l.b16 %v253
      %v824 = vunpack.c.l.b16 %v254
      %v825 = vunpack.c.h.b16 %v254
      %v826 = vunpack.c.l.b16 %v255
      %v827 = vunpack.c.h.b16 %v255
      %v828 = vunpack.c.l.b16 %v256
      %v829 = vunpack.c.l.b16 %v257
      %v830 = vunpack.c.h.b16 %v257
      %v831 = vunpack.c.l.b16 %v258
      %v832 = vunpack.c.h.b16 %v258
      %v833 = vunpack.c.l.b16 %v259
      %v834 = vunpack.c.l.b16 %v260
      %v835 = vunpack.c.h.b16 %v260
      %v836 = vunpack.c.l.b16 %v261
      %v837 = vunpack.c.h.b16 %v261
      %v838 = vunpack.c.l.b16 %v262
      %v839 = vunpack.c.l.b16 %v263
      %v840 = vunpack.c.h.b16 %v263
      %v841 = vunpack.c.l.b16 %v264
      %v842 = vunpack.c.h.b16 %v264
      %v843 = vunpack.c.l.b16 %v265
      %v844 = vunpack.c.l.b16 %v266
      %v845 = vunpack.c.h.b16 %v266
      %v846 = vunpack.c.l.b16 %v267
      %v847 = vunpack.c.h.b16 %v267
      %v848 = vunpack.c.l.b16 %v268
      %v849 = vunpack.c.l.b16 %v269
      %v850 = vunpack.c.h.b16 %v269
      %v851 = vunpack.c.l.b16 %v270
      %v852 = vunpack.c.h.b16 %v270
      %v853 = vunpack.c.l.b16 %v271
      %v854 = vunpack.c.l.b16 %v272
      %v855 = vunpack.c.h.b16 %v272
      %v856 = vunpack.c.l.b16 %v273
      %v857 = vunpack.c.h.b16 %v273
      %v858 = vunpack.c.l.b16 %v274
      %v859 = vunpack.c.l.b16 %v275
      %v860 = vunpack.c.h.b16 %v275
      %v861 = vunpack.c.l.b16 %v276
      %v862 = vunpack.c.h.b16 %v276
      %v863 = vunpack.c.l.b16 %v277
      %v864 = vunpack.c.l.b16 %v278
      %v865 = vunpack.c.h.b16 %v278
      %v866 = vunpack.c.l.b16 %v279
      %v867 = vunpack.c.h.b16 %v279
      %v868 = vunpack.c.l.b16 %v280
      %v869 = vunpack.c.l.b16 %v281
      %v870 = vunpack.c.h.b16 %v281
      %v871 = vunpack.c.l.b16 %v282
      %v872 = vunpack.c.h.b16 %v282
      %v873 = vunpack.c.l.b16 %v283
      %v874 = vunpack.c.l.b16 %v284
      %v875 = vunpack.c.h.b16 %v284
      %v876 = vunpack.c.l.b16 %v285
      %v877 = vunpack.c.h.b16 %v285
      %v878 = vunpack.c.l.b16 %v286
      %v879 = vunpack.c.l.b16 %v287
      %v880 = vunpack.c.h.b16 %v287
      %v881 = vunpack.c.l.b16 %v288
      %v882 = vunpack.c.h.b16 %v288
      %v883 = vunpack.c.l.b16 %v289
      %v884 = vunpack.c.l.b16 %v290
      %v885 = vunpack.c.h.b16 %v290
      %v886 = vunpack.c.l.b16 %v291
      %v887 = vunpack.c.h.b16 %v291
      %v888 = vunpack.c.l.b16 %v292
      %v889 = vunpack.c.l.b16 %v293
      %v890 = vunpack.c.h.b16 %v293
      %v891 = vunpack.c.l.b16 %v294
      %v892 = vunpack.c.h.b16 %v294
      %v893 = vunpack.c.l.b16 %v295
      %v894 = vunpack.c.l.b16 %v296
      %v895 = vunpack.c.h.b16 %v296
      %v896 = vunpack.c.l.b16 %v297
      %v897 = vunpack.c.h.b16 %v297
      %v898 = vunpack.c.l.b16 %v298
      %v899 = vunpack.c.l.b16 %v299
      %v900 = vunpack.c.h.b16 %v299
      %v901 = vunpack.c.l.b16 %v300
      %v902 = vunpack.c.h.b16 %v300
      %v903 = vunpack.c.l.b16 %v301
      %v904 = vunpack.c.l.b16 %v302
      %v905 = vunpack.c.h.b16 %v302
      %v906 = vunpack.c.l.b16 %v303
      %v907 = vunpack.c.h.b16 %v303
      %v908 = vunpack.c.l.b16 %v304
      %v909 = vunpack.c.l.b16 %v305
      %v910 = vunpack.c.h.b16 %v305
      %v911 = vunpack.c.l.b16 %v306
      %v912 = vunpack.c.h.b16 %v306
      %v913 = vunpack.c.l.b16 %v307
      %v914 = vunpack.c.l.b16 %v308
      %v915 = vunpack.c.h.b16 %v308
      %v916 = vunpack.c.l.b16 %v309
      %v917 = vunpack.c.h.b16 %v309
      %v918 = vunpack.c.l.b16 %v310
      %v919 = vunpack.c.l.b16 %v311
      %v920 = vunpack.c.h.b16 %v311
      %v921 = vunpack.c.l.b16 %v312
      %v922 = vunpack.c.h.b16 %v312
      %v923 = vunpack.c.l.b16 %v313
      %v924 = vunpack.c.l.b16 %v314
      %v925 = vunpack.c.h.b16 %v314
      %v926 = vunpack.c.l.b16 %v315
      %v927 = vunpack.c.h.b16 %v315
      %v928 = vunpack.c.l.b16 %v316
      %v929 = vunpack.c.l.b16 %v317
      %v930 = vunpack.c.h.b16 %v317
      %v931 = vunpack.c.l.b16 %v318
      %v932 = vunpack.c.h.b16 %v318
      %v933 = vunpack.c.l.b16 %v319
      %v934 = vunpack.c.l.b16 %v320
      %v935 = vunpack.c.h.b16 %v320
      %v936 = vunpack.c.l.b16 %v321
      %v937 = vunpack.c.h.b16 %v321
      %v938 = vunpack.c.l.b16 %v322
      %v939 = vunpack.c.l.b16 %v323
      %v940 = vunpack.c.h.b16 %v323
      %v941 = vunpack.c.l.b16 %v324
      %v942 = vunpack.c.h.b16 %v324
      %v943 = vunpack.c.l.b16 %v325
      %v944 = vunpack.c.l.b16 %v326
      %v945 = vunpack.c.h.b16 %v326
      %v946 = vunpack.c.l.b16 %v327
      %v947 = vunpack.c.h.b16 %v327
      %v948 = vunpack.c.l.b16 %v328
      %v949 = vunpack.c.l.b16 %v329
      %v950 = vunpack.c.h.b16 %v329
      %v951 = vunpack.c.l.b16 %v330
      %v952 = vunpack.c.h.b16 %v330
      %v953 = vunpack.c.l.b16 %v331
      %v954 = vunpack.c.l.b16 %v332
      %v955 = vunpack.c.h.b16 %v332
      %v956 = vunpack.c.l.b16 %v333
      %v957 = vunpack.c.h.b16 %v333
      %v958 = vunpack.c.l.b16 %v334
      %v959 = vunpack.c.l.b16 %v335
      %v960 = vunpack.c.h.b16 %v335
      %v961 = vunpack.c.l.b16 %v336
      %v962 = vunpack.c.h.b16 %v336
      %v963 = vunpack.c.l.b16 %v337
      %v964 = vunpack.c.l.b16 %v338
      %v965 = vunpack.c.h.b16 %v338
      %v966 = vunpack.c.l.b16 %v339
      %v967 = vunpack.c.h.b16 %v339
      %v968 = vunpack.c.l.b16 %v340
      %v969 = vunpack.c.l.b16 %v341
      %v970 = vunpack.c.h.b16 %v341
      %v971 = vunpack.c.l.b16 %v342
      %v972 = vunpack.c.h.b16 %v342
      %v973 = vunpack.c.l.b16 %v343
      %v974 = vunpack.c.l.b16 %v344
      %v975 = vunpack.c.h.b16 %v344
      %v976 = vunpack.c.l.b16 %v345
      %v977 = vunpack.c.h.b16 %v345
      %v978 = vunpack.c.l.b16 %v346
      %v979 = vunpack.c.l.b16 %v347
      %v980 = vunpack.c.h.b16 %v347
      %v981 = vunpack.c.l.b16 %v348
      %v982 = vunpack.c.h.b16 %v348
      %v983 = vunpack.c.l.b16 %v349
      %v984 = vunpack.c.l.b16 %v350
      %v985 = vunpack.c.h.b16 %v350
      %v986 = vunpack.c.l.b16 %v351
      %v987 = vunpack.c.h.b16 %v351
      %v988 = vunpack.c.l.b16 %v352
      %v989 = vunpack.c.l.b16 %v353
      %v990 = vunpack.c.h.b16 %v353
      %v991 = vunpack.c.l.b16 %v354
      %v992 = vunpack.c.h.b16 %v354
      %v993 = vunpack.c.l.b16 %v355
      %v994 = vunpack.c.l.b16 %v356
      %v995 = vunpack.c.h.b16 %v356
      %v996 = vunpack.c.l.b16 %v357
      %v997 = vunpack.c.h.b16 %v357
      %v998 = vunpack.c.l.b16 %v358
      %v999 = vunpack.c.l.b16 %v359
      %v1000 = vunpack.c.h.b16 %v359
      %v1001 = vunpack.c.l.b16 %v360
      %v1002 = vunpack.c.h.b16 %v360
      %v1003 = vunpack.c.l.b16 %v361
      %v1004 = vunpack.c.l.b16 %v362
      %v1005 = vunpack.c.h.b16 %v362
      %v1006 = vunpack.c.l.b16 %v363
      %v1007 = vunpack.c.h.b16 %v363
      %v1008 = vunpack.c.l.b16 %v364
      %v1009 = vunpack.c.l.b16 %v365
      %v1010 = vunpack.c.h.b16 %v365
      %v1011 = vunpack.c.l.b16 %v366
      %v1012 = vunpack.c.h.b16 %v366
      %v1013 = vunpack.c.l.b16 %v367
      %v1014 = vunpack.c.l.b16 %v368
      %v1015 = vunpack.c.h.b16 %v368
      %v1016 = vunpack.c.l.b16 %v369
      %v1017 = vunpack.c.h.b16 %v369
      %v1018 = vunpack.c.l.b16 %v370
      %v1019 = vunpack.c.l.b16 %v371
      %v1020 = vunpack.c.h.b16 %v371
      %v1021 = vunpack.c.l.b16 %v372
      %v1022 = vunpack.c.h.b16 %v372
      %v1023 = vunpack.c.l.b16 %v373
      %v1024 = vunpack.c.l.b16 %v374
      %v1025 = vunpack.c.h.b16 %v374
      %v1026 = vunpack.c.l.b16 %v375
      %v1027 = vunpack.c.h.b16 %v375
      %v1028 = vunpack.c.l.b16 %v376
      %v1029 = vunpack.c.l.b16 %v377
      %v1030 = vunpack.c.h.b16 %v377
      %v1031 = vunpack.c.l.b16 %v378
      %v1032 = vunpack.c.h.b16 %v378
      %v1033 = vunpack.c.l.b16 %v379
      %v1034 = vunpack.c.l.b16 %v380
      %v1035 = vunpack.c.h.b16 %v380
      %v1036 = vunpack.c.l.b16 %v381
      %v1037 = vunpack.c.h.b16 %v381
      %v1038 = vunpack.c.l.b16 %v382
      %v1039 = vunpack.c.l.b16 %v383
      %v1040 = vunpack.c.h.b16 %v383
      %v1041 = vunpack.c.l.b16 %v384
      %v1042 = vunpack.c.h.b16 %v384
      %v1043 = vunpack.c.l.b16 %v385
      %v1044 = vunpack.c.l.b16 %v386
      %v1045 = vunpack.c.h.b16 %v386
      %v1046 = vunpack.c.l.b16 %v387
      %v1047 = vunpack.c.h.b16 %v387
      %v1048 = vunpack.c.l.b16 %v388
      %v1049 = vunpack.c.l.b16 %v389
      %v1050 = vunpack.c.h.b16 %v389
      %v1051 = vunpack.c.l.b16 %v390
      %v1052 = vunpack.c.h.b16 %v390
      %v1053 = vunpack.c.l.b16 %v391
      %v1054 = vunpack.c.l.b16 %v392
      %v1055 = vunpack.c.h.b16 %v392
      %v1056 = vunpack.c.l.b16 %v393
      %v1057 = vunpack.c.h.b16 %v393
      %v1058 = vunpack.c.l.b16 %v394
      %v1059 = vunpack.c.l.b16 %v395
      %v1060 = vunpack.c.h.b16 %v395
      %v1061 = vunpack.c.l.b16 %v396
      %v1062 = vunpack.c.h.b16 %v396
      %v1063 = vunpack.c.l.b16 %v397
      %v1064 = vpack.c.b16 %v669, %v664
      %v1065 = vpack.c.b16 %v670, %v665
      %v1066 = vpack.c.b16 %v671, %v666
      %v1067 = vpack.c.b16 %v672, %v667
      %v1068 = vpack.c.b16 %v673, %v668
      %v1069 = vpack.c.b16 %v679, %v674
      %v1070 = vpack.c.b16 %v680, %v675
      %v1071 = vpack.c.b16 %v681, %v676
      %v1072 = vpack.c.b16 %v682, %v677
      %v1073 = vpack.c.b16 %v683, %v678
      %v1074 = vpack.c.b16 %v689, %v684
      %v1075 = vpack.c.b16 %v690, %v685
      %v1076 = vpack.c.b16 %v691, %v686
      %v1077 = vpack.c.b16 %v692, %v687
      %v1078 = vpack.c.b16 %v693, %v688
      %v1079 = vpack.c.b16 %v699, %v694
      %v1080 = vpack.c.b16 %v700, %v695
      %v1081 = vpack.c.b16 %v701, %v696
      %v1082 = vpack.c.b16 %v702, %v697
      %v1083 = vpack.c.b16 %v703, %v698
      %v1084 = vpack.c.b16 %v709, %v704
      %v1085 = vpack.c.b16 %v710, %v705
      %v1086 = vpack.c.b16 %v711, %v706
      %v1087 = vpack.c.b16 %v712, %v707
      %v1088 = vpack.c.b16 %v713, %v708
      %v1089 = vpack.c.b16 %v719, %v714
      %v1090 = vpack.c.b16 %v720, %v715
      %v1091 = vpack.c.b16 %v721, %v716
      %v1092 = vpack.c.b16 %v722, %v717
      %v1093 = vpack.c.b16 %v723, %v718
      %v1094 = vpack.c.b16 %v729, %v724
      %v1095 = vpack.c.b16 %v730, %v725
      %v1096 = vpack.c.b16 %v731, %v726
      %v1097 = vpack.c.b16 %v732, %v727
      %v1098 = vpack.c.b16 %v733, %v728
      %v1099 = vpack.c.b16 %v739, %v734
      %v1100 = vpack.c.b16 %v740, %v735
      %v1101 = vpack.c.b16 %v741, %v736
      %v1102 = vpack.c.b16 %v742, %v737
      %v1103 = vpack.c.b16 %v743, %v738
      %v1104 = vpack.c.b16 %v749, %v744
      %v1105 = vpack.c.b16 %v750, %v745
      %v1106 = vpack.c.b16 %v751, %v746
      %v1107 = vpack.c.b16 %v752, %v747
      %v1108 = vpack.c.b16 %v753, %v748
      %v1109 = vpack.c.b16 %v759, %v754
      %v1110 = vpack.c.b16 %v760, %v755
      %v1111 = vpack.c.b16 %v761, %v756
      %v1112 = vpack.c.b16 %v762, %v757
      %v1113 = vpack.c.b16 %v763, %v758
      %v1114 = vpack.c.b16 %v769, %v764
      %v1115 = vpack.c.b16 %v770, %v765
      %v1116 = vpack.c.b16 %v771, %v766
      %v1117 = vpack.c.b16 %v772, %v767
      %v1118 = vpack.c.b16 %v773, %v768
      %v1119 = vpack.c.b16 %v779, %v774
      %v1120 = vpack.c.b16 %v780, %v775
      %v1121 = vpack.c.b16 %v781, %v776
      %v1122 = vpack.c.b16 %v782, %v777
      %v1123 = vpack.c.b16 %v783, %v778
      %v1124 = vpack.c.b16 %v789, %v784
      %v1125 = vpack.c.b16 %v790, %v785
      %v1126 = vpack.c.b16 %v791, %v786
      %v1127 = vpack.c.b16 %v792, %v787
      %v1128 = vpack.c.b16 %v793, %v788
      %v1129 = vpack.c.b16 %v799, %v794
      %v1130 = vpack.c.b16 %v800, %v795
      %v1131 = vpack.c.b16 %v801, %v796
      %v1132 = vpack.c.b16 %v802, %v797
      %v1133 = vpack.c.b16 %v803, %v798
      %v1134 = vpack.c.b16 %v809, %v804
      %v1135 = vpack.c.b16 %v810, %v805
      %v1136 = vpack.c.b16 %v811, %v806
      %v1137 = vpack.c.b16 %v812, %v807
      %v1138 = vpack.c.b16 %v813, %v808
      %v1139 = vpack.c.b16 %v819, %v814
      %v1140 = vpack.c.b16 %v820, %v815
      %v1141 = vpack.c.b16 %v821, %v816
      %v1142 = vpack.c.b16 %v822, %v817
      %v1143 = vpack.c.b16 %v823, %v818
      %v1144 = vpack.c.b16 %v829, %v824
      %v1145 = vpack.c.b16 %v830, %v825
      %v1146 = vpack.c.b16 %v831, %v826
      %v1147 = vpack.c.b16 %v832, %v827
      %v1148 = vpack.c.b16 %v833, %v828
      %v1149 = vpack.c.b16 %v839, %v834
      %v1150 = vpack.c.b16 %v840, %v835
      %v1151 = vpack.c.b16 %v841, %v836
      %v1152 = vpack.c.b16 %v842, %v837
      %v1153 = vpack.c.b16 %v843, %v838
      %v1154 = vpack.c.b16 %v849, %v844
      %v1155 = vpack.c.b16 %v850, %v845
      %v1156 = vpack.c.b16 %v851, %v846
      %v1157 = vpack.c.b16 %v852, %v847
      %v1158 = vpack.c.b16 %v853, %v848
      %v1159 = vpack.c.b16 %v859, %v854
      %v1160 = vpack.c.b16 %v860, %v855
      %v1161 = vpack.c.b16 %v861, %v856
      %v1162 = vpack.c.b16 %v862, %v857
      %v1163 = vpack.c.b16 %v863, %v858
      %v1164 = vpack.c.b16 %v869, %v864
      %v1165 = vpack.c.b16 %v870, %v865
      %v1166 = vpack.c.b16 %v871, %v866
      %v1167 = vpack.c.b16 %v872, %v867
      %v1168 = vpack.c.b16 %v873, %v868
      %v1169 = vpack.c.b16 %v879, %v874
      %v1170 = vpack.c.b16 %v880, %v875
      %v1171 = vpack.c.b16 %v881, %v876
      %v1172 = vpack.c.b16 %v882, %v877
      %v1173 = vpack.c.b16 %v883, %v878
      %v1174 = vpack.c.b16 %v889, %v884
      %v1175 = vpack.c.b16 %v890, %v885
      %v1176 = vpack.c.b16 %v891, %v886
      %v1177 = vpack.c.b16 %v892, %v887
      %v1178 = vpack.c.b16 %v893, %v888
      %v1179 = vpack.c.b16 %v899, %v894
      %v1180 = vpack.c.b16 %v900, %v895
      %v1181 = vpack.c.b16 %v901, %v896
      %v1182 = vpack.c.b16 %v902, %v897
      %v1183 = vpack.c.b16 %v903, %v898
      %v1184 = vpack.c.b16 %v909, %v904
      %v1185 = vpack.c.b16 %v910, %v905
      %v1186 = vpack.c.b16 %v911, %v906
      %v1187 = vpack.c.b16 %v912, %v907
      %v1188 = vpack.c.b16 %v913, %v908
      %v1189 = vpack.c.b16 %v919, %v914
      %v1190 = vpack.c.b16 %v920, %v915
      %v1191 = vpack.c.b16 %v921, %v916
      %v1192 = vpack.c.b16 %v922, %v917
      %v1193 = vpack.c.b16 %v923, %v918
      %v1194 = vpack.c.b16 %v929, %v924
      %v1195 = vpack.c.b16 %v930, %v925
      %v1196 = vpack.c.b16 %v931, %v926
      %v1197 = vpack.c.b16 %v932, %v927
      %v1198 = vpack.c.b16 %v933, %v928
      %v1199 = vpack.c.b16 %v939, %v934
      %v1200 = vpack.c.b16 %v940, %v935
      %v1201 = vpack.c.b16 %v941, %v936
      %v1202 = vpack.c.b16 %v942, %v937
      %v1203 = vpack.c.b16 %v943, %v938
      %v1204 = vpack.c.b16 %v949, %v944
      %v1205 = vpack.c.b16 %v950, %v945
      %v1206 = vpack.c.b16 %v951, %v946
      %v1207 = vpack.c.b16 %v952, %v947
      %v1208 = vpack.c.b16 %v953, %v948
      %v1209 = vpack.c.b16 %v959, %v954
      %v1210 = vpack.c.b16 %v960, %v955
      %v1211 = vpack.c.b16 %v961, %v956
      %v1212 = vpack.c.b16 %v962, %v957
      %v1213 = vpack.c.b16 %v963, %v958
      %v1214 = vpack.c.b16 %v969, %v964
      %v1215 = vpack.c.b16 %v970, %v965
      %v1216 = vpack.c.b16 %v971, %v966
      %v1217 = vpack.c.b16 %v972, %v967
      %v1218 = vpack.c.b16 %v973, %v968
      %v1219 = vpack.c.b16 %v979, %v974
      %v1220 = vpack.c.b16 %v980, %v975
      %v1221 = vpack.c.b16 %v981, %v976
      %v1222 = vpack.c.b16 %v982, %v977
      %v1223 = vpack.c.b16 %v983, %v978
      %v1224 = vpack.c.b16 %v989, %v984
      %v1225 = vpack.c.b16 %v990, %v985
      %v1226 = vpack.c.b16 %v991, %v986
      %v1227 = vpack.c.b16 %v992, %v987
      %v1228 = vpack.c.b16 %v993, %v988
      %v1229 = vpack.c.b16 %v999, %v994
      %v1230 = vpack.c.b16 %v1000, %v995
      %v1231 = vpack.c.b16 %v1001, %v996
      %v1232 = vpack.c.b16 %v1002, %v997
      %v1233 = vpack.c.b16 %v1003, %v998
      %v1234 = vpack.c.b16 %v1009, %v1004
      %v1235 = vpack.c.b16 %v1010, %v1005
      %v1236 = vpack.c.b16 %v1011, %v1006
      %v1237 = vpack.c.b16 %v1012, %v1007
      %v1238 = vpack.c.b16 %v1013, %v1008
      %v1239 = vpack.c.b16 %v1019, %v1014
      %v1240 = vpack.c.b16 %v1020, %v1015
      %v1241 = vpack.c.b16 %v1021, %v1016
      %v1242 = vpack.c.b16 %v1022, %v1017
      %v1243 = vpack.c.b16 %v1023, %v1018
      %v1244 = vpack.c.b16 %v1029, %v1024
      %v1245 = vpack.c.b16 %v1030, %v1025
      %v1246 = vpack.c.b16 %v1031, %v1026
      %v1247 = vpack.c.b16 %v1032, %v1027
      %v1248 = vpack.c.b16 %v1033, %v1028
      %v1249 = vpack.c.b16 %v1039, %v1034
      %v1250 = vpack.c.b16 %v1040, %v1035
      %v1251 = vpack.c.b16 %v1041, %v1036
      %v1252 = vpack.c.b16 %v1042, %v1037
      %v1253 = vpack.c.b16 %v1043, %v1038
      %v1254 = vpack.c.b16 %v1049, %v1044
      %v1255 = vpack.c.b16 %v1050, %v1045
      %v1256 = vpack.c.b16 %v1051, %v1046
      %v1257 = vpack.c.b16 %v1052, %v1047
      %v1258 = vpack.c.b16 %v1053, %v1048
      %v1259 = vpack.c.b16 %v1059, %v1054
      %v1260 = vpack.c.b16 %v1060, %v1055
      %v1261 = vpack.c.b16 %v1061, %v1056
      %v1262 = vpack.c.b16 %v1062, %v1057
      %v1263 = vpack.c.b16 %v1063, %v1058
      %1464 = vmatpush.bf16.msra.mxu0 %v1099
      %1465 = vmatpush.bf16.msra.mxu0 %v1094
      %1466 = vmatpush.bf16.msra.mxu0 %v1089
      %1467 = vmatpush.bf16.msra.mxu0 %v1084
      %1468 = vmatpush.bf16.msra.mxu0 %v1079
      %1469 = vmatpush.bf16.msra.mxu0 %v1074
      %1470 = vmatpush.bf16.msra.mxu0 %v1069
      %1471 = vmatpush.bf16.msra.mxu0 %v1064
      %1472 = vmatmul.bf16.gmra.mxu0 %v414
      %v1473 = vpop.f32.mrf.mxu0
      %v1474 = vadd.f32 0.0, %v1473
      %v1475 = vpop.f32.mrf.mxu0
      %v1476 = vadd.f32 0.0, %v1475
      %1477 = vdwg.mxu0
      %1478 = vmatpush.bf16.msra.mxu0 %v1139
      %1479 = vmatpush.bf16.msra.mxu0 %v1134
      %1480 = vmatpush.bf16.msra.mxu0 %v1129
      %1481 = vmatpush.bf16.msra.mxu0 %v1124
      %1482 = vmatpush.bf16.msra.mxu0 %v1119
      %1483 = vmatpush.bf16.msra.mxu0 %v1114
      %1484 = vmatpush.bf16.msra.mxu0 %v1109
      %1485 = vmatpush.bf16.msra.mxu0 %v1104
      %1486 = vmatmul.bf16.gmra.mxu0 %v415
      %v1487 = vpop.f32.mrf.mxu0
      %v1488 = vadd.f32 %v1474, %v1487
      %v1489 = vpop.f32.mrf.mxu0
      %v1490 = vadd.f32 %v1476, %v1489
      %1491 = vdwg.mxu0
      %1492 = vmatpush.bf16.msra.mxu0 %v1179
      %1493 = vmatpush.bf16.msra.mxu0 %v1174
      %1494 = vmatpush.bf16.msra.mxu0 %v1169
      %1495 = vmatpush.bf16.msra.mxu0 %v1164
      %1496 = vmatpush.bf16.msra.mxu0 %v1159
      %1497 = vmatpush.bf16.msra.mxu0 %v1154
      %1498 = vmatpush.bf16.msra.mxu0 %v1149
      %1499 = vmatpush.bf16.msra.mxu0 %v1144
      %1500 = vmatmul.bf16.gmra.mxu0 %v416
      %v1501 = vpop.f32.mrf.mxu0
      %v1502 = vadd.f32 %v1488, %v1501
      %v1503 = vpop.f32.mrf.mxu0
      %v1504 = vadd.f32 %v1490, %v1503
      %1505 = vdwg.mxu0
      %1506 = vmatpush.bf16.msra.mxu0 %v1219
      %1507 = vmatpush.bf16.msra.mxu0 %v1214
      %1508 = vmatpush.bf16.msra.mxu0 %v1209
      %1509 = vmatpush.bf16.msra.mxu0 %v1204
      %1510 = vmatpush.bf16.msra.mxu0 %v1199
      %1511 = vmatpush.bf16.msra.mxu0 %v1194
      %1512 = vmatpush.bf16.msra.mxu0 %v1189
      %1513 = vmatpush.bf16.msra.mxu0 %v1184
      %1514 = vmatmul.bf16.gmra.mxu0 %v417
      %v1515 = vpop.f32.mrf.mxu0
      %v1516 = vadd.f32 %v1502, %v1515
      %v1517 = vpop.f32.mrf.mxu0
      %v1518 = vadd.f32 %v1504, %v1517
      %1519 = vdwg.mxu0
      %1520 = vmatpush.bf16.msra.mxu0 %v1259
      %1521 = vmatpush.bf16.msra.mxu0 %v1254
      %1522 = vmatpush.bf16.msra.mxu0 %v1249
      %1523 = vmatpush.bf16.msra.mxu0 %v1244
      %1524 = vmatpush.bf16.msra.mxu0 %v1239
      %1525 = vmatpush.bf16.msra.mxu0 %v1234
      %1526 = vmatpush.bf16.msra.mxu0 %v1229
      %1527 = vmatpush.bf16.msra.mxu0 %v1224
      %1528 = vmatmul.bf16.gmra.mxu0 %v418
      %v1529 = vpop.f32.mrf.mxu0
      %v1530 = vadd.f32 %v1516, %v1529
      %v1531 = vpop.f32.mrf.mxu0
      %v1532 = vadd.f32 %v1518, %v1531
      %1533 = vdwg.mxu0
      %1534 = vmatpush.bf16.msra.mxu0 %v1100
      %1535 = vmatpush.bf16.msra.mxu0 %v1095
      %1536 = vmatpush.bf16.msra.mxu0 %v1090
      %1537 = vmatpush.bf16.msra.mxu0 %v1085
      %1538 = vmatpush.bf16.msra.mxu0 %v1080
      %1539 = vmatpush.bf16.msra.mxu0 %v1075
      %1540 = vmatpush.bf16.msra.mxu0 %v1070
      %1541 = vmatpush.bf16.msra.mxu0 %v1065
      %1542 = vmatmul.bf16.gmra.mxu0 %v414
      %v1543 = vpop.f32.mrf.mxu0
      %v1544 = vadd.f32 0.0, %v1543
      %v1545 = vpop.f32.mrf.mxu0
      %v1546 = vadd.f32 0.0, %v1545
      %1547 = vdwg.mxu0
      %1548 = vmatpush.bf16.msra.mxu0 %v1140
      %1549 = vmatpush.bf16.msra.mxu0 %v1135
      %1550 = vmatpush.bf16.msra.mxu0 %v1130
      %1551 = vmatpush.bf16.msra.mxu0 %v1125
      %1552 = vmatpush.bf16.msra.mxu0 %v1120
      %1553 = vmatpush.bf16.msra.mxu0 %v1115
      %1554 = vmatpush.bf16.msra.mxu0 %v1110
      %1555 = vmatpush.bf16.msra.mxu0 %v1105
      %1556 = vmatmul.bf16.gmra.mxu0 %v415
      %v1557 = vpop.f32.mrf.mxu0
      %v1558 = vadd.f32 %v1544, %v1557
      %v1559 = vpop.f32.mrf.mxu0
      %v1560 = vadd.f32 %v1546, %v1559
      %1561 = vdwg.mxu0
      %1562 = vmatpush.bf16.msra.mxu0 %v1180
      %1563 = vmatpush.bf16.msra.mxu0 %v1175
      %1564 = vmatpush.bf16.msra.mxu0 %v1170
      %1565 = vmatpush.bf16.msra.mxu0 %v1165
      %1566 = vmatpush.bf16.msra.mxu0 %v1160
      %1567 = vmatpush.bf16.msra.mxu0 %v1155
      %1568 = vmatpush.bf16.msra.mxu0 %v1150
      %1569 = vmatpush.bf16.msra.mxu0 %v1145
      %1570 = vmatmul.bf16.gmra.mxu0 %v416
      %v1571 = vpop.f32.mrf.mxu0
      %v1572 = vadd.f32 %v1558, %v1571
      %v1573 = vpop.f32.mrf.mxu0
      %v1574 = vadd.f32 %v1560, %v1573
      %1575 = vdwg.mxu0
      %1576 = vmatpush.bf16.msra.mxu0 %v1220
      %1577 = vmatpush.bf16.msra.mxu0 %v1215
      %1578 = vmatpush.bf16.msra.mxu0 %v1210
      %1579 = vmatpush.bf16.msra.mxu0 %v1205
      %1580 = vmatpush.bf16.msra.mxu0 %v1200
      %1581 = vmatpush.bf16.msra.mxu0 %v1195
      %1582 = vmatpush.bf16.msra.mxu0 %v1190
      %1583 = vmatpush.bf16.msra.mxu0 %v1185
      %1584 = vmatmul.bf16.gmra.mxu0 %v417
      %v1585 = vpop.f32.mrf.mxu0
      %v1586 = vadd.f32 %v1572, %v1585
      %v1587 = vpop.f32.mrf.mxu0
      %v1588 = vadd.f32 %v1574, %v1587
      %1589 = vdwg.mxu0
      %1590 = vmatpush.bf16.msra.mxu0 %v1260
      %1591 = vmatpush.bf16.msra.mxu0 %v1255
      %1592 = vmatpush.bf16.msra.mxu0 %v1250
      %1593 = vmatpush.bf16.msra.mxu0 %v1245
      %1594 = vmatpush.bf16.msra.mxu0 %v1240
      %1595 = vmatpush.bf16.msra.mxu0 %v1235
      %1596 = vmatpush.bf16.msra.mxu0 %v1230
      %1597 = vmatpush.bf16.msra.mxu0 %v1225
      %1598 = vmatmul.bf16.gmra.mxu0 %v418
      %v1599 = vpop.f32.mrf.mxu0
      %v1600 = vadd.f32 %v1586, %v1599
      %v1601 = vpop.f32.mrf.mxu0
      %v1602 = vadd.f32 %v1588, %v1601
      %1603 = vdwg.mxu0
      %1604 = vmatpush.bf16.msra.mxu0 %v1101
      %1605 = vmatpush.bf16.msra.mxu0 %v1096
      %1606 = vmatpush.bf16.msra.mxu0 %v1091
      %1607 = vmatpush.bf16.msra.mxu0 %v1086
      %1608 = vmatpush.bf16.msra.mxu0 %v1081
      %1609 = vmatpush.bf16.msra.mxu0 %v1076
      %1610 = vmatpush.bf16.msra.mxu0 %v1071
      %1611 = vmatpush.bf16.msra.mxu0 %v1066
      %1612 = vmatmul.bf16.gmra.mxu0 %v414
      %v1613 = vpop.f32.mrf.mxu0
      %v1614 = vadd.f32 0.0, %v1613
      %v1615 = vpop.f32.mrf.mxu0
      %v1616 = vadd.f32 0.0, %v1615
      %1617 = vdwg.mxu0
      %1618 = vmatpush.bf16.msra.mxu0 %v1141
      %1619 = vmatpush.bf16.msra.mxu0 %v1136
      %1620 = vmatpush.bf16.msra.mxu0 %v1131
      %1621 = vmatpush.bf16.msra.mxu0 %v1126
      %1622 = vmatpush.bf16.msra.mxu0 %v1121
      %1623 = vmatpush.bf16.msra.mxu0 %v1116
      %1624 = vmatpush.bf16.msra.mxu0 %v1111
      %1625 = vmatpush.bf16.msra.mxu0 %v1106
      %1626 = vmatmul.bf16.gmra.mxu0 %v415
      %v1627 = vpop.f32.mrf.mxu0
      %v1628 = vadd.f32 %v1614, %v1627
      %v1629 = vpop.f32.mrf.mxu0
      %v1630 = vadd.f32 %v1616, %v1629
      %1631 = vdwg.mxu0
      %1632 = vmatpush.bf16.msra.mxu0 %v1181
      %1633 = vmatpush.bf16.msra.mxu0 %v1176
      %1634 = vmatpush.bf16.msra.mxu0 %v1171
      %1635 = vmatpush.bf16.msra.mxu0 %v1166
      %1636 = vmatpush.bf16.msra.mxu0 %v1161
      %1637 = vmatpush.bf16.msra.mxu0 %v1156
      %1638 = vmatpush.bf16.msra.mxu0 %v1151
      %1639 = vmatpush.bf16.msra.mxu0 %v1146
      %1640 = vmatmul.bf16.gmra.mxu0 %v416
      %v1641 = vpop.f32.mrf.mxu0
      %v1642 = vadd.f32 %v1628, %v1641
      %v1643 = vpop.f32.mrf.mxu0
      %v1644 = vadd.f32 %v1630, %v1643
      %1645 = vdwg.mxu0
      %1646 = vmatpush.bf16.msra.mxu0 %v1221
      %1647 = vmatpush.bf16.msra.mxu0 %v1216
      %1648 = vmatpush.bf16.msra.mxu0 %v1211
      %1649 = vmatpush.bf16.msra.mxu0 %v1206
      %1650 = vmatpush.bf16.msra.mxu0 %v1201
      %1651 = vmatpush.bf16.msra.mxu0 %v1196
      %1652 = vmatpush.bf16.msra.mxu0 %v1191
      %1653 = vmatpush.bf16.msra.mxu0 %v1186
      %1654 = vmatmul.bf16.gmra.mxu0 %v417
      %v1655 = vpop.f32.mrf.mxu0
      %v1656 = vadd.f32 %v1642, %v1655
      %v1657 = vpop.f32.mrf.mxu0
      %v1658 = vadd.f32 %v1644, %v1657
      %1659 = vdwg.mxu0
      %1660 = vmatpush.bf16.msra.mxu0 %v1261
      %1661 = vmatpush.bf16.msra.mxu0 %v1256
      %1662 = vmatpush.bf16.msra.mxu0 %v1251
      %1663 = vmatpush.bf16.msra.mxu0 %v1246
      %1664 = vmatpush.bf16.msra.mxu0 %v1241
      %1665 = vmatpush.bf16.msra.mxu0 %v1236
      %1666 = vmatpush.bf16.msra.mxu0 %v1231
      %1667 = vmatpush.bf16.msra.mxu0 %v1226
      %1668 = vmatmul.bf16.gmra.mxu0 %v418
      %v1669 = vpop.f32.mrf.mxu0
      %v1670 = vadd.f32 %v1656, %v1669
      %v1671 = vpop.f32.mrf.mxu0
      %v1672 = vadd.f32 %v1658, %v1671
      %1673 = vdwg.mxu0
      %1674 = vmatpush.bf16.msra.mxu0 %v1102
      %1675 = vmatpush.bf16.msra.mxu0 %v1097
      %1676 = vmatpush.bf16.msra.mxu0 %v1092
      %1677 = vmatpush.bf16.msra.mxu0 %v1087
      %1678 = vmatpush.bf16.msra.mxu0 %v1082
      %1679 = vmatpush.bf16.msra.mxu0 %v1077
      %1680 = vmatpush.bf16.msra.mxu0 %v1072
      %1681 = vmatpush.bf16.msra.mxu0 %v1067
      %1682 = vmatmul.bf16.gmra.mxu0 %v414
      %v1683 = vpop.f32.mrf.mxu0
      %v1684 = vadd.f32 0.0, %v1683
      %v1685 = vpop.f32.mrf.mxu0
      %v1686 = vadd.f32 0.0, %v1685
      %1687 = vdwg.mxu0
      %1688 = vmatpush.bf16.msra.mxu0 %v1142
      %1689 = vmatpush.bf16.msra.mxu0 %v1137
      %1690 = vmatpush.bf16.msra.mxu0 %v1132
      %1691 = vmatpush.bf16.msra.mxu0 %v1127
      %1692 = vmatpush.bf16.msra.mxu0 %v1122
      %1693 = vmatpush.bf16.msra.mxu0 %v1117
      %1694 = vmatpush.bf16.msra.mxu0 %v1112
      %1695 = vmatpush.bf16.msra.mxu0 %v1107
      %1696 = vmatmul.bf16.gmra.mxu0 %v415
      %v1697 = vpop.f32.mrf.mxu0
      %v1698 = vadd.f32 %v1684, %v1697
      %v1699 = vpop.f32.mrf.mxu0
      %v1700 = vadd.f32 %v1686, %v1699
      %1701 = vdwg.mxu0
      %1702 = vmatpush.bf16.msra.mxu0 %v1182
      %1703 = vmatpush.bf16.msra.mxu0 %v1177
      %1704 = vmatpush.bf16.msra.mxu0 %v1172
      %1705 = vmatpush.bf16.msra.mxu0 %v1167
      %1706 = vmatpush.bf16.msra.mxu0 %v1162
      %1707 = vmatpush.bf16.msra.mxu0 %v1157
      %1708 = vmatpush.bf16.msra.mxu0 %v1152
      %1709 = vmatpush.bf16.msra.mxu0 %v1147
      %1710 = vmatmul.bf16.gmra.mxu0 %v416
      %v1711 = vpop.f32.mrf.mxu0
      %v1712 = vadd.f32 %v1698, %v1711
      %v1713 = vpop.f32.mrf.mxu0
      %v1714 = vadd.f32 %v1700, %v1713
      %1715 = vdwg.mxu0
      %1716 = vmatpush.bf16.msra.mxu0 %v1222
      %1717 = vmatpush.bf16.msra.mxu0 %v1217
      %1718 = vmatpush.bf16.msra.mxu0 %v1212
      %1719 = vmatpush.bf16.msra.mxu0 %v1207
      %1720 = vmatpush.bf16.msra.mxu0 %v1202
      %1721 = vmatpush.bf16.msra.mxu0 %v1197
      %1722 = vmatpush.bf16.msra.mxu0 %v1192
      %1723 = vmatpush.bf16.msra.mxu0 %v1187
      %1724 = vmatmul.bf16.gmra.mxu0 %v417
      %v1725 = vpop.f32.mrf.mxu0
      %v1726 = vadd.f32 %v1712, %v1725
      %v1727 = vpop.f32.mrf.mxu0
      %v1728 = vadd.f32 %v1714, %v1727
      %1729 = vdwg.mxu0
      %1730 = vmatpush.bf16.msra.mxu0 %v1262
      %1731 = vmatpush.bf16.msra.mxu0 %v1257
      %1732 = vmatpush.bf16.msra.mxu0 %v1252
      %1733 = vmatpush.bf16.msra.mxu0 %v1247
      %1734 = vmatpush.bf16.msra.mxu0 %v1242
      %1735 = vmatpush.bf16.msra.mxu0 %v1237
      %1736 = vmatpush.bf16.msra.mxu0 %v1232
      %1737 = vmatpush.bf16.msra.mxu0 %v1227
      %1738 = vmatmul.bf16.gmra.mxu0 %v418
      %v1739 = vpop.f32.mrf.mxu0
      %v1740 = vadd.f32 %v1726, %v1739
      %v1741 = vpop.f32.mrf.mxu0
      %v1742 = vadd.f32 %v1728, %v1741
      %1743 = vdwg.mxu0
      %1744 = vmatpush.bf16.msra.mxu0 %v1103
      %1745 = vmatpush.bf16.msra.mxu0 %v1098
      %1746 = vmatpush.bf16.msra.mxu0 %v1093
      %1747 = vmatpush.bf16.msra.mxu0 %v1088
      %1748 = vmatpush.bf16.msra.mxu0 %v1083
      %1749 = vmatpush.bf16.msra.mxu0 %v1078
      %1750 = vmatpush.bf16.msra.mxu0 %v1073
      %1751 = vmatpush.bf16.msra.mxu0 %v1068
      %1752 = vmatmul.bf16.gmra.mxu0 %v414
      %v1753 = vpop.f32.mrf.mxu0
      %v1754 = vadd.f32 0.0, %v1753
      %v1755 = vpop.f32.mrf.mxu0
      %v1756 = vadd.f32 0.0, %v1755
      %1757 = vdwg.mxu0
      %1758 = vmatpush.bf16.msra.mxu0 %v1143
      %1759 = vmatpush.bf16.msra.mxu0 %v1138
      %1760 = vmatpush.bf16.msra.mxu0 %v1133
      %1761 = vmatpush.bf16.msra.mxu0 %v1128
      %1762 = vmatpush.bf16.msra.mxu0 %v1123
      %1763 = vmatpush.bf16.msra.mxu0 %v1118
      %1764 = vmatpush.bf16.msra.mxu0 %v1113
      %1765 = vmatpush.bf16.msra.mxu0 %v1108
      %1766 = vmatmul.bf16.gmra.mxu0 %v415
      %v1767 = vpop.f32.mrf.mxu0
      %v1768 = vadd.f32 %v1754, %v1767
      %v1769 = vpop.f32.mrf.mxu0
      %v1770 = vadd.f32 %v1756, %v1769
      %1771 = vdwg.mxu0
      %1772 = vmatpush.bf16.msra.mxu0 %v1183
      %1773 = vmatpush.bf16.msra.mxu0 %v1178
      %1774 = vmatpush.bf16.msra.mxu0 %v1173
      %1775 = vmatpush.bf16.msra.mxu0 %v1168
      %1776 = vmatpush.bf16.msra.mxu0 %v1163
      %1777 = vmatpush.bf16.msra.mxu0 %v1158
      %1778 = vmatpush.bf16.msra.mxu0 %v1153
      %1779 = vmatpush.bf16.msra.mxu0 %v1148
      %1780 = vmatmul.bf16.gmra.mxu0 %v416
      %v1781 = vpop.f32.mrf.mxu0
      %v1782 = vadd.f32 %v1768, %v1781
      %v1783 = vpop.f32.mrf.mxu0
      %v1784 = vadd.f32 %v1770, %v1783
      %1785 = vdwg.mxu0
      %1786 = vmatpush.bf16.msra.mxu0 %v1223
      %1787 = vmatpush.bf16.msra.mxu0 %v1218
      %1788 = vmatpush.bf16.msra.mxu0 %v1213
      %1789 = vmatpush.bf16.msra.mxu0 %v1208
      %1790 = vmatpush.bf16.msra.mxu0 %v1203
      %1791 = vmatpush.bf16.msra.mxu0 %v1198
      %1792 = vmatpush.bf16.msra.mxu0 %v1193
      %1793 = vmatpush.bf16.msra.mxu0 %v1188
      %1794 = vmatmul.bf16.gmra.mxu0 %v417
      %v1795 = vpop.f32.mrf.mxu0
      %v1796 = vadd.f32 %v1782, %v1795
      %v1797 = vpop.f32.mrf.mxu0
      %v1798 = vadd.f32 %v1784, %v1797
      %1799 = vdwg.mxu0
      %1800 = vmatpush.bf16.msra.mxu0 %v1263
      %1801 = vmatpush.bf16.msra.mxu0 %v1258
      %1802 = vmatpush.bf16.msra.mxu0 %v1253
      %1803 = vmatpush.bf16.msra.mxu0 %v1248
      %1804 = vmatpush.bf16.msra.mxu0 %v1243
      %1805 = vmatpush.bf16.msra.mxu0 %v1238
      %1806 = vmatpush.bf16.msra.mxu0 %v1233
      %1807 = vmatpush.bf16.msra.mxu0 %v1228
      %1808 = vmatmul.bf16.gmra.mxu0 %v418
      %v1809 = vpop.f32.mrf.mxu0
      %v1810 = vadd.f32 %v1796, %v1809
      %v1811 = vpop.f32.mrf.mxu0
      %v1812 = vadd.f32 %v1798, %v1811
      %1813 = vdwg.mxu0
      %v1814 = vpack.c.bf16 %v1600, %v1530
      %v1815 = vpack.c.bf16 %v1740, %v1670
      %v1816 = vpack.c.bf16 %v1810, %v1810
      %v1817 = vpack.c.bf16 %v1602, %v1532
      %v1818 = vpack.c.bf16 %v1742, %v1672
      %v1819 = vpack.c.bf16 %v1812, %v1812
      %1820 = vst [vmem:[%s150] sm:$0xff] %v1814
      %1821 = vst [vmem:[%s150 + $0x8] sm:$0xff] %v1815
      %1822 = vst [vmem:[%s150 + $0x10] sm:$0xf] %v1816
      %1823 = vst [vmem:[%s150 + $0x14] sm:$0xff] %v1817
      %1824 = vst [vmem:[%s150 + $0x1c] sm:$0xff] %v1818
      %1825 = vst [vmem:[%s150 + $0x24] sm:$0xf] %v1819
      %s1826 = smul.u32 2, %s13
      %p1827 = scmp.lt.s32.totalorder %s1826, 3
      %s1828 = scalar_select %p1827, %s1826, 3
      %s1829 = smul.addr %s1828, 5
      %s1830 = smul.addr %s1829, 4
      %s1831 = scalar_lea.vmem %s2, %s1830
      // Predicated region
      $region29: #{gcn_forward.4} parent=27 // pred_check
        %p1832 = pneg %p78
      $region30: #{gcn_forward.4} parent=27 // pred_check_branch
        %1834 = sbr.rel (%p1832) target = $region32
      $region31: #{gcn_forward.4} parent=27 // pred_region
        %s1835 = smul.u32 2, %s13
      $region32: #{gcn_forward.4} parent=27 // pred_fallthru
        _
    $region28: #{gcn_forward.4} parent=5 // pred_fallthru
      _
    %p1836 = scmp.le.s32.totalorder 2, %s8
    // Predicated region
    $region33: #{gcn_forward.4} parent=5 // pred_check
      %p1837 = pneg %p1836
    $region34: #{gcn_forward.4} parent=5 // pred_check_branch
      %1839 = sbr.rel (%p1837) target = $region36
    $region35: #{gcn_forward.4} parent=5 // pred_region
      %s1840 = ssub.s32 %s8, 2
      // Predicated region
      $region37: #{gcn_forward.4} parent=35 // pred_check
        %p1841 = pneg %p84
      $region38: #{gcn_forward.4} parent=35 // pred_check_branch
        %1843 = sbr.rel (%p1841) target = $region40
      $region39: #{gcn_forward.4} parent=35 // pred_region
        %s1844 = smul.u32 2, %s14
        %p1845 = scmp.lt.s32.totalorder %s1844, 3
        %s1846 = scalar_select %p1845, %s1844, 3
        %s1847 = smul.addr %s1846, 5
        %s1848 = smul.addr %s1847, 4
        %s1849 = scalar_lea.vmem %s2, %s1848
      $region40: #{gcn_forward.4} parent=35 // pred_fallthru
        _
    $region36: #{gcn_forward.4} parent=5 // pred_fallthru
      _
  $region6: #{gcn_forward.4} parent=0 // loop_footer
    %s12 = sadd.s32 1, %s8
  $region7: #{gcn_forward.4} parent=0 // loop_footer_branch
    %7 = sbr.rel target = $region3
  $region8: #{gcn_forward.4} parent=0 // loop_exit
    _

// kernel: gcn_forward.7
$region0: #{gcn_forward.7}
  #allocation0 [shape = 'u32[]', space=smem, size = 0x4, offset = 0x4, fixed_abs, tag = 'smem constant byte address 0x4 - core index']
  #allocation1 [shape = 'u32[72,128]{1,0:T(1,128)}', space=vmem, size = 0x9000, scoped, tag = 'internal scratch']
  %s0 = inlined_call_operand.vmem [shape: bf16[32,32], index: 0, kind: input, shape index: {}]
  %s1 = inlined_call_operand.vmem [shape: bf16[32,1024], index: 1, kind: input, shape index: {}]
  %s2 = inlined_call_operand.vmem [shape: f32[1,1024], index: 2, kind: input, shape index: {}]
  %s3 = inlined_call_operand.vmem [shape: f32[32,1024], index: 3, kind: output, shape index: {}]
  %s4 = sld [smem:[#allocation0]]
  $region45: #{gcn_forward.7} parent=0
    _
  %s6 = ssub.s32 1, %s4
  %s7 = scalar_select 0, %s6, %s4
  loop: start=0, step=1, limit=4
  $region2: #{gcn_forward.7} parent=0 // loop_pre_header
    _
  $region3: #{gcn_forward.7} parent=0 // loop_header
    %s9 = sphi 0, %s13
    %p10 = scmp.ge.s32.totalorder %s9, 4
    %s19 = sphi 0, %s21
    %s22 = sphi 0, %s19
    %s23 = sphi 0, %s22
    %s39 = sphi 0, %s23
    %s43 = sphi 0, %s43
    %s45 = sphi 0, %s43
    %s46 = sphi 0, %s45
    %s60 = sphi 0, %s46
    %s64 = sphi 0, %s64
    %s66 = sphi 0, %s64
    %s67 = sphi 0, %s66
    %s81 = sphi 0, %s67
    %s87 = sphi 0, %s89
    %s90 = sphi 0, %s87
    %s91 = sphi 0, %s90
    %s107 = sphi 0, %s91
  $region4: #{gcn_forward.7} parent=0 // loop_header_branch
    %12 = sbr.rel (%p10) target = $region8
  $region5: #{gcn_forward.7} parent=0 // loop_body
    %s14 = ssub.s32 %s9, 1
    %s15 = ssub.s32 %s9, 2
    %s16 = sadd.s32 %s9, 1
    %s17 = ssub.s32 %s9, %s16
    %p18 = scmp.eq.s32.totalorder %s17, 0
    %s20 = sadd.s32 %s19, 1
    %s21 = scalar_select %p18, %s19, %s20
    %p24 = pneg %p18
    %p25 = scmp.eq.s32.totalorder %s9, 1
    %p26 = por %p24, %p25
    %p27 = scmp.ne.s32.totalorder %s19, %s22
    %p28 = scmp.eq.s32.totalorder %s9, 0
    %p29 = por %p27, %p28
    %p30 = scmp.ne.s32.totalorder %s19, %s22
    %p31 = scmp.eq.s32.totalorder %s14, 1
    %p32 = por %p30, %p31
    %p33 = scmp.ne.s32.totalorder %s22, %s23
    %p34 = scmp.eq.s32.totalorder %s14, 0
    %p35 = por %p33, %p34
    %p36 = scmp.ne.s32.totalorder %s22, %s23
    %p37 = scmp.eq.s32.totalorder %s15, 1
    %p38 = por %p36, %p37
    %p40 = scmp.ne.s32.totalorder %s23, %s39
    %p41 = scmp.eq.s32.totalorder %s15, 0
    %p42 = por %p40, %p41
    %s44 = sadd.s32 %s43, 1
    %p47 = scmp.eq.s32.totalorder %s9, 1
    %p48 = scmp.ne.s32.totalorder %s43, %s45
    %p49 = scmp.eq.s32.totalorder %s9, 0
    %p50 = por %p48, %p49
    %p51 = scmp.ne.s32.totalorder %s43, %s45
    %p52 = scmp.eq.s32.totalorder %s14, 1
    %p53 = por %p51, %p52
    %p54 = scmp.ne.s32.totalorder %s45, %s46
    %p55 = scmp.eq.s32.totalorder %s14, 0
    %p56 = por %p54, %p55
    %p57 = scmp.ne.s32.totalorder %s45, %s46
    %p58 = scmp.eq.s32.totalorder %s15, 1
    %p59 = por %p57, %p58
    %p61 = scmp.ne.s32.totalorder %s46, %s60
    %p62 = scmp.eq.s32.totalorder %s15, 0
    %p63 = por %p61, %p62
    %s65 = sadd.s32 %s64, 1
    %p68 = scmp.eq.s32.totalorder %s9, 1
    %p69 = scmp.ne.s32.totalorder %s64, %s66
    %p70 = scmp.eq.s32.totalorder %s9, 0
    %p71 = por %p69, %p70
    %p72 = scmp.ne.s32.totalorder %s64, %s66
    %p73 = scmp.eq.s32.totalorder %s14, 1
    %p74 = por %p72, %p73
    %p75 = scmp.ne.s32.totalorder %s66, %s67
    %p76 = scmp.eq.s32.totalorder %s14, 0
    %p77 = por %p75, %p76
    %p78 = scmp.ne.s32.totalorder %s66, %s67
    %p79 = scmp.eq.s32.totalorder %s15, 1
    %p80 = por %p78, %p79
    %p82 = scmp.ne.s32.totalorder %s67, %s81
    %p83 = scmp.eq.s32.totalorder %s15, 0
    %p84 = por %p82, %p83
    %s85 = ssub.s32 %s9, %s16
    %p86 = scmp.eq.s32.totalorder %s85, 0
    %s88 = sadd.s32 %s87, 1
    %s89 = scalar_select %p86, %s87, %s88
    %p92 = pneg %p86
    %p93 = scmp.eq.s32.totalorder %s9, 1
    %p94 = por %p92, %p93
    %p95 = scmp.ne.s32.totalorder %s87, %s90
    %p96 = scmp.eq.s32.totalorder %s9, 0
    %p97 = por %p95, %p96
    %p98 = scmp.ne.s32.totalorder %s87, %s90
    %p99 = scmp.eq.s32.totalorder %s14, 1
    %p100 = por %p98, %p99
    %p101 = scmp.ne.s32.totalorder %s90, %s91
    %p102 = scmp.eq.s32.totalorder %s14, 0
    %p103 = por %p101, %p102
    %p104 = scmp.ne.s32.totalorder %s90, %s91
    %p105 = scmp.eq.s32.totalorder %s15, 1
    %p106 = por %p104, %p105
    %p108 = scmp.ne.s32.totalorder %s91, %s107
    %p109 = scmp.eq.s32.totalorder %s15, 0
    %p110 = por %p108, %p109
    %p111 = scmp.le.s32.totalorder 1, %s9
    %p112 = scmp.lt.s32.totalorder %s9, 3
    %p113 = pnand %p111, %p112
    %p114 = pneg %p113
    // Predicated region
    $region9: #{gcn_forward.7} parent=5 // pred_check
      _
    $region10: #{gcn_forward.7} parent=5 // pred_check_branch
      %116 = sbr.rel (%p113) target = $region12
    $region11: #{gcn_forward.7} parent=5 // pred_region
      %s117 = ssub.s32 %s9, 1
      // Predicated region
      $region13: #{gcn_forward.7} parent=11 // pred_check
        %p118 = pneg %p56
      $region14: #{gcn_forward.7} parent=11 // pred_check_branch
        %120 = sbr.rel (%p118) target = $region16
      $region15: #{gcn_forward.7} parent=11 // pred_region
        _
      $region16: #{gcn_forward.7} parent=11 // pred_fallthru
        _
      // Predicated region
      $region17: #{gcn_forward.7} parent=11 // pred_check
        %p121 = pneg %p77
      $region18: #{gcn_forward.7} parent=11 // pred_check_branch
        %123 = sbr.rel (%p121) target = $region20
      $region19: #{gcn_forward.7} parent=11 // pred_region
        _
      $region20: #{gcn_forward.7} parent=11 // pred_fallthru
        _
    $region12: #{gcn_forward.7} parent=5 // pred_fallthru
      _
    %p124 = scmp.lt.s32.totalorder %s9, 2
    // Predicated region
    $region21: #{gcn_forward.7} parent=5 // pred_check
      %p125 = pneg %p124
    $region22: #{gcn_forward.7} parent=5 // pred_check_branch
      %127 = sbr.rel (%p125) target = $region24
    $region23: #{gcn_forward.7} parent=5 // pred_region
      // Predicated region
      $region25: #{gcn_forward.7} parent=23 // pred_check
        %p128 = pneg %p29
      $region26: #{gcn_forward.7} parent=23 // pred_check_branch
        %130 = sbr.rel (%p128) target = $region28
      $region27: #{gcn_forward.7} parent=23 // pred_region
        %s131 = smul.u32 2, %s9
        %p132 = scmp.lt.s32.totalorder %s131, 3
        %s133 = scalar_select %p132, %s131, 3
        %s134 = smul.addr %s133, 4
        %s135 = scalar_lea.vmem %s0, %s134
        %s136 = smul.u32 2, %s9
      $region28: #{gcn_forward.7} parent=23 // pred_fallthru
        _
    $region24: #{gcn_forward.7} parent=5 // pred_fallthru
      _
    %p137 = scmp.le.s32.totalorder 1, %s9
    %p138 = scmp.lt.s32.totalorder %s9, 3
    %p139 = pnand %p137, %p138
    %p140 = pneg %p139
    // Predicated region
    $region29: #{gcn_forward.7} parent=5 // pred_check
      _
    $region30: #{gcn_forward.7} parent=5 // pred_check_branch
      %142 = sbr.rel (%p139) target = $region32
    $region31: #{gcn_forward.7} parent=5 // pred_region
      %s143 = ssub.s32 %s9, 1
      %s144 = smul.u32 2, %s14
      %p145 = scmp.lt.s32.totalorder %s144, 3
      %s146 = scalar_select %p145, %s144, 3
      %s147 = smul.addr %s146, 4
      %s148 = scalar_lea.vmem %s0, %s147
      %p149 = pneg %p35
      %p150 = pneg %p32
      %p151 = pneg %p56
      %p152 = pneg %p53
      %p153 = pneg %p77
      %p154 = pneg %p74
      %p155 = pneg %p103
      %p156 = pneg %p100
      %s157 = smul.u32 2, %s14
      %p158 = scmp.lt.s32.totalorder %s157, 3
      %s159 = scalar_select %p158, %s157, 3
      %s160 = smul.addr %s159, 8
      %s161 = smul.addr %s160, 8
      %s162 = scalar_lea.vmem %s3, %s161
      %s163 = smul.u32 2, %s14
      %p164 = scmp.lt.s32.totalorder %s163, 3
      %s165 = scalar_select %p164, %s163, 3
      %s166 = smul.addr %s165, 4
      %s167 = scalar_lea.vmem %s0, %s166
      %s168 = smul.u32 2, %s14
      %s169 = smul.u32 2, %s14
      %p170 = scmp.lt.s32.totalorder %s169, 3
      %s171 = scalar_select %p170, %s169, 3
      %s172 = smul.addr %s171, 8
      %s173 = smul.addr %s172, 8
      %s174 = scalar_lea.vmem %s3, %s173
      %s175 = smul.u32 2, %s14
      %v177 = vld [vmem:[%s167] sm:$0xf]
      %v178 = vld [vmem:[%s167 + $0x4] sm:$0xf]
      %v179 = vld [vmem:[%s1] sm:$0xff]
      %v180 = vld [vmem:[%s1 + $0x8] sm:$0xff]
      %v181 = vld [vmem:[%s1 + $0x10] sm:$0xff]
      %v182 = vld [vmem:[%s1 + $0x18] sm:$0xff]
      %v183 = vld [vmem:[%s1 + $0x20] sm:$0xff]
      %v184 = vld [vmem:[%s1 + $0x28] sm:$0xff]
      %v185 = vld [vmem:[%s1 + $0x30] sm:$0xff]
      %v186 = vld [vmem:[%s1 + $0x38] sm:$0xff]
      %v187 = vld [vmem:[%s1 + $0x40] sm:$0xff]
      %v188 = vld [vmem:[%s1 + $0x48] sm:$0xff]
      %v189 = vld [vmem:[%s1 + $0x50] sm:$0xff]
      %v190 = vld [vmem:[%s1 + $0x58] sm:$0xff]
      %v191 = vld [vmem:[%s1 + $0x60] sm:$0xff]
      %v192 = vld [vmem:[%s1 + $0x68] sm:$0xff]
      %v193 = vld [vmem:[%s1 + $0x70] sm:$0xff]
      %v194 = vld [vmem:[%s1 + $0x78] sm:$0xff]
      %v195 = vld [vmem:[%s2] sm:$0xff]
      %v197 = vperm.slane %v195, 0
      %v198 = vperm.slane %v195, 1
      %v199 = vperm.slane %v195, 2
      %v200 = vperm.slane %v195, 3
      %v201 = vperm.slane %v195, 4
      %v202 = vperm.slane %v195, 5
      %v203 = vperm.slane %v195, 6
      %v204 = vperm.slane %v195, 7
      %v215 = vunpack.c.l.b16 %v177
      %v216 = vunpack.c.l.b16 %v178
      %v217 = vpack.c.b16 %v216, %v215
      %v234 = vunpack.c.l.b16 %v179
      %v235 = vunpack.c.h.b16 %v179
      %v236 = vunpack.c.l.b16 %v180
      %v237 = vunpack.c.h.b16 %v180
      %v238 = vunpack.c.l.b16 %v181
      %v239 = vunpack.c.h.b16 %v181
      %v240 = vunpack.c.l.b16 %v182
      %v241 = vunpack.c.h.b16 %v182
      %v242 = vunpack.c.l.b16 %v183
      %v243 = vunpack.c.h.b16 %v183
      %v244 = vunpack.c.l.b16 %v184
      %v245 = vunpack.c.h.b16 %v184
      %v246 = vunpack.c.l.b16 %v185
      %v247 = vunpack.c.h.b16 %v185
      %v248 = vunpack.c.l.b16 %v186
      %v249 = vunpack.c.h.b16 %v186
      %v250 = vunpack.c.l.b16 %v187
      %v251 = vunpack.c.h.b16 %v187
      %v252 = vunpack.c.l.b16 %v188
      %v253 = vunpack.c.h.b16 %v188
      %v254 = vunpack.c.l.b16 %v189
      %v255 = vunpack.c.h.b16 %v189
      %v256 = vunpack.c.l.b16 %v190
      %v257 = vunpack.c.h.b16 %v190
      %v258 = vunpack.c.l.b16 %v191
      %v259 = vunpack.c.h.b16 %v191
      %v260 = vunpack.c.l.b16 %v192
      %v261 = vunpack.c.h.b16 %v192
      %v262 = vunpack.c.l.b16 %v193
      %v263 = vunpack.c.h.b16 %v193
      %v264 = vunpack.c.l.b16 %v194
      %v265 = vunpack.c.h.b16 %v194
      %v266 = vpack.c.b16 %v242, %v234
      %v267 = vpack.c.b16 %v243, %v235
      %v268 = vpack.c.b16 %v244, %v236
      %v269 = vpack.c.b16 %v245, %v237
      %v270 = vpack.c.b16 %v246, %v238
      %v271 = vpack.c.b16 %v247, %v239
      %v272 = vpack.c.b16 %v248, %v240
      %v273 = vpack.c.b16 %v249, %v241
      %v274 = vpack.c.b16 %v258, %v250
      %v275 = vpack.c.b16 %v259, %v251
      %v276 = vpack.c.b16 %v260, %v252
      %v277 = vpack.c.b16 %v261, %v253
      %v278 = vpack.c.b16 %v262, %v254
      %v279 = vpack.c.b16 %v263, %v255
      %v280 = vpack.c.b16 %v264, %v256
      %v281 = vpack.c.b16 %v265, %v257
      %vm298 = vcmask 261120
      %v300 = vsel %vm298, %v217, 0
      %302 = vmatpush.bf16.msra.mxu0 0
      %303 = vmatpush.bf16.msra.mxu0 0
      %304 = vmatpush.bf16.msra.mxu0 0
      %305 = vmatpush.bf16.msra.mxu0 0
      %306 = vmatpush.bf16.msra.mxu0 0
      %307 = vmatpush.bf16.msra.mxu0 0
      %308 = vmatpush.bf16.msra.mxu0 %v274
      %309 = vmatpush.bf16.msra.mxu0 %v266
      %310 = vmatmul.bf16.gmra.mxu0 %v300
      %v311 = vpop.f32.mrf.mxu0
      %v312 = vadd.f32 %v197, %v311
      %v313 = vpop.f32.mrf.mxu0
      %v314 = vadd.f32 %v197, %v313
      %315 = vdwg.mxu0
      %316 = vmatpush.bf16.msra.mxu0 0
      %317 = vmatpush.bf16.msra.mxu0 0
      %318 = vmatpush.bf16.msra.mxu0 0
      %319 = vmatpush.bf16.msra.mxu0 0
      %320 = vmatpush.bf16.msra.mxu0 0
      %321 = vmatpush.bf16.msra.mxu0 0
      %322 = vmatpush.bf16.msra.mxu0 %v275
      %323 = vmatpush.bf16.msra.mxu0 %v267
      %324 = vmatmul.bf16.gmra.mxu0 %v300
      %v325 = vpop.f32.mrf.mxu0
      %v326 = vadd.f32 %v198, %v325
      %v327 = vpop.f32.mrf.mxu0
      %v328 = vadd.f32 %v198, %v327
      %329 = vdwg.mxu0
      %330 = vmatpush.bf16.msra.mxu0 0
      %331 = vmatpush.bf16.msra.mxu0 0
      %332 = vmatpush.bf16.msra.mxu0 0
      %333 = vmatpush.bf16.msra.mxu0 0
      %334 = vmatpush.bf16.msra.mxu0 0
      %335 = vmatpush.bf16.msra.mxu0 0
      %336 = vmatpush.bf16.msra.mxu0 %v276
      %337 = vmatpush.bf16.msra.mxu0 %v268
      %338 = vmatmul.bf16.gmra.mxu0 %v300
      %v339 = vpop.f32.mrf.mxu0
      %v340 = vadd.f32 %v199, %v339
      %v341 = vpop.f32.mrf.mxu0
      %v342 = vadd.f32 %v199, %v341
      %343 = vdwg.mxu0
      %344 = vmatpush.bf16.msra.mxu0 0
      %345 = vmatpush.bf16.msra.mxu0 0
      %346 = vmatpush.bf16.msra.mxu0 0
      %347 = vmatpush.bf16.msra.mxu0 0
      %348 = vmatpush.bf16.msra.mxu0 0
      %349 = vmatpush.bf16.msra.mxu0 0
      %350 = vmatpush.bf16.msra.mxu0 %v277
      %351 = vmatpush.bf16.msra.mxu0 %v269
      %352 = vmatmul.bf16.gmra.mxu0 %v300
      %v353 = vpop.f32.mrf.mxu0
      %v354 = vadd.f32 %v200, %v353
      %v355 = vpop.f32.mrf.mxu0
      %v356 = vadd.f32 %v200, %v355
      %357 = vdwg.mxu0
      %358 = vmatpush.bf16.msra.mxu0 0
      %359 = vmatpush.bf16.msra.mxu0 0
      %360 = vmatpush.bf16.msra.mxu0 0
      %361 = vmatpush.bf16.msra.mxu0 0
      %362 = vmatpush.bf16.msra.mxu0 0
      %363 = vmatpush.bf16.msra.mxu0 0
      %364 = vmatpush.bf16.msra.mxu0 %v278
      %365 = vmatpush.bf16.msra.mxu0 %v270
      %366 = vmatmul.bf16.gmra.mxu0 %v300
      %v367 = vpop.f32.mrf.mxu0
      %v368 = vadd.f32 %v201, %v367
      %v369 = vpop.f32.mrf.mxu0
      %v370 = vadd.f32 %v201, %v369
      %371 = vdwg.mxu0
      %372 = vmatpush.bf16.msra.mxu0 0
      %373 = vmatpush.bf16.msra.mxu0 0
      %374 = vmatpush.bf16.msra.mxu0 0
      %375 = vmatpush.bf16.msra.mxu0 0
      %376 = vmatpush.bf16.msra.mxu0 0
      %377 = vmatpush.bf16.msra.mxu0 0
      %378 = vmatpush.bf16.msra.mxu0 %v279
      %379 = vmatpush.bf16.msra.mxu0 %v271
      %380 = vmatmul.bf16.gmra.mxu0 %v300
      %v381 = vpop.f32.mrf.mxu0
      %v382 = vadd.f32 %v202, %v381
      %v383 = vpop.f32.mrf.mxu0
      %v384 = vadd.f32 %v202, %v383
      %385 = vdwg.mxu0
      %386 = vmatpush.bf16.msra.mxu0 0
      %387 = vmatpush.bf16.msra.mxu0 0
      %388 = vmatpush.bf16.msra.mxu0 0
      %389 = vmatpush.bf16.msra.mxu0 0
      %390 = vmatpush.bf16.msra.mxu0 0
      %391 = vmatpush.bf16.msra.mxu0 0
      %392 = vmatpush.bf16.msra.mxu0 %v280
      %393 = vmatpush.bf16.msra.mxu0 %v272
      %394 = vmatmul.bf16.gmra.mxu0 %v300
      %v395 = vpop.f32.mrf.mxu0
      %v396 = vadd.f32 %v203, %v395
      %v397 = vpop.f32.mrf.mxu0
      %v398 = vadd.f32 %v203, %v397
      %399 = vdwg.mxu0
      %400 = vmatpush.bf16.msra.mxu0 0
      %401 = vmatpush.bf16.msra.mxu0 0
      %402 = vmatpush.bf16.msra.mxu0 0
      %403 = vmatpush.bf16.msra.mxu0 0
      %404 = vmatpush.bf16.msra.mxu0 0
      %405 = vmatpush.bf16.msra.mxu0 0
      %406 = vmatpush.bf16.msra.mxu0 %v281
      %407 = vmatpush.bf16.msra.mxu0 %v273
      %408 = vmatmul.bf16.gmra.mxu0 %v300
      %v409 = vpop.f32.mrf.mxu0
      %v410 = vadd.f32 %v204, %v409
      %v411 = vpop.f32.mrf.mxu0
      %v412 = vadd.f32 %v204, %v411
      %413 = vdwg.mxu0
      %414 = vst [vmem:[%s174] sm:$0xff] %v312
      %415 = vst [vmem:[%s174 + $0x8] sm:$0xff] %v326
      %416 = vst [vmem:[%s174 + $0x10] sm:$0xff] %v340
      %417 = vst [vmem:[%s174 + $0x18] sm:$0xff] %v354
      %418 = vst [vmem:[%s174 + $0x20] sm:$0xff] %v368
      %419 = vst [vmem:[%s174 + $0x28] sm:$0xff] %v382
      %420 = vst [vmem:[%s174 + $0x30] sm:$0xff] %v396
      %421 = vst [vmem:[%s174 + $0x38] sm:$0xff] %v410
      %422 = vst [vmem:[%s174 + $0x40] sm:$0xff] %v314
      %423 = vst [vmem:[%s174 + $0x48] sm:$0xff] %v328
      %424 = vst [vmem:[%s174 + $0x50] sm:$0xff] %v342
      %425 = vst [vmem:[%s174 + $0x58] sm:$0xff] %v356
      %426 = vst [vmem:[%s174 + $0x60] sm:$0xff] %v370
      %427 = vst [vmem:[%s174 + $0x68] sm:$0xff] %v384
      %428 = vst [vmem:[%s174 + $0x70] sm:$0xff] %v398
      %429 = vst [vmem:[%s174 + $0x78] sm:$0xff] %v412
      %s430 = smul.u32 2, %s14
      %p431 = scmp.lt.s32.totalorder %s430, 3
      %s432 = scalar_select %p431, %s430, 3
      %s433 = smul.addr %s432, 8
      %s434 = smul.addr %s433, 8
      %s435 = scalar_lea.vmem %s3, %s434
      // Predicated region
      $region33: #{gcn_forward.7} parent=31 // pred_check
        %p436 = pneg %p100
      $region34: #{gcn_forward.7} parent=31 // pred_check_branch
        %438 = sbr.rel (%p436) target = $region36
      $region35: #{gcn_forward.7} parent=31 // pred_region
        %s439 = smul.u32 2, %s14
      $region36: #{gcn_forward.7} parent=31 // pred_fallthru
        _
    $region32: #{gcn_forward.7} parent=5 // pred_fallthru
      _
    %p440 = scmp.le.s32.totalorder 2, %s9
    // Predicated region
    $region37: #{gcn_forward.7} parent=5 // pred_check
      %p441 = pneg %p440
    $region38: #{gcn_forward.7} parent=5 // pred_check_branch
      %443 = sbr.rel (%p441) target = $region40
    $region39: #{gcn_forward.7} parent=5 // pred_region
      %s444 = ssub.s32 %s9, 2
      // Predicated region
      $region41: #{gcn_forward.7} parent=39 // pred_check
        %p445 = pneg %p106
      $region42: #{gcn_forward.7} parent=39 // pred_check_branch
        %447 = sbr.rel (%p445) target = $region44
      $region43: #{gcn_forward.7} parent=39 // pred_region
        %s448 = smul.u32 2, %s15
        %p449 = scmp.lt.s32.totalorder %s448, 3
        %s450 = scalar_select %p449, %s448, 3
        %s451 = smul.addr %s450, 8
        %s452 = smul.addr %s451, 8
        %s453 = scalar_lea.vmem %s3, %s452
      $region44: #{gcn_forward.7} parent=39 // pred_fallthru
        _
    $region40: #{gcn_forward.7} parent=5 // pred_fallthru
      _
  $region6: #{gcn_forward.7} parent=0 // loop_footer
    %s13 = sadd.s32 1, %s9
  $region7: #{gcn_forward.7} parent=0 // loop_footer_branch
    %8 = sbr.rel target = $region3
  $region8: #{gcn_forward.7} parent=0 // loop_exit
    _

// kernel: gcn_forward.6
$region0: #{gcn_forward.6}
  #allocation0 [shape = 'u32[]', space=smem, size = 0x4, offset = 0x4, fixed_abs, tag = 'smem constant byte address 0x4 - core index']
  #allocation1 [shape = 'u32[72,128]{1,0:T(1,128)}', space=vmem, size = 0x9000, scoped, tag = 'internal scratch']
  %s0 = inlined_call_operand.vmem [shape: bf16[32,640], index: 0, kind: input, shape index: {}]
  %s1 = inlined_call_operand.vmem [shape: bf16[640,1024], index: 1, kind: input, shape index: {}]
  %s2 = inlined_call_operand.vmem [shape: bf16[32,1024], index: 2, kind: output, shape index: {}]
  %s3 = sld [smem:[#allocation0]]
  $region41: #{gcn_forward.6} parent=0
    _
  %s5 = ssub.s32 1, %s3
  %s6 = scalar_select 0, %s5, %s3
  loop: start=0, step=1, limit=4
  $region2: #{gcn_forward.6} parent=0 // loop_pre_header
    _
  $region3: #{gcn_forward.6} parent=0 // loop_header
    %s8 = sphi 0, %s12
    %p9 = scmp.ge.s32.totalorder %s8, 4
    %s18 = sphi 0, %s20
    %s21 = sphi 0, %s18
    %s22 = sphi 0, %s21
    %s38 = sphi 0, %s22
    %s42 = sphi 0, %s42
    %s44 = sphi 0, %s42
    %s45 = sphi 0, %s44
    %s59 = sphi 0, %s45
    %s65 = sphi 0, %s67
    %s68 = sphi 0, %s65
    %s69 = sphi 0, %s68
    %s85 = sphi 0, %s69
  $region4: #{gcn_forward.6} parent=0 // loop_header_branch
    %11 = sbr.rel (%p9) target = $region8
  $region5: #{gcn_forward.6} parent=0 // loop_body
    %s13 = ssub.s32 %s8, 1
    %s14 = ssub.s32 %s8, 2
    %s15 = sadd.s32 %s8, 1
    %s16 = ssub.s32 %s8, %s15
    %p17 = scmp.eq.s32.totalorder %s16, 0
    %s19 = sadd.s32 %s18, 1
    %s20 = scalar_select %p17, %s18, %s19
    %p23 = pneg %p17
    %p24 = scmp.eq.s32.totalorder %s8, 1
    %p25 = por %p23, %p24
    %p26 = scmp.ne.s32.totalorder %s18, %s21
    %p27 = scmp.eq.s32.totalorder %s8, 0
    %p28 = por %p26, %p27
    %p29 = scmp.ne.s32.totalorder %s18, %s21
    %p30 = scmp.eq.s32.totalorder %s13, 1
    %p31 = por %p29, %p30
    %p32 = scmp.ne.s32.totalorder %s21, %s22
    %p33 = scmp.eq.s32.totalorder %s13, 0
    %p34 = por %p32, %p33
    %p35 = scmp.ne.s32.totalorder %s21, %s22
    %p36 = scmp.eq.s32.totalorder %s14, 1
    %p37 = por %p35, %p36
    %p39 = scmp.ne.s32.totalorder %s22, %s38
    %p40 = scmp.eq.s32.totalorder %s14, 0
    %p41 = por %p39, %p40
    %s43 = sadd.s32 %s42, 1
    %p46 = scmp.eq.s32.totalorder %s8, 1
    %p47 = scmp.ne.s32.totalorder %s42, %s44
    %p48 = scmp.eq.s32.totalorder %s8, 0
    %p49 = por %p47, %p48
    %p50 = scmp.ne.s32.totalorder %s42, %s44
    %p51 = scmp.eq.s32.totalorder %s13, 1
    %p52 = por %p50, %p51
    %p53 = scmp.ne.s32.totalorder %s44, %s45
    %p54 = scmp.eq.s32.totalorder %s13, 0
    %p55 = por %p53, %p54
    %p56 = scmp.ne.s32.totalorder %s44, %s45
    %p57 = scmp.eq.s32.totalorder %s14, 1
    %p58 = por %p56, %p57
    %p60 = scmp.ne.s32.totalorder %s45, %s59
    %p61 = scmp.eq.s32.totalorder %s14, 0
    %p62 = por %p60, %p61
    %s63 = ssub.s32 %s8, %s15
    %p64 = scmp.eq.s32.totalorder %s63, 0
    %s66 = sadd.s32 %s65, 1
    %s67 = scalar_select %p64, %s65, %s66
    %p70 = pneg %p64
    %p71 = scmp.eq.s32.totalorder %s8, 1
    %p72 = por %p70, %p71
    %p73 = scmp.ne.s32.totalorder %s65, %s68
    %p74 = scmp.eq.s32.totalorder %s8, 0
    %p75 = por %p73, %p74
    %p76 = scmp.ne.s32.totalorder %s65, %s68
    %p77 = scmp.eq.s32.totalorder %s13, 1
    %p78 = por %p76, %p77
    %p79 = scmp.ne.s32.totalorder %s68, %s69
    %p80 = scmp.eq.s32.totalorder %s13, 0
    %p81 = por %p79, %p80
    %p82 = scmp.ne.s32.totalorder %s68, %s69
    %p83 = scmp.eq.s32.totalorder %s14, 1
    %p84 = por %p82, %p83
    %p86 = scmp.ne.s32.totalorder %s69, %s85
    %p87 = scmp.eq.s32.totalorder %s14, 0
    %p88 = por %p86, %p87
    %p89 = scmp.le.s32.totalorder 1, %s8
    %p90 = scmp.lt.s32.totalorder %s8, 3
    %p91 = pnand %p89, %p90
    %p92 = pneg %p91
    // Predicated region
    $region9: #{gcn_forward.6} parent=5 // pred_check
      _
    $region10: #{gcn_forward.6} parent=5 // pred_check_branch
      %94 = sbr.rel (%p91) target = $region12
    $region11: #{gcn_forward.6} parent=5 // pred_region
      %s95 = ssub.s32 %s8, 1
      // Predicated region
      $region13: #{gcn_forward.6} parent=11 // pred_check
        %p96 = pneg %p55
      $region14: #{gcn_forward.6} parent=11 // pred_check_branch
        %98 = sbr.rel (%p96) target = $region16
      $region15: #{gcn_forward.6} parent=11 // pred_region
        _
      $region16: #{gcn_forward.6} parent=11 // pred_fallthru
        _
    $region12: #{gcn_forward.6} parent=5 // pred_fallthru
      _
    %p99 = scmp.lt.s32.totalorder %s8, 2
    // Predicated region
    $region17: #{gcn_forward.6} parent=5 // pred_check
      %p100 = pneg %p99
    $region18: #{gcn_forward.6} parent=5 // pred_check_branch
      %102 = sbr.rel (%p100) target = $region20
    $region19: #{gcn_forward.6} parent=5 // pred_region
      // Predicated region
      $region21: #{gcn_forward.6} parent=19 // pred_check
        %p103 = pneg %p28
      $region22: #{gcn_forward.6} parent=19 // pred_check_branch
        %105 = sbr.rel (%p103) target = $region24
      $region23: #{gcn_forward.6} parent=19 // pred_region
        %s106 = smul.u32 2, %s8
        %p107 = scmp.lt.s32.totalorder %s106, 3
        %s108 = scalar_select %p107, %s106, 3
        %s109 = smul.addr %s108, 5
        %s110 = smul.addr %s109, 4
        %s111 = scalar_lea.vmem %s0, %s110
        %s112 = smul.u32 2, %s8
      $region24: #{gcn_forward.6} parent=19 // pred_fallthru
        _
    $region20: #{gcn_forward.6} parent=5 // pred_fallthru
      _
    %p113 = scmp.le.s32.totalorder 1, %s8
    %p114 = scmp.lt.s32.totalorder %s8, 3
    %p115 = pnand %p113, %p114
    %p116 = pneg %p115
    // Predicated region
    $region25: #{gcn_forward.6} parent=5 // pred_check
      _
    $region26: #{gcn_forward.6} parent=5 // pred_check_branch
      %118 = sbr.rel (%p115) target = $region28
    $region27: #{gcn_forward.6} parent=5 // pred_region
      %s119 = ssub.s32 %s8, 1
      %s120 = smul.u32 2, %s13
      %p121 = scmp.lt.s32.totalorder %s120, 3
      %s122 = scalar_select %p121, %s120, 3
      %s123 = smul.addr %s122, 5
      %s124 = smul.addr %s123, 4
      %s125 = scalar_lea.vmem %s0, %s124
      %p126 = pneg %p34
      %p127 = pneg %p31
      %p128 = pneg %p55
      %p129 = pneg %p52
      %p130 = pneg %p81
      %p131 = pneg %p78
      %s132 = smul.u32 2, %s13
      %p133 = scmp.lt.s32.totalorder %s132, 3
      %s134 = scalar_select %p133, %s132, 3
      %s135 = smul.addr %s134, 8
      %s136 = smul.addr %s135, 4
      %s137 = scalar_lea.vmem %s2, %s136
      %s138 = smul.u32 2, %s13
      %p139 = scmp.lt.s32.totalorder %s138, 3
      %s140 = scalar_select %p139, %s138, 3
      %s141 = smul.addr %s140, 5
      %s142 = smul.addr %s141, 4
      %s143 = scalar_lea.vmem %s0, %s142
      %s144 = smul.u32 2, %s13
      %s145 = smul.u32 2, %s13
      %p146 = scmp.lt.s32.totalorder %s145, 3
      %s147 = scalar_select %p146, %s145, 3
      %s148 = smul.addr %s147, 8
      %s149 = smul.addr %s148, 4
      %s150 = scalar_lea.vmem %s2, %s149
      %s151 = smul.u32 2, %s13
      %v152 = vld [vmem:[%s143] sm:$0xff]
      %v153 = vld [vmem:[%s143 + $0x8] sm:$0xff]
      %v154 = vld [vmem:[%s143 + $0x10] sm:$0xf]
      %v155 = vld [vmem:[%s143 + $0x14] sm:$0xff]
      %v156 = vld [vmem:[%s143 + $0x1c] sm:$0xff]
      %v157 = vld [vmem:[%s143 + $0x24] sm:$0xf]
      %v158 = vld [vmem:[%s1] sm:$0xff]
      %v159 = vld [vmem:[%s1 + $0x8] sm:$0xff]
      %v160 = vld [vmem:[%s1 + $0x10] sm:$0xff]
      %v161 = vld [vmem:[%s1 + $0x18] sm:$0xff]
      %v162 = vld [vmem:[%s1 + $0x20] sm:$0xff]
      %v163 = vld [vmem:[%s1 + $0x28] sm:$0xff]
      %v164 = vld [vmem:[%s1 + $0x30] sm:$0xff]
      %v165 = vld [vmem:[%s1 + $0x38] sm:$0xff]
      %v166 = vld [vmem:[%s1 + $0x40] sm:$0xff]
      %v167 = vld [vmem:[%s1 + $0x48] sm:$0xff]
      %v168 = vld [vmem:[%s1 + $0x50] sm:$0xff]
      %v169 = vld [vmem:[%s1 + $0x58] sm:$0xff]
      %v170 = vld [vmem:[%s1 + $0x60] sm:$0xff]
      %v171 = vld [vmem:[%s1 + $0x68] sm:$0xff]
      %v172 = vld [vmem:[%s1 + $0x70] sm:$0xff]
      %v173 = vld [vmem:[%s1 + $0x78] sm:$0xff]
      %v174 = vld [vmem:[%s1 + $0x80] sm:$0xff]
      %v175 = vld [vmem:[%s1 + $0x88] sm:$0xff]
      %v176 = vld [vmem:[%s1 + $0x90] sm:$0xff]
      %v177 = vld [vmem:[%s1 + $0x98] sm:$0xff]
      %v178 = vld [vmem:[%s1 + $0xa0] sm:$0xff]
      %v179 = vld [vmem:[%s1 + $0xa8] sm:$0xff]
      %v180 = vld [vmem:[%s1 + $0xb0] sm:$0xff]
      %v181 = vld [vmem:[%s1 + $0xb8] sm:$0xff]
      %v182 = vld [vmem:[%s1 + $0xc0] sm:$0xff]
      %v183 = vld [vmem:[%s1 + $0xc8] sm:$0xff]
      %v184 = vld [vmem:[%s1 + $0xd0] sm:$0xff]
      %v185 = vld [vmem:[%s1 + $0xd8] sm:$0xff]
      %v186 = vld [vmem:[%s1 + $0xe0] sm:$0xff]
      %v187 = vld [vmem:[%s1 + $0xe8] sm:$0xff]
      %v188 = vld [vmem:[%s1 + $0xf0] sm:$0xff]
      %v189 = vld [vmem:[%s1 + $0xf8] sm:$0xff]
      %v190 = vld [vmem:[%s1 + $0x100] sm:$0xff]
      %v191 = vld [vmem:[%s1 + $0x108] sm:$0xff]
      %v192 = vld [vmem:[%s1 + $0x110] sm:$0xff]
      %v193 = vld [vmem:[%s1 + $0x118] sm:$0xff]
      %v194 = vld [vmem:[%s1 + $0x120] sm:$0xff]
      %v195 = vld [vmem:[%s1 + $0x128] sm:$0xff]
      %v196 = vld [vmem:[%s1 + $0x130] sm:$0xff]
      %v197 = vld [vmem:[%s1 + $0x138] sm:$0xff]
      %v198 = vld [vmem:[%s1 + $0x140] sm:$0xff]
      %v199 = vld [vmem:[%s1 + $0x148] sm:$0xff]
      %v200 = vld [vmem:[%s1 + $0x150] sm:$0xff]
      %v201 = vld [vmem:[%s1 + $0x158] sm:$0xff]
      %v202 = vld [vmem:[%s1 + $0x160] sm:$0xff]
      %v203 = vld [vmem:[%s1 + $0x168] sm:$0xff]
      %v204 = vld [vmem:[%s1 + $0x170] sm:$0xff]
      %v205 = vld [vmem:[%s1 + $0x178] sm:$0xff]
      %v206 = vld [vmem:[%s1 + $0x180] sm:$0xff]
      %v207 = vld [vmem:[%s1 + $0x188] sm:$0xff]
      %v208 = vld [vmem:[%s1 + $0x190] sm:$0xff]
      %v209 = vld [vmem:[%s1 + $0x198] sm:$0xff]
      %v210 = vld [vmem:[%s1 + $0x1a0] sm:$0xff]
      %v211 = vld [vmem:[%s1 + $0x1a8] sm:$0xff]
      %v212 = vld [vmem:[%s1 + $0x1b0] sm:$0xff]
      %v213 = vld [vmem:[%s1 + $0x1b8] sm:$0xff]
      %v214 = vld [vmem:[%s1 + $0x1c0] sm:$0xff]
      %v215 = vld [vmem:[%s1 + $0x1c8] sm:$0xff]
      %v216 = vld [vmem:[%s1 + $0x1d0] sm:$0xff]
      %v217 = vld [vmem:[%s1 + $0x1d8] sm:$0xff]
      %v218 = vld [vmem:[%s1 + $0x1e0] sm:$0xff]
      %v219 = vld [vmem:[%s1 + $0x1e8] sm:$0xff]
      %v220 = vld [vmem:[%s1 + $0x1f0] sm:$0xff]
      %v221 = vld [vmem:[%s1 + $0x1f8] sm:$0xff]
      %v222 = vld [vmem:[%s1 + $0x200] sm:$0xff]
      %v223 = vld [vmem:[%s1 + $0x208] sm:$0xff]
      %v224 = vld [vmem:[%s1 + $0x210] sm:$0xff]
      %v225 = vld [vmem:[%s1 + $0x218] sm:$0xff]
      %v226 = vld [vmem:[%s1 + $0x220] sm:$0xff]
      %v227 = vld [vmem:[%s1 + $0x228] sm:$0xff]
      %v228 = vld [vmem:[%s1 + $0x230] sm:$0xff]
      %v229 = vld [vmem:[%s1 + $0x238] sm:$0xff]
      %v230 = vld [vmem:[%s1 + $0x240] sm:$0xff]
      %v231 = vld [vmem:[%s1 + $0x248] sm:$0xff]
      %v232 = vld [vmem:[%s1 + $0x250] sm:$0xff]
      %v233 = vld [vmem:[%s1 + $0x258] sm:$0xff]
      %v234 = vld [vmem:[%s1 + $0x260] sm:$0xff]
      %v235 = vld [vmem:[%s1 + $0x268] sm:$0xff]
      %v236 = vld [vmem:[%s1 + $0x270] sm:$0xff]
      %v237 = vld [vmem:[%s1 + $0x278] sm:$0xff]
      %v238 = vld [vmem:[%s1 + $0x280] sm:$0xff]
      %v239 = vld [vmem:[%s1 + $0x288] sm:$0xff]
      %v240 = vld [vmem:[%s1 + $0x290] sm:$0xff]
      %v241 = vld [vmem:[%s1 + $0x298] sm:$0xff]
      %v242 = vld [vmem:[%s1 + $0x2a0] sm:$0xff]
      %v243 = vld [vmem:[%s1 + $0x2a8] sm:$0xff]
      %v244 = vld [vmem:[%s1 + $0x2b0] sm:$0xff]
      %v245 = vld [vmem:[%s1 + $0x2b8] sm:$0xff]
      %v246 = vld [vmem:[%s1 + $0x2c0] sm:$0xff]
      %v247 = vld [vmem:[%s1 + $0x2c8] sm:$0xff]
      %v248 = vld [vmem:[%s1 + $0x2d0] sm:$0xff]
      %v249 = vld [vmem:[%s1 + $0x2d8] sm:$0xff]
      %v250 = vld [vmem:[%s1 + $0x2e0] sm:$0xff]
      %v251 = vld [vmem:[%s1 + $0x2e8] sm:$0xff]
      %v252 = vld [vmem:[%s1 + $0x2f0] sm:$0xff]
      %v253 = vld [vmem:[%s1 + $0x2f8] sm:$0xff]
      %v254 = vld [vmem:[%s1 + $0x300] sm:$0xff]
      %v255 = vld [vmem:[%s1 + $0x308] sm:$0xff]
      %v256 = vld [vmem:[%s1 + $0x310] sm:$0xff]
      %v257 = vld [vmem:[%s1 + $0x318] sm:$0xff]
      %v258 = vld [vmem:[%s1 + $0x320] sm:$0xff]
      %v259 = vld [vmem:[%s1 + $0x328] sm:$0xff]
      %v260 = vld [vmem:[%s1 + $0x330] sm:$0xff]
      %v261 = vld [vmem:[%s1 + $0x338] sm:$0xff]
      %v262 = vld [vmem:[%s1 + $0x340] sm:$0xff]
      %v263 = vld [vmem:[%s1 + $0x348] sm:$0xff]
      %v264 = vld [vmem:[%s1 + $0x350] sm:$0xff]
      %v265 = vld [vmem:[%s1 + $0x358] sm:$0xff]
      %v266 = vld [vmem:[%s1 + $0x360] sm:$0xff]
      %v267 = vld [vmem:[%s1 + $0x368] sm:$0xff]
      %v268 = vld [vmem:[%s1 + $0x370] sm:$0xff]
      %v269 = vld [vmem:[%s1 + $0x378] sm:$0xff]
      %v270 = vld [vmem:[%s1 + $0x380] sm:$0xff]
      %v271 = vld [vmem:[%s1 + $0x388] sm:$0xff]
      %v272 = vld [vmem:[%s1 + $0x390] sm:$0xff]
      %v273 = vld [vmem:[%s1 + $0x398] sm:$0xff]
      %v274 = vld [vmem:[%s1 + $0x3a0] sm:$0xff]
      %v275 = vld [vmem:[%s1 + $0x3a8] sm:$0xff]
      %v276 = vld [vmem:[%s1 + $0x3b0] sm:$0xff]
      %v277 = vld [vmem:[%s1 + $0x3b8] sm:$0xff]
      %v278 = vld [vmem:[%s1 + $0x3c0] sm:$0xff]
      %v279 = vld [vmem:[%s1 + $0x3c8] sm:$0xff]
      %v280 = vld [vmem:[%s1 + $0x3d0] sm:$0xff]
      %v281 = vld [vmem:[%s1 + $0x3d8] sm:$0xff]
      %v282 = vld [vmem:[%s1 + $0x3e0] sm:$0xff]
      %v283 = vld [vmem:[%s1 + $0x3e8] sm:$0xff]
      %v284 = vld [vmem:[%s1 + $0x3f0] sm:$0xff]
      %v285 = vld [vmem:[%s1 + $0x3f8] sm:$0xff]
      %v286 = vld [vmem:[%s1 + $0x400] sm:$0xff]
      %v287 = vld [vmem:[%s1 + $0x408] sm:$0xff]
      %v288 = vld [vmem:[%s1 + $0x410] sm:$0xff]
      %v289 = vld [vmem:[%s1 + $0x418] sm:$0xff]
      %v290 = vld [vmem:[%s1 + $0x420] sm:$0xff]
      %v291 = vld [vmem:[%s1 + $0x428] sm:$0xff]
      %v292 = vld [vmem:[%s1 + $0x430] sm:$0xff]
      %v293 = vld [vmem:[%s1 + $0x438] sm:$0xff]
      %v294 = vld [vmem:[%s1 + $0x440] sm:$0xff]
      %v295 = vld [vmem:[%s1 + $0x448] sm:$0xff]
      %v296 = vld [vmem:[%s1 + $0x450] sm:$0xff]
      %v297 = vld [vmem:[%s1 + $0x458] sm:$0xff]
      %v298 = vld [vmem:[%s1 + $0x460] sm:$0xff]
      %v299 = vld [vmem:[%s1 + $0x468] sm:$0xff]
      %v300 = vld [vmem:[%s1 + $0x470] sm:$0xff]
      %v301 = vld [vmem:[%s1 + $0x478] sm:$0xff]
      %v302 = vld [vmem:[%s1 + $0x480] sm:$0xff]
      %v303 = vld [vmem:[%s1 + $0x488] sm:$0xff]
      %v304 = vld [vmem:[%s1 + $0x490] sm:$0xff]
      %v305 = vld [vmem:[%s1 + $0x498] sm:$0xff]
      %v306 = vld [vmem:[%s1 + $0x4a0] sm:$0xff]
      %v307 = vld [vmem:[%s1 + $0x4a8] sm:$0xff]
      %v308 = vld [vmem:[%s1 + $0x4b0] sm:$0xff]
      %v309 = vld [vmem:[%s1 + $0x4b8] sm:$0xff]
      %v310 = vld [vmem:[%s1 + $0x4c0] sm:$0xff]
      %v311 = vld [vmem:[%s1 + $0x4c8] sm:$0xff]
      %v312 = vld [vmem:[%s1 + $0x4d0] sm:$0xff]
      %v313 = vld [vmem:[%s1 + $0x4d8] sm:$0xff]
      %v314 = vld [vmem:[%s1 + $0x4e0] sm:$0xff]
      %v315 = vld [vmem:[%s1 + $0x4e8] sm:$0xff]
      %v316 = vld [vmem:[%s1 + $0x4f0] sm:$0xff]
      %v317 = vld [vmem:[%s1 + $0x4f8] sm:$0xff]
      %v318 = vld [vmem:[%s1 + $0x500] sm:$0xff]
      %v319 = vld [vmem:[%s1 + $0x508] sm:$0xff]
      %v320 = vld [vmem:[%s1 + $0x510] sm:$0xff]
      %v321 = vld [vmem:[%s1 + $0x518] sm:$0xff]
      %v322 = vld [vmem:[%s1 + $0x520] sm:$0xff]
      %v323 = vld [vmem:[%s1 + $0x528] sm:$0xff]
      %v324 = vld [vmem:[%s1 + $0x530] sm:$0xff]
      %v325 = vld [vmem:[%s1 + $0x538] sm:$0xff]
      %v326 = vld [vmem:[%s1 + $0x540] sm:$0xff]
      %v327 = vld [vmem:[%s1 + $0x548] sm:$0xff]
      %v328 = vld [vmem:[%s1 + $0x550] sm:$0xff]
      %v329 = vld [vmem:[%s1 + $0x558] sm:$0xff]
      %v330 = vld [vmem:[%s1 + $0x560] sm:$0xff]
      %v331 = vld [vmem:[%s1 + $0x568] sm:$0xff]
      %v332 = vld [vmem:[%s1 + $0x570] sm:$0xff]
      %v333 = vld [vmem:[%s1 + $0x578] sm:$0xff]
      %v334 = vld [vmem:[%s1 + $0x580] sm:$0xff]
      %v335 = vld [vmem:[%s1 + $0x588] sm:$0xff]
      %v336 = vld [vmem:[%s1 + $0x590] sm:$0xff]
      %v337 = vld [vmem:[%s1 + $0x598] sm:$0xff]
      %v338 = vld [vmem:[%s1 + $0x5a0] sm:$0xff]
      %v339 = vld [vmem:[%s1 + $0x5a8] sm:$0xff]
      %v340 = vld [vmem:[%s1 + $0x5b0] sm:$0xff]
      %v341 = vld [vmem:[%s1 + $0x5b8] sm:$0xff]
      %v342 = vld [vmem:[%s1 + $0x5c0] sm:$0xff]
      %v343 = vld [vmem:[%s1 + $0x5c8] sm:$0xff]
      %v344 = vld [vmem:[%s1 + $0x5d0] sm:$0xff]
      %v345 = vld [vmem:[%s1 + $0x5d8] sm:$0xff]
      %v346 = vld [vmem:[%s1 + $0x5e0] sm:$0xff]
      %v347 = vld [vmem:[%s1 + $0x5e8] sm:$0xff]
      %v348 = vld [vmem:[%s1 + $0x5f0] sm:$0xff]
      %v349 = vld [vmem:[%s1 + $0x5f8] sm:$0xff]
      %v350 = vld [vmem:[%s1 + $0x600] sm:$0xff]
      %v351 = vld [vmem:[%s1 + $0x608] sm:$0xff]
      %v352 = vld [vmem:[%s1 + $0x610] sm:$0xff]
      %v353 = vld [vmem:[%s1 + $0x618] sm:$0xff]
      %v354 = vld [vmem:[%s1 + $0x620] sm:$0xff]
      %v355 = vld [vmem:[%s1 + $0x628] sm:$0xff]
      %v356 = vld [vmem:[%s1 + $0x630] sm:$0xff]
      %v357 = vld [vmem:[%s1 + $0x638] sm:$0xff]
      %v358 = vld [vmem:[%s1 + $0x640] sm:$0xff]
      %v359 = vld [vmem:[%s1 + $0x648] sm:$0xff]
      %v360 = vld [vmem:[%s1 + $0x650] sm:$0xff]
      %v361 = vld [vmem:[%s1 + $0x658] sm:$0xff]
      %v362 = vld [vmem:[%s1 + $0x660] sm:$0xff]
      %v363 = vld [vmem:[%s1 + $0x668] sm:$0xff]
      %v364 = vld [vmem:[%s1 + $0x670] sm:$0xff]
      %v365 = vld [vmem:[%s1 + $0x678] sm:$0xff]
      %v366 = vld [vmem:[%s1 + $0x680] sm:$0xff]
      %v367 = vld [vmem:[%s1 + $0x688] sm:$0xff]
      %v368 = vld [vmem:[%s1 + $0x690] sm:$0xff]
      %v369 = vld [vmem:[%s1 + $0x698] sm:$0xff]
      %v370 = vld [vmem:[%s1 + $0x6a0] sm:$0xff]
      %v371 = vld [vmem:[%s1 + $0x6a8] sm:$0xff]
      %v372 = vld [vmem:[%s1 + $0x6b0] sm:$0xff]
      %v373 = vld [vmem:[%s1 + $0x6b8] sm:$0xff]
      %v374 = vld [vmem:[%s1 + $0x6c0] sm:$0xff]
      %v375 = vld [vmem:[%s1 + $0x6c8] sm:$0xff]
      %v376 = vld [vmem:[%s1 + $0x6d0] sm:$0xff]
      %v377 = vld [vmem:[%s1 + $0x6d8] sm:$0xff]
      %v378 = vld [vmem:[%s1 + $0x6e0] sm:$0xff]
      %v379 = vld [vmem:[%s1 + $0x6e8] sm:$0xff]
      %v380 = vld [vmem:[%s1 + $0x6f0] sm:$0xff]
      %v381 = vld [vmem:[%s1 + $0x6f8] sm:$0xff]
      %v382 = vld [vmem:[%s1 + $0x700] sm:$0xff]
      %v383 = vld [vmem:[%s1 + $0x708] sm:$0xff]
      %v384 = vld [vmem:[%s1 + $0x710] sm:$0xff]
      %v385 = vld [vmem:[%s1 + $0x718] sm:$0xff]
      %v386 = vld [vmem:[%s1 + $0x720] sm:$0xff]
      %v387 = vld [vmem:[%s1 + $0x728] sm:$0xff]
      %v388 = vld [vmem:[%s1 + $0x730] sm:$0xff]
      %v389 = vld [vmem:[%s1 + $0x738] sm:$0xff]
      %v390 = vld [vmem:[%s1 + $0x740] sm:$0xff]
      %v391 = vld [vmem:[%s1 + $0x748] sm:$0xff]
      %v392 = vld [vmem:[%s1 + $0x750] sm:$0xff]
      %v393 = vld [vmem:[%s1 + $0x758] sm:$0xff]
      %v394 = vld [vmem:[%s1 + $0x760] sm:$0xff]
      %v395 = vld [vmem:[%s1 + $0x768] sm:$0xff]
      %v396 = vld [vmem:[%s1 + $0x770] sm:$0xff]
      %v397 = vld [vmem:[%s1 + $0x778] sm:$0xff]
      %v398 = vld [vmem:[%s1 + $0x780] sm:$0xff]
      %v399 = vld [vmem:[%s1 + $0x788] sm:$0xff]
      %v400 = vld [vmem:[%s1 + $0x790] sm:$0xff]
      %v401 = vld [vmem:[%s1 + $0x798] sm:$0xff]
      %v402 = vld [vmem:[%s1 + $0x7a0] sm:$0xff]
      %v403 = vld [vmem:[%s1 + $0x7a8] sm:$0xff]
      %v404 = vld [vmem:[%s1 + $0x7b0] sm:$0xff]
      %v405 = vld [vmem:[%s1 + $0x7b8] sm:$0xff]
      %v406 = vld [vmem:[%s1 + $0x7c0] sm:$0xff]
      %v407 = vld [vmem:[%s1 + $0x7c8] sm:$0xff]
      %v408 = vld [vmem:[%s1 + $0x7d0] sm:$0xff]
      %v409 = vld [vmem:[%s1 + $0x7d8] sm:$0xff]
      %v410 = vld [vmem:[%s1 + $0x7e0] sm:$0xff]
      %v411 = vld [vmem:[%s1 + $0x7e8] sm:$0xff]
      %v412 = vld [vmem:[%s1 + $0x7f0] sm:$0xff]
      %v413 = vld [vmem:[%s1 + $0x7f8] sm:$0xff]
      %v414 = vld [vmem:[%s1 + $0x800] sm:$0xff]
      %v415 = vld [vmem:[%s1 + $0x808] sm:$0xff]
      %v416 = vld [vmem:[%s1 + $0x810] sm:$0xff]
      %v417 = vld [vmem:[%s1 + $0x818] sm:$0xff]
      %v418 = vld [vmem:[%s1 + $0x820] sm:$0xff]
      %v419 = vld [vmem:[%s1 + $0x828] sm:$0xff]
      %v420 = vld [vmem:[%s1 + $0x830] sm:$0xff]
      %v421 = vld [vmem:[%s1 + $0x838] sm:$0xff]
      %v422 = vld [vmem:[%s1 + $0x840] sm:$0xff]
      %v423 = vld [vmem:[%s1 + $0x848] sm:$0xff]
      %v424 = vld [vmem:[%s1 + $0x850] sm:$0xff]
      %v425 = vld [vmem:[%s1 + $0x858] sm:$0xff]
      %v426 = vld [vmem:[%s1 + $0x860] sm:$0xff]
      %v427 = vld [vmem:[%s1 + $0x868] sm:$0xff]
      %v428 = vld [vmem:[%s1 + $0x870] sm:$0xff]
      %v429 = vld [vmem:[%s1 + $0x878] sm:$0xff]
      %v430 = vld [vmem:[%s1 + $0x880] sm:$0xff]
      %v431 = vld [vmem:[%s1 + $0x888] sm:$0xff]
      %v432 = vld [vmem:[%s1 + $0x890] sm:$0xff]
      %v433 = vld [vmem:[%s1 + $0x898] sm:$0xff]
      %v434 = vld [vmem:[%s1 + $0x8a0] sm:$0xff]
      %v435 = vld [vmem:[%s1 + $0x8a8] sm:$0xff]
      %v436 = vld [vmem:[%s1 + $0x8b0] sm:$0xff]
      %v437 = vld [vmem:[%s1 + $0x8b8] sm:$0xff]
      %v438 = vld [vmem:[%s1 + $0x8c0] sm:$0xff]
      %v439 = vld [vmem:[%s1 + $0x8c8] sm:$0xff]
      %v440 = vld [vmem:[%s1 + $0x8d0] sm:$0xff]
      %v441 = vld [vmem:[%s1 + $0x8d8] sm:$0xff]
      %v442 = vld [vmem:[%s1 + $0x8e0] sm:$0xff]
      %v443 = vld [vmem:[%s1 + $0x8e8] sm:$0xff]
      %v444 = vld [vmem:[%s1 + $0x8f0] sm:$0xff]
      %v445 = vld [vmem:[%s1 + $0x8f8] sm:$0xff]
      %v446 = vld [vmem:[%s1 + $0x900] sm:$0xff]
      %v447 = vld [vmem:[%s1 + $0x908] sm:$0xff]
      %v448 = vld [vmem:[%s1 + $0x910] sm:$0xff]
      %v449 = vld [vmem:[%s1 + $0x918] sm:$0xff]
      %v450 = vld [vmem:[%s1 + $0x920] sm:$0xff]
      %v451 = vld [vmem:[%s1 + $0x928] sm:$0xff]
      %v452 = vld [vmem:[%s1 + $0x930] sm:$0xff]
      %v453 = vld [vmem:[%s1 + $0x938] sm:$0xff]
      %v454 = vld [vmem:[%s1 + $0x940] sm:$0xff]
      %v455 = vld [vmem:[%s1 + $0x948] sm:$0xff]
      %v456 = vld [vmem:[%s1 + $0x950] sm:$0xff]
      %v457 = vld [vmem:[%s1 + $0x958] sm:$0xff]
      %v458 = vld [vmem:[%s1 + $0x960] sm:$0xff]
      %v459 = vld [vmem:[%s1 + $0x968] sm:$0xff]
      %v460 = vld [vmem:[%s1 + $0x970] sm:$0xff]
      %v461 = vld [vmem:[%s1 + $0x978] sm:$0xff]
      %v462 = vld [vmem:[%s1 + $0x980] sm:$0xff]
      %v463 = vld [vmem:[%s1 + $0x988] sm:$0xff]
      %v464 = vld [vmem:[%s1 + $0x990] sm:$0xff]
      %v465 = vld [vmem:[%s1 + $0x998] sm:$0xff]
      %v466 = vld [vmem:[%s1 + $0x9a0] sm:$0xff]
      %v467 = vld [vmem:[%s1 + $0x9a8] sm:$0xff]
      %v468 = vld [vmem:[%s1 + $0x9b0] sm:$0xff]
      %v469 = vld [vmem:[%s1 + $0x9b8] sm:$0xff]
      %v470 = vld [vmem:[%s1 + $0x9c0] sm:$0xff]
      %v471 = vld [vmem:[%s1 + $0x9c8] sm:$0xff]
      %v472 = vld [vmem:[%s1 + $0x9d0] sm:$0xff]
      %v473 = vld [vmem:[%s1 + $0x9d8] sm:$0xff]
      %v474 = vld [vmem:[%s1 + $0x9e0] sm:$0xff]
      %v475 = vld [vmem:[%s1 + $0x9e8] sm:$0xff]
      %v476 = vld [vmem:[%s1 + $0x9f0] sm:$0xff]
      %v477 = vld [vmem:[%s1 + $0x9f8] sm:$0xff]
      %v484 = vunpack.c.l.b16 %v152
      %v485 = vunpack.c.h.b16 %v152
      %v486 = vunpack.c.l.b16 %v153
      %v487 = vunpack.c.h.b16 %v153
      %v488 = vunpack.c.l.b16 %v154
      %v489 = vunpack.c.l.b16 %v155
      %v490 = vunpack.c.h.b16 %v155
      %v491 = vunpack.c.l.b16 %v156
      %v492 = vunpack.c.h.b16 %v156
      %v493 = vunpack.c.l.b16 %v157
      %v494 = vpack.c.b16 %v489, %v484
      %v495 = vpack.c.b16 %v490, %v485
      %v496 = vpack.c.b16 %v491, %v486
      %v497 = vpack.c.b16 %v492, %v487
      %v498 = vpack.c.b16 %v493, %v488
      %v824 = vunpack.c.l.b16 %v158
      %v825 = vunpack.c.h.b16 %v158
      %v826 = vunpack.c.l.b16 %v159
      %v827 = vunpack.c.h.b16 %v159
      %v828 = vunpack.c.l.b16 %v160
      %v829 = vunpack.c.h.b16 %v160
      %v830 = vunpack.c.l.b16 %v161
      %v831 = vunpack.c.h.b16 %v161
      %v832 = vunpack.c.l.b16 %v162
      %v833 = vunpack.c.h.b16 %v162
      %v834 = vunpack.c.l.b16 %v163
      %v835 = vunpack.c.h.b16 %v163
      %v836 = vunpack.c.l.b16 %v164
      %v837 = vunpack.c.h.b16 %v164
      %v838 = vunpack.c.l.b16 %v165
      %v839 = vunpack.c.h.b16 %v165
      %v840 = vunpack.c.l.b16 %v166
      %v841 = vunpack.c.h.b16 %v166
      %v842 = vunpack.c.l.b16 %v167
      %v843 = vunpack.c.h.b16 %v167
      %v844 = vunpack.c.l.b16 %v168
      %v845 = vunpack.c.h.b16 %v168
      %v846 = vunpack.c.l.b16 %v169
      %v847 = vunpack.c.h.b16 %v169
      %v848 = vunpack.c.l.b16 %v170
      %v849 = vunpack.c.h.b16 %v170
      %v850 = vunpack.c.l.b16 %v171
      %v851 = vunpack.c.h.b16 %v171
      %v852 = vunpack.c.l.b16 %v172
      %v853 = vunpack.c.h.b16 %v172
      %v854 = vunpack.c.l.b16 %v173
      %v855 = vunpack.c.h.b16 %v173
      %v856 = vunpack.c.l.b16 %v174
      %v857 = vunpack.c.h.b16 %v174
      %v858 = vunpack.c.l.b16 %v175
      %v859 = vunpack.c.h.b16 %v175
      %v860 = vunpack.c.l.b16 %v176
      %v861 = vunpack.c.h.b16 %v176
      %v862 = vunpack.c.l.b16 %v177
      %v863 = vunpack.c.h.b16 %v177
      %v864 = vunpack.c.l.b16 %v178
      %v865 = vunpack.c.h.b16 %v178
      %v866 = vunpack.c.l.b16 %v179
      %v867 = vunpack.c.h.b16 %v179
      %v868 = vunpack.c.l.b16 %v180
      %v869 = vunpack.c.h.b16 %v180
      %v870 = vunpack.c.l.b16 %v181
      %v871 = vunpack.c.h.b16 %v181
      %v872 = vunpack.c.l.b16 %v182
      %v873 = vunpack.c.h.b16 %v182
      %v874 = vunpack.c.l.b16 %v183
      %v875 = vunpack.c.h.b16 %v183
      %v876 = vunpack.c.l.b16 %v184
      %v877 = vunpack.c.h.b16 %v184
      %v878 = vunpack.c.l.b16 %v185
      %v879 = vunpack.c.h.b16 %v185
      %v880 = vunpack.c.l.b16 %v186
      %v881 = vunpack.c.h.b16 %v186
      %v882 = vunpack.c.l.b16 %v187
      %v883 = vunpack.c.h.b16 %v187
      %v884 = vunpack.c.l.b16 %v188
      %v885 = vunpack.c.h.b16 %v188
      %v886 = vunpack.c.l.b16 %v189
      %v887 = vunpack.c.h.b16 %v189
      %v888 = vunpack.c.l.b16 %v190
      %v889 = vunpack.c.h.b16 %v190
      %v890 = vunpack.c.l.b16 %v191
      %v891 = vunpack.c.h.b16 %v191
      %v892 = vunpack.c.l.b16 %v192
      %v893 = vunpack.c.h.b16 %v192
      %v894 = vunpack.c.l.b16 %v193
      %v895 = vunpack.c.h.b16 %v193
      %v896 = vunpack.c.l.b16 %v194
      %v897 = vunpack.c.h.b16 %v194
      %v898 = vunpack.c.l.b16 %v195
      %v899 = vunpack.c.h.b16 %v195
      %v900 = vunpack.c.l.b16 %v196
      %v901 = vunpack.c.h.b16 %v196
      %v902 = vunpack.c.l.b16 %v197
      %v903 = vunpack.c.h.b16 %v197
      %v904 = vunpack.c.l.b16 %v198
      %v905 = vunpack.c.h.b16 %v198
      %v906 = vunpack.c.l.b16 %v199
      %v907 = vunpack.c.h.b16 %v199
      %v908 = vunpack.c.l.b16 %v200
      %v909 = vunpack.c.h.b16 %v200
      %v910 = vunpack.c.l.b16 %v201
      %v911 = vunpack.c.h.b16 %v201
      %v912 = vunpack.c.l.b16 %v202
      %v913 = vunpack.c.h.b16 %v202
      %v914 = vunpack.c.l.b16 %v203
      %v915 = vunpack.c.h.b16 %v203
      %v916 = vunpack.c.l.b16 %v204
      %v917 = vunpack.c.h.b16 %v204
      %v918 = vunpack.c.l.b16 %v205
      %v919 = vunpack.c.h.b16 %v205
      %v920 = vunpack.c.l.b16 %v206
      %v921 = vunpack.c.h.b16 %v206
      %v922 = vunpack.c.l.b16 %v207
      %v923 = vunpack.c.h.b16 %v207
      %v924 = vunpack.c.l.b16 %v208
      %v925 = vunpack.c.h.b16 %v208
      %v926 = vunpack.c.l.b16 %v209
      %v927 = vunpack.c.h.b16 %v209
      %v928 = vunpack.c.l.b16 %v210
      %v929 = vunpack.c.h.b16 %v210
      %v930 = vunpack.c.l.b16 %v211
      %v931 = vunpack.c.h.b16 %v211
      %v932 = vunpack.c.l.b16 %v212
      %v933 = vunpack.c.h.b16 %v212
      %v934 = vunpack.c.l.b16 %v213
      %v935 = vunpack.c.h.b16 %v213
      %v936 = vunpack.c.l.b16 %v214
      %v937 = vunpack.c.h.b16 %v214
      %v938 = vunpack.c.l.b16 %v215
      %v939 = vunpack.c.h.b16 %v215
      %v940 = vunpack.c.l.b16 %v216
      %v941 = vunpack.c.h.b16 %v216
      %v942 = vunpack.c.l.b16 %v217
      %v943 = vunpack.c.h.b16 %v217
      %v944 = vunpack.c.l.b16 %v218
      %v945 = vunpack.c.h.b16 %v218
      %v946 = vunpack.c.l.b16 %v219
      %v947 = vunpack.c.h.b16 %v219
      %v948 = vunpack.c.l.b16 %v220
      %v949 = vunpack.c.h.b16 %v220
      %v950 = vunpack.c.l.b16 %v221
      %v951 = vunpack.c.h.b16 %v221
      %v952 = vunpack.c.l.b16 %v222
      %v953 = vunpack.c.h.b16 %v222
      %v954 = vunpack.c.l.b16 %v223
      %v955 = vunpack.c.h.b16 %v223
      %v956 = vunpack.c.l.b16 %v224
      %v957 = vunpack.c.h.b16 %v224
      %v958 = vunpack.c.l.b16 %v225
      %v959 = vunpack.c.h.b16 %v225
      %v960 = vunpack.c.l.b16 %v226
      %v961 = vunpack.c.h.b16 %v226
      %v962 = vunpack.c.l.b16 %v227
      %v963 = vunpack.c.h.b16 %v227
      %v964 = vunpack.c.l.b16 %v228
      %v965 = vunpack.c.h.b16 %v228
      %v966 = vunpack.c.l.b16 %v229
      %v967 = vunpack.c.h.b16 %v229
      %v968 = vunpack.c.l.b16 %v230
      %v969 = vunpack.c.h.b16 %v230
      %v970 = vunpack.c.l.b16 %v231
      %v971 = vunpack.c.h.b16 %v231
      %v972 = vunpack.c.l.b16 %v232
      %v973 = vunpack.c.h.b16 %v232
      %v974 = vunpack.c.l.b16 %v233
      %v975 = vunpack.c.h.b16 %v233
      %v976 = vunpack.c.l.b16 %v234
      %v977 = vunpack.c.h.b16 %v234
      %v978 = vunpack.c.l.b16 %v235
      %v979 = vunpack.c.h.b16 %v235
      %v980 = vunpack.c.l.b16 %v236
      %v981 = vunpack.c.h.b16 %v236
      %v982 = vunpack.c.l.b16 %v237
      %v983 = vunpack.c.h.b16 %v237
      %v984 = vunpack.c.l.b16 %v238
      %v985 = vunpack.c.h.b16 %v238
      %v986 = vunpack.c.l.b16 %v239
      %v987 = vunpack.c.h.b16 %v239
      %v988 = vunpack.c.l.b16 %v240
      %v989 = vunpack.c.h.b16 %v240
      %v990 = vunpack.c.l.b16 %v241
      %v991 = vunpack.c.h.b16 %v241
      %v992 = vunpack.c.l.b16 %v242
      %v993 = vunpack.c.h.b16 %v242
      %v994 = vunpack.c.l.b16 %v243
      %v995 = vunpack.c.h.b16 %v243
      %v996 = vunpack.c.l.b16 %v244
      %v997 = vunpack.c.h.b16 %v244
      %v998 = vunpack.c.l.b16 %v245
      %v999 = vunpack.c.h.b16 %v245
      %v1000 = vunpack.c.l.b16 %v246
      %v1001 = vunpack.c.h.b16 %v246
      %v1002 = vunpack.c.l.b16 %v247
      %v1003 = vunpack.c.h.b16 %v247
      %v1004 = vunpack.c.l.b16 %v248
      %v1005 = vunpack.c.h.b16 %v248
      %v1006 = vunpack.c.l.b16 %v249
      %v1007 = vunpack.c.h.b16 %v249
      %v1008 = vunpack.c.l.b16 %v250
      %v1009 = vunpack.c.h.b16 %v250
      %v1010 = vunpack.c.l.b16 %v251
      %v1011 = vunpack.c.h.b16 %v251
      %v1012 = vunpack.c.l.b16 %v252
      %v1013 = vunpack.c.h.b16 %v252
      %v1014 = vunpack.c.l.b16 %v253
      %v1015 = vunpack.c.h.b16 %v253
      %v1016 = vunpack.c.l.b16 %v254
      %v1017 = vunpack.c.h.b16 %v254
      %v1018 = vunpack.c.l.b16 %v255
      %v1019 = vunpack.c.h.b16 %v255
      %v1020 = vunpack.c.l.b16 %v256
      %v1021 = vunpack.c.h.b16 %v256
      %v1022 = vunpack.c.l.b16 %v257
      %v1023 = vunpack.c.h.b16 %v257
      %v1024 = vunpack.c.l.b16 %v258
      %v1025 = vunpack.c.h.b16 %v258
      %v1026 = vunpack.c.l.b16 %v259
      %v1027 = vunpack.c.h.b16 %v259
      %v1028 = vunpack.c.l.b16 %v260
      %v1029 = vunpack.c.h.b16 %v260
      %v1030 = vunpack.c.l.b16 %v261
      %v1031 = vunpack.c.h.b16 %v261
      %v1032 = vunpack.c.l.b16 %v262
      %v1033 = vunpack.c.h.b16 %v262
      %v1034 = vunpack.c.l.b16 %v263
      %v1035 = vunpack.c.h.b16 %v263
      %v1036 = vunpack.c.l.b16 %v264
      %v1037 = vunpack.c.h.b16 %v264
      %v1038 = vunpack.c.l.b16 %v265
      %v1039 = vunpack.c.h.b16 %v265
      %v1040 = vunpack.c.l.b16 %v266
      %v1041 = vunpack.c.h.b16 %v266
      %v1042 = vunpack.c.l.b16 %v267
      %v1043 = vunpack.c.h.b16 %v267
      %v1044 = vunpack.c.l.b16 %v268
      %v1045 = vunpack.c.h.b16 %v268
      %v1046 = vunpack.c.l.b16 %v269
      %v1047 = vunpack.c.h.b16 %v269
      %v1048 = vunpack.c.l.b16 %v270
      %v1049 = vunpack.c.h.b16 %v270
      %v1050 = vunpack.c.l.b16 %v271
      %v1051 = vunpack.c.h.b16 %v271
      %v1052 = vunpack.c.l.b16 %v272
      %v1053 = vunpack.c.h.b16 %v272
      %v1054 = vunpack.c.l.b16 %v273
      %v1055 = vunpack.c.h.b16 %v273
      %v1056 = vunpack.c.l.b16 %v274
      %v1057 = vunpack.c.h.b16 %v274
      %v1058 = vunpack.c.l.b16 %v275
      %v1059 = vunpack.c.h.b16 %v275
      %v1060 = vunpack.c.l.b16 %v276
      %v1061 = vunpack.c.h.b16 %v276
      %v1062 = vunpack.c.l.b16 %v277
      %v1063 = vunpack.c.h.b16 %v277
      %v1064 = vunpack.c.l.b16 %v278
      %v1065 = vunpack.c.h.b16 %v278
      %v1066 = vunpack.c.l.b16 %v279
      %v1067 = vunpack.c.h.b16 %v279
      %v1068 = vunpack.c.l.b16 %v280
      %v1069 = vunpack.c.h.b16 %v280
      %v1070 = vunpack.c.l.b16 %v281
      %v1071 = vunpack.c.h.b16 %v281
      %v1072 = vunpack.c.l.b16 %v282
      %v1073 = vunpack.c.h.b16 %v282
      %v1074 = vunpack.c.l.b16 %v283
      %v1075 = vunpack.c.h.b16 %v283
      %v1076 = vunpack.c.l.b16 %v284
      %v1077 = vunpack.c.h.b16 %v284
      %v1078 = vunpack.c.l.b16 %v285
      %v1079 = vunpack.c.h.b16 %v285
      %v1080 = vunpack.c.l.b16 %v286
      %v1081 = vunpack.c.h.b16 %v286
      %v1082 = vunpack.c.l.b16 %v287
      %v1083 = vunpack.c.h.b16 %v287
      %v1084 = vunpack.c.l.b16 %v288
      %v1085 = vunpack.c.h.b16 %v288
      %v1086 = vunpack.c.l.b16 %v289
      %v1087 = vunpack.c.h.b16 %v289
      %v1088 = vunpack.c.l.b16 %v290
      %v1089 = vunpack.c.h.b16 %v290
      %v1090 = vunpack.c.l.b16 %v291
      %v1091 = vunpack.c.h.b16 %v291
      %v1092 = vunpack.c.l.b16 %v292
      %v1093 = vunpack.c.h.b16 %v292
      %v1094 = vunpack.c.l.b16 %v293
      %v1095 = vunpack.c.h.b16 %v293
      %v1096 = vunpack.c.l.b16 %v294
      %v1097 = vunpack.c.h.b16 %v294
      %v1098 = vunpack.c.l.b16 %v295
      %v1099 = vunpack.c.h.b16 %v295
      %v1100 = vunpack.c.l.b16 %v296
      %v1101 = vunpack.c.h.b16 %v296
      %v1102 = vunpack.c.l.b16 %v297
      %v1103 = vunpack.c.h.b16 %v297
      %v1104 = vunpack.c.l.b16 %v298
      %v1105 = vunpack.c.h.b16 %v298
      %v1106 = vunpack.c.l.b16 %v299
      %v1107 = vunpack.c.h.b16 %v299
      %v1108 = vunpack.c.l.b16 %v300
      %v1109 = vunpack.c.h.b16 %v300
      %v1110 = vunpack.c.l.b16 %v301
      %v1111 = vunpack.c.h.b16 %v301
      %v1112 = vunpack.c.l.b16 %v302
      %v1113 = vunpack.c.h.b16 %v302
      %v1114 = vunpack.c.l.b16 %v303
      %v1115 = vunpack.c.h.b16 %v303
      %v1116 = vunpack.c.l.b16 %v304
      %v1117 = vunpack.c.h.b16 %v304
      %v1118 = vunpack.c.l.b16 %v305
      %v1119 = vunpack.c.h.b16 %v305
      %v1120 = vunpack.c.l.b16 %v306
      %v1121 = vunpack.c.h.b16 %v306
      %v1122 = vunpack.c.l.b16 %v307
      %v1123 = vunpack.c.h.b16 %v307
      %v1124 = vunpack.c.l.b16 %v308
      %v1125 = vunpack.c.h.b16 %v308
      %v1126 = vunpack.c.l.b16 %v309
      %v1127 = vunpack.c.h.b16 %v309
      %v1128 = vunpack.c.l.b16 %v310
      %v1129 = vunpack.c.h.b16 %v310
      %v1130 = vunpack.c.l.b16 %v311
      %v1131 = vunpack.c.h.b16 %v311
      %v1132 = vunpack.c.l.b16 %v312
      %v1133 = vunpack.c.h.b16 %v312
      %v1134 = vunpack.c.l.b16 %v313
      %v1135 = vunpack.c.h.b16 %v313
      %v1136 = vunpack.c.l.b16 %v314
      %v1137 = vunpack.c.h.b16 %v314
      %v1138 = vunpack.c.l.b16 %v315
      %v1139 = vunpack.c.h.b16 %v315
      %v1140 = vunpack.c.l.b16 %v316
      %v1141 = vunpack.c.h.b16 %v316
      %v1142 = vunpack.c.l.b16 %v317
      %v1143 = vunpack.c.h.b16 %v317
      %v1144 = vunpack.c.l.b16 %v318
      %v1145 = vunpack.c.h.b16 %v318
      %v1146 = vunpack.c.l.b16 %v319
      %v1147 = vunpack.c.h.b16 %v319
      %v1148 = vunpack.c.l.b16 %v320
      %v1149 = vunpack.c.h.b16 %v320
      %v1150 = vunpack.c.l.b16 %v321
      %v1151 = vunpack.c.h.b16 %v321
      %v1152 = vunpack.c.l.b16 %v322
      %v1153 = vunpack.c.h.b16 %v322
      %v1154 = vunpack.c.l.b16 %v323
      %v1155 = vunpack.c.h.b16 %v323
      %v1156 = vunpack.c.l.b16 %v324
      %v1157 = vunpack.c.h.b16 %v324
      %v1158 = vunpack.c.l.b16 %v325
      %v1159 = vunpack.c.h.b16 %v325
      %v1160 = vunpack.c.l.b16 %v326
      %v1161 = vunpack.c.h.b16 %v326
      %v1162 = vunpack.c.l.b16 %v327
      %v1163 = vunpack.c.h.b16 %v327
      %v1164 = vunpack.c.l.b16 %v328
      %v1165 = vunpack.c.h.b16 %v328
      %v1166 = vunpack.c.l.b16 %v329
      %v1167 = vunpack.c.h.b16 %v329
      %v1168 = vunpack.c.l.b16 %v330
      %v1169 = vunpack.c.h.b16 %v330
      %v1170 = vunpack.c.l.b16 %v331
      %v1171 = vunpack.c.h.b16 %v331
      %v1172 = vunpack.c.l.b16 %v332
      %v1173 = vunpack.c.h.b16 %v332
      %v1174 = vunpack.c.l.b16 %v333
      %v1175 = vunpack.c.h.b16 %v333
      %v1176 = vunpack.c.l.b16 %v334
      %v1177 = vunpack.c.h.b16 %v334
      %v1178 = vunpack.c.l.b16 %v335
      %v1179 = vunpack.c.h.b16 %v335
      %v1180 = vunpack.c.l.b16 %v336
      %v1181 = vunpack.c.h.b16 %v336
      %v1182 = vunpack.c.l.b16 %v337
      %v1183 = vunpack.c.h.b16 %v337
      %v1184 = vunpack.c.l.b16 %v338
      %v1185 = vunpack.c.h.b16 %v338
      %v1186 = vunpack.c.l.b16 %v339
      %v1187 = vunpack.c.h.b16 %v339
      %v1188 = vunpack.c.l.b16 %v340
      %v1189 = vunpack.c.h.b16 %v340
      %v1190 = vunpack.c.l.b16 %v341
      %v1191 = vunpack.c.h.b16 %v341
      %v1192 = vunpack.c.l.b16 %v342
      %v1193 = vunpack.c.h.b16 %v342
      %v1194 = vunpack.c.l.b16 %v343
      %v1195 = vunpack.c.h.b16 %v343
      %v1196 = vunpack.c.l.b16 %v344
      %v1197 = vunpack.c.h.b16 %v344
      %v1198 = vunpack.c.l.b16 %v345
      %v1199 = vunpack.c.h.b16 %v345
      %v1200 = vunpack.c.l.b16 %v346
      %v1201 = vunpack.c.h.b16 %v346
      %v1202 = vunpack.c.l.b16 %v347
      %v1203 = vunpack.c.h.b16 %v347
      %v1204 = vunpack.c.l.b16 %v348
      %v1205 = vunpack.c.h.b16 %v348
      %v1206 = vunpack.c.l.b16 %v349
      %v1207 = vunpack.c.h.b16 %v349
      %v1208 = vunpack.c.l.b16 %v350
      %v1209 = vunpack.c.h.b16 %v350
      %v1210 = vunpack.c.l.b16 %v351
      %v1211 = vunpack.c.h.b16 %v351
      %v1212 = vunpack.c.l.b16 %v352
      %v1213 = vunpack.c.h.b16 %v352
      %v1214 = vunpack.c.l.b16 %v353
      %v1215 = vunpack.c.h.b16 %v353
      %v1216 = vunpack.c.l.b16 %v354
      %v1217 = vunpack.c.h.b16 %v354
      %v1218 = vunpack.c.l.b16 %v355
      %v1219 = vunpack.c.h.b16 %v355
      %v1220 = vunpack.c.l.b16 %v356
      %v1221 = vunpack.c.h.b16 %v356
      %v1222 = vunpack.c.l.b16 %v357
      %v1223 = vunpack.c.h.b16 %v357
      %v1224 = vunpack.c.l.b16 %v358
      %v1225 = vunpack.c.h.b16 %v358
      %v1226 = vunpack.c.l.b16 %v359
      %v1227 = vunpack.c.h.b16 %v359
      %v1228 = vunpack.c.l.b16 %v360
      %v1229 = vunpack.c.h.b16 %v360
      %v1230 = vunpack.c.l.b16 %v361
      %v1231 = vunpack.c.h.b16 %v361
      %v1232 = vunpack.c.l.b16 %v362
      %v1233 = vunpack.c.h.b16 %v362
      %v1234 = vunpack.c.l.b16 %v363
      %v1235 = vunpack.c.h.b16 %v363
      %v1236 = vunpack.c.l.b16 %v364
      %v1237 = vunpack.c.h.b16 %v364
      %v1238 = vunpack.c.l.b16 %v365
      %v1239 = vunpack.c.h.b16 %v365
      %v1240 = vunpack.c.l.b16 %v366
      %v1241 = vunpack.c.h.b16 %v366
      %v1242 = vunpack.c.l.b16 %v367
      %v1243 = vunpack.c.h.b16 %v367
      %v1244 = vunpack.c.l.b16 %v368
      %v1245 = vunpack.c.h.b16 %v368
      %v1246 = vunpack.c.l.b16 %v369
      %v1247 = vunpack.c.h.b16 %v369
      %v1248 = vunpack.c.l.b16 %v370
      %v1249 = vunpack.c.h.b16 %v370
      %v1250 = vunpack.c.l.b16 %v371
      %v1251 = vunpack.c.h.b16 %v371
      %v1252 = vunpack.c.l.b16 %v372
      %v1253 = vunpack.c.h.b16 %v372
      %v1254 = vunpack.c.l.b16 %v373
      %v1255 = vunpack.c.h.b16 %v373
      %v1256 = vunpack.c.l.b16 %v374
      %v1257 = vunpack.c.h.b16 %v374
      %v1258 = vunpack.c.l.b16 %v375
      %v1259 = vunpack.c.h.b16 %v375
      %v1260 = vunpack.c.l.b16 %v376
      %v1261 = vunpack.c.h.b16 %v376
      %v1262 = vunpack.c.l.b16 %v377
      %v1263 = vunpack.c.h.b16 %v377
      %v1264 = vunpack.c.l.b16 %v378
      %v1265 = vunpack.c.h.b16 %v378
      %v1266 = vunpack.c.l.b16 %v379
      %v1267 = vunpack.c.h.b16 %v379
      %v1268 = vunpack.c.l.b16 %v380
      %v1269 = vunpack.c.h.b16 %v380
      %v1270 = vunpack.c.l.b16 %v381
      %v1271 = vunpack.c.h.b16 %v381
      %v1272 = vunpack.c.l.b16 %v382
      %v1273 = vunpack.c.h.b16 %v382
      %v1274 = vunpack.c.l.b16 %v383
      %v1275 = vunpack.c.h.b16 %v383
      %v1276 = vunpack.c.l.b16 %v384
      %v1277 = vunpack.c.h.b16 %v384
      %v1278 = vunpack.c.l.b16 %v385
      %v1279 = vunpack.c.h.b16 %v385
      %v1280 = vunpack.c.l.b16 %v386
      %v1281 = vunpack.c.h.b16 %v386
      %v1282 = vunpack.c.l.b16 %v387
      %v1283 = vunpack.c.h.b16 %v387
      %v1284 = vunpack.c.l.b16 %v388
      %v1285 = vunpack.c.h.b16 %v388
      %v1286 = vunpack.c.l.b16 %v389
      %v1287 = vunpack.c.h.b16 %v389
      %v1288 = vunpack.c.l.b16 %v390
      %v1289 = vunpack.c.h.b16 %v390
      %v1290 = vunpack.c.l.b16 %v391
      %v1291 = vunpack.c.h.b16 %v391
      %v1292 = vunpack.c.l.b16 %v392
      %v1293 = vunpack.c.h.b16 %v392
      %v1294 = vunpack.c.l.b16 %v393
      %v1295 = vunpack.c.h.b16 %v393
      %v1296 = vunpack.c.l.b16 %v394
      %v1297 = vunpack.c.h.b16 %v394
      %v1298 = vunpack.c.l.b16 %v395
      %v1299 = vunpack.c.h.b16 %v395
      %v1300 = vunpack.c.l.b16 %v396
      %v1301 = vunpack.c.h.b16 %v396
      %v1302 = vunpack.c.l.b16 %v397
      %v1303 = vunpack.c.h.b16 %v397
      %v1304 = vunpack.c.l.b16 %v398
      %v1305 = vunpack.c.h.b16 %v398
      %v1306 = vunpack.c.l.b16 %v399
      %v1307 = vunpack.c.h.b16 %v399
      %v1308 = vunpack.c.l.b16 %v400
      %v1309 = vunpack.c.h.b16 %v400
      %v1310 = vunpack.c.l.b16 %v401
      %v1311 = vunpack.c.h.b16 %v401
      %v1312 = vunpack.c.l.b16 %v402
      %v1313 = vunpack.c.h.b16 %v402
      %v1314 = vunpack.c.l.b16 %v403
      %v1315 = vunpack.c.h.b16 %v403
      %v1316 = vunpack.c.l.b16 %v404
      %v1317 = vunpack.c.h.b16 %v404
      %v1318 = vunpack.c.l.b16 %v405
      %v1319 = vunpack.c.h.b16 %v405
      %v1320 = vunpack.c.l.b16 %v406
      %v1321 = vunpack.c.h.b16 %v406
      %v1322 = vunpack.c.l.b16 %v407
      %v1323 = vunpack.c.h.b16 %v407
      %v1324 = vunpack.c.l.b16 %v408
      %v1325 = vunpack.c.h.b16 %v408
      %v1326 = vunpack.c.l.b16 %v409
      %v1327 = vunpack.c.h.b16 %v409
      %v1328 = vunpack.c.l.b16 %v410
      %v1329 = vunpack.c.h.b16 %v410
      %v1330 = vunpack.c.l.b16 %v411
      %v1331 = vunpack.c.h.b16 %v411
      %v1332 = vunpack.c.l.b16 %v412
      %v1333 = vunpack.c.h.b16 %v412
      %v1334 = vunpack.c.l.b16 %v413
      %v1335 = vunpack.c.h.b16 %v413
      %v1336 = vunpack.c.l.b16 %v414
      %v1337 = vunpack.c.h.b16 %v414
      %v1338 = vunpack.c.l.b16 %v415
      %v1339 = vunpack.c.h.b16 %v415
      %v1340 = vunpack.c.l.b16 %v416
      %v1341 = vunpack.c.h.b16 %v416
      %v1342 = vunpack.c.l.b16 %v417
      %v1343 = vunpack.c.h.b16 %v417
      %v1344 = vunpack.c.l.b16 %v418
      %v1345 = vunpack.c.h.b16 %v418
      %v1346 = vunpack.c.l.b16 %v419
      %v1347 = vunpack.c.h.b16 %v419
      %v1348 = vunpack.c.l.b16 %v420
      %v1349 = vunpack.c.h.b16 %v420
      %v1350 = vunpack.c.l.b16 %v421
      %v1351 = vunpack.c.h.b16 %v421
      %v1352 = vunpack.c.l.b16 %v422
      %v1353 = vunpack.c.h.b16 %v422
      %v1354 = vunpack.c.l.b16 %v423
      %v1355 = vunpack.c.h.b16 %v423
      %v1356 = vunpack.c.l.b16 %v424
      %v1357 = vunpack.c.h.b16 %v424
      %v1358 = vunpack.c.l.b16 %v425
      %v1359 = vunpack.c.h.b16 %v425
      %v1360 = vunpack.c.l.b16 %v426
      %v1361 = vunpack.c.h.b16 %v426
      %v1362 = vunpack.c.l.b16 %v427
      %v1363 = vunpack.c.h.b16 %v427
      %v1364 = vunpack.c.l.b16 %v428
      %v1365 = vunpack.c.h.b16 %v428
      %v1366 = vunpack.c.l.b16 %v429
      %v1367 = vunpack.c.h.b16 %v429
      %v1368 = vunpack.c.l.b16 %v430
      %v1369 = vunpack.c.h.b16 %v430
      %v1370 = vunpack.c.l.b16 %v431
      %v1371 = vunpack.c.h.b16 %v431
      %v1372 = vunpack.c.l.b16 %v432
      %v1373 = vunpack.c.h.b16 %v432
      %v1374 = vunpack.c.l.b16 %v433
      %v1375 = vunpack.c.h.b16 %v433
      %v1376 = vunpack.c.l.b16 %v434
      %v1377 = vunpack.c.h.b16 %v434
      %v1378 = vunpack.c.l.b16 %v435
      %v1379 = vunpack.c.h.b16 %v435
      %v1380 = vunpack.c.l.b16 %v436
      %v1381 = vunpack.c.h.b16 %v436
      %v1382 = vunpack.c.l.b16 %v437
      %v1383 = vunpack.c.h.b16 %v437
      %v1384 = vunpack.c.l.b16 %v438
      %v1385 = vunpack.c.h.b16 %v438
      %v1386 = vunpack.c.l.b16 %v439
      %v1387 = vunpack.c.h.b16 %v439
      %v1388 = vunpack.c.l.b16 %v440
      %v1389 = vunpack.c.h.b16 %v440
      %v1390 = vunpack.c.l.b16 %v441
      %v1391 = vunpack.c.h.b16 %v441
      %v1392 = vunpack.c.l.b16 %v442
      %v1393 = vunpack.c.h.b16 %v442
      %v1394 = vunpack.c.l.b16 %v443
      %v1395 = vunpack.c.h.b16 %v443
      %v1396 = vunpack.c.l.b16 %v444
      %v1397 = vunpack.c.h.b16 %v444
      %v1398 = vunpack.c.l.b16 %v445
      %v1399 = vunpack.c.h.b16 %v445
      %v1400 = vunpack.c.l.b16 %v446
      %v1401 = vunpack.c.h.b16 %v446
      %v1402 = vunpack.c.l.b16 %v447
      %v1403 = vunpack.c.h.b16 %v447
      %v1404 = vunpack.c.l.b16 %v448
      %v1405 = vunpack.c.h.b16 %v448
      %v1406 = vunpack.c.l.b16 %v449
      %v1407 = vunpack.c.h.b16 %v449
      %v1408 = vunpack.c.l.b16 %v450
      %v1409 = vunpack.c.h.b16 %v450
      %v1410 = vunpack.c.l.b16 %v451
      %v1411 = vunpack.c.h.b16 %v451
      %v1412 = vunpack.c.l.b16 %v452
      %v1413 = vunpack.c.h.b16 %v452
      %v1414 = vunpack.c.l.b16 %v453
      %v1415 = vunpack.c.h.b16 %v453
      %v1416 = vunpack.c.l.b16 %v454
      %v1417 = vunpack.c.h.b16 %v454
      %v1418 = vunpack.c.l.b16 %v455
      %v1419 = vunpack.c.h.b16 %v455
      %v1420 = vunpack.c.l.b16 %v456
      %v1421 = vunpack.c.h.b16 %v456
      %v1422 = vunpack.c.l.b16 %v457
      %v1423 = vunpack.c.h.b16 %v457
      %v1424 = vunpack.c.l.b16 %v458
      %v1425 = vunpack.c.h.b16 %v458
      %v1426 = vunpack.c.l.b16 %v459
      %v1427 = vunpack.c.h.b16 %v459
      %v1428 = vunpack.c.l.b16 %v460
      %v1429 = vunpack.c.h.b16 %v460
      %v1430 = vunpack.c.l.b16 %v461
      %v1431 = vunpack.c.h.b16 %v461
      %v1432 = vunpack.c.l.b16 %v462
      %v1433 = vunpack.c.h.b16 %v462
      %v1434 = vunpack.c.l.b16 %v463
      %v1435 = vunpack.c.h.b16 %v463
      %v1436 = vunpack.c.l.b16 %v464
      %v1437 = vunpack.c.h.b16 %v464
      %v1438 = vunpack.c.l.b16 %v465
      %v1439 = vunpack.c.h.b16 %v465
      %v1440 = vunpack.c.l.b16 %v466
      %v1441 = vunpack.c.h.b16 %v466
      %v1442 = vunpack.c.l.b16 %v467
      %v1443 = vunpack.c.h.b16 %v467
      %v1444 = vunpack.c.l.b16 %v468
      %v1445 = vunpack.c.h.b16 %v468
      %v1446 = vunpack.c.l.b16 %v469
      %v1447 = vunpack.c.h.b16 %v469
      %v1448 = vunpack.c.l.b16 %v470
      %v1449 = vunpack.c.h.b16 %v470
      %v1450 = vunpack.c.l.b16 %v471
      %v1451 = vunpack.c.h.b16 %v471
      %v1452 = vunpack.c.l.b16 %v472
      %v1453 = vunpack.c.h.b16 %v472
      %v1454 = vunpack.c.l.b16 %v473
      %v1455 = vunpack.c.h.b16 %v473
      %v1456 = vunpack.c.l.b16 %v474
      %v1457 = vunpack.c.h.b16 %v474
      %v1458 = vunpack.c.l.b16 %v475
      %v1459 = vunpack.c.h.b16 %v475
      %v1460 = vunpack.c.l.b16 %v476
      %v1461 = vunpack.c.h.b16 %v476
      %v1462 = vunpack.c.l.b16 %v477
      %v1463 = vunpack.c.h.b16 %v477
      %v1464 = vpack.c.b16 %v832, %v824
      %v1465 = vpack.c.b16 %v833, %v825
      %v1466 = vpack.c.b16 %v834, %v826
      %v1467 = vpack.c.b16 %v835, %v827
      %v1468 = vpack.c.b16 %v836, %v828
      %v1469 = vpack.c.b16 %v837, %v829
      %v1470 = vpack.c.b16 %v838, %v830
      %v1471 = vpack.c.b16 %v839, %v831
      %v1472 = vpack.c.b16 %v848, %v840
      %v1473 = vpack.c.b16 %v849, %v841
      %v1474 = vpack.c.b16 %v850, %v842
      %v1475 = vpack.c.b16 %v851, %v843
      %v1476 = vpack.c.b16 %v852, %v844
      %v1477 = vpack.c.b16 %v853, %v845
      %v1478 = vpack.c.b16 %v854, %v846
      %v1479 = vpack.c.b16 %v855, %v847
      %v1480 = vpack.c.b16 %v864, %v856
      %v1481 = vpack.c.b16 %v865, %v857
      %v1482 = vpack.c.b16 %v866, %v858
      %v1483 = vpack.c.b16 %v867, %v859
      %v1484 = vpack.c.b16 %v868, %v860
      %v1485 = vpack.c.b16 %v869, %v861
      %v1486 = vpack.c.b16 %v870, %v862
      %v1487 = vpack.c.b16 %v871, %v863
      %v1488 = vpack.c.b16 %v880, %v872
      %v1489 = vpack.c.b16 %v881, %v873
      %v1490 = vpack.c.b16 %v882, %v874
      %v1491 = vpack.c.b16 %v883, %v875
      %v1492 = vpack.c.b16 %v884, %v876
      %v1493 = vpack.c.b16 %v885, %v877
      %v1494 = vpack.c.b16 %v886, %v878
      %v1495 = vpack.c.b16 %v887, %v879
      %v1496 = vpack.c.b16 %v896, %v888
      %v1497 = vpack.c.b16 %v897, %v889
      %v1498 = vpack.c.b16 %v898, %v890
      %v1499 = vpack.c.b16 %v899, %v891
      %v1500 = vpack.c.b16 %v900, %v892
      %v1501 = vpack.c.b16 %v901, %v893
      %v1502 = vpack.c.b16 %v902, %v894
      %v1503 = vpack.c.b16 %v903, %v895
      %v1504 = vpack.c.b16 %v912, %v904
      %v1505 = vpack.c.b16 %v913, %v905
      %v1506 = vpack.c.b16 %v914, %v906
      %v1507 = vpack.c.b16 %v915, %v907
      %v1508 = vpack.c.b16 %v916, %v908
      %v1509 = vpack.c.b16 %v917, %v909
      %v1510 = vpack.c.b16 %v918, %v910
      %v1511 = vpack.c.b16 %v919, %v911
      %v1512 = vpack.c.b16 %v928, %v920
      %v1513 = vpack.c.b16 %v929, %v921
      %v1514 = vpack.c.b16 %v930, %v922
      %v1515 = vpack.c.b16 %v931, %v923
      %v1516 = vpack.c.b16 %v932, %v924
      %v1517 = vpack.c.b16 %v933, %v925
      %v1518 = vpack.c.b16 %v934, %v926
      %v1519 = vpack.c.b16 %v935, %v927
      %v1520 = vpack.c.b16 %v944, %v936
      %v1521 = vpack.c.b16 %v945, %v937
      %v1522 = vpack.c.b16 %v946, %v938
      %v1523 = vpack.c.b16 %v947, %v939
      %v1524 = vpack.c.b16 %v948, %v940
      %v1525 = vpack.c.b16 %v949, %v941
      %v1526 = vpack.c.b16 %v950, %v942
      %v1527 = vpack.c.b16 %v951, %v943
      %v1528 = vpack.c.b16 %v960, %v952
      %v1529 = vpack.c.b16 %v961, %v953
      %v1530 = vpack.c.b16 %v962, %v954
      %v1531 = vpack.c.b16 %v963, %v955
      %v1532 = vpack.c.b16 %v964, %v956
      %v1533 = vpack.c.b16 %v965, %v957
      %v1534 = vpack.c.b16 %v966, %v958
      %v1535 = vpack.c.b16 %v967, %v959
      %v1536 = vpack.c.b16 %v976, %v968
      %v1537 = vpack.c.b16 %v977, %v969
      %v1538 = vpack.c.b16 %v978, %v970
      %v1539 = vpack.c.b16 %v979, %v971
      %v1540 = vpack.c.b16 %v980, %v972
      %v1541 = vpack.c.b16 %v981, %v973
      %v1542 = vpack.c.b16 %v982, %v974
      %v1543 = vpack.c.b16 %v983, %v975
      %v1544 = vpack.c.b16 %v992, %v984
      %v1545 = vpack.c.b16 %v993, %v985
      %v1546 = vpack.c.b16 %v994, %v986
      %v1547 = vpack.c.b16 %v995, %v987
      %v1548 = vpack.c.b16 %v996, %v988
      %v1549 = vpack.c.b16 %v997, %v989
      %v1550 = vpack.c.b16 %v998, %v990
      %v1551 = vpack.c.b16 %v999, %v991
      %v1552 = vpack.c.b16 %v1008, %v1000
      %v1553 = vpack.c.b16 %v1009, %v1001
      %v1554 = vpack.c.b16 %v1010, %v1002
      %v1555 = vpack.c.b16 %v1011, %v1003
      %v1556 = vpack.c.b16 %v1012, %v1004
      %v1557 = vpack.c.b16 %v1013, %v1005
      %v1558 = vpack.c.b16 %v1014, %v1006
      %v1559 = vpack.c.b16 %v1015, %v1007
      %v1560 = vpack.c.b16 %v1024, %v1016
      %v1561 = vpack.c.b16 %v1025, %v1017
      %v1562 = vpack.c.b16 %v1026, %v1018
      %v1563 = vpack.c.b16 %v1027, %v1019
      %v1564 = vpack.c.b16 %v1028, %v1020
      %v1565 = vpack.c.b16 %v1029, %v1021
      %v1566 = vpack.c.b16 %v1030, %v1022
      %v1567 = vpack.c.b16 %v1031, %v1023
      %v1568 = vpack.c.b16 %v1040, %v1032
      %v1569 = vpack.c.b16 %v1041, %v1033
      %v1570 = vpack.c.b16 %v1042, %v1034
      %v1571 = vpack.c.b16 %v1043, %v1035
      %v1572 = vpack.c.b16 %v1044, %v1036
      %v1573 = vpack.c.b16 %v1045, %v1037
      %v1574 = vpack.c.b16 %v1046, %v1038
      %v1575 = vpack.c.b16 %v1047, %v1039
      %v1576 = vpack.c.b16 %v1056, %v1048
      %v1577 = vpack.c.b16 %v1057, %v1049
      %v1578 = vpack.c.b16 %v1058, %v1050
      %v1579 = vpack.c.b16 %v1059, %v1051
      %v1580 = vpack.c.b16 %v1060, %v1052
      %v1581 = vpack.c.b16 %v1061, %v1053
      %v1582 = vpack.c.b16 %v1062, %v1054
      %v1583 = vpack.c.b16 %v1063, %v1055
      %v1584 = vpack.c.b16 %v1072, %v1064
      %v1585 = vpack.c.b16 %v1073, %v1065
      %v1586 = vpack.c.b16 %v1074, %v1066
      %v1587 = vpack.c.b16 %v1075, %v1067
      %v1588 = vpack.c.b16 %v1076, %v1068
      %v1589 = vpack.c.b16 %v1077, %v1069
      %v1590 = vpack.c.b16 %v1078, %v1070
      %v1591 = vpack.c.b16 %v1079, %v1071
      %v1592 = vpack.c.b16 %v1088, %v1080
      %v1593 = vpack.c.b16 %v1089, %v1081
      %v1594 = vpack.c.b16 %v1090, %v1082
      %v1595 = vpack.c.b16 %v1091, %v1083
      %v1596 = vpack.c.b16 %v1092, %v1084
      %v1597 = vpack.c.b16 %v1093, %v1085
      %v1598 = vpack.c.b16 %v1094, %v1086
      %v1599 = vpack.c.b16 %v1095, %v1087
      %v1600 = vpack.c.b16 %v1104, %v1096
      %v1601 = vpack.c.b16 %v1105, %v1097
      %v1602 = vpack.c.b16 %v1106, %v1098
      %v1603 = vpack.c.b16 %v1107, %v1099
      %v1604 = vpack.c.b16 %v1108, %v1100
      %v1605 = vpack.c.b16 %v1109, %v1101
      %v1606 = vpack.c.b16 %v1110, %v1102
      %v1607 = vpack.c.b16 %v1111, %v1103
      %v1608 = vpack.c.b16 %v1120, %v1112
      %v1609 = vpack.c.b16 %v1121, %v1113
      %v1610 = vpack.c.b16 %v1122, %v1114
      %v1611 = vpack.c.b16 %v1123, %v1115
      %v1612 = vpack.c.b16 %v1124, %v1116
      %v1613 = vpack.c.b16 %v1125, %v1117
      %v1614 = vpack.c.b16 %v1126, %v1118
      %v1615 = vpack.c.b16 %v1127, %v1119
      %v1616 = vpack.c.b16 %v1136, %v1128
      %v1617 = vpack.c.b16 %v1137, %v1129
      %v1618 = vpack.c.b16 %v1138, %v1130
      %v1619 = vpack.c.b16 %v1139, %v1131
      %v1620 = vpack.c.b16 %v1140, %v1132
      %v1621 = vpack.c.b16 %v1141, %v1133
      %v1622 = vpack.c.b16 %v1142, %v1134
      %v1623 = vpack.c.b16 %v1143, %v1135
      %v1624 = vpack.c.b16 %v1152, %v1144
      %v1625 = vpack.c.b16 %v1153, %v1145
      %v1626 = vpack.c.b16 %v1154, %v1146
      %v1627 = vpack.c.b16 %v1155, %v1147
      %v1628 = vpack.c.b16 %v1156, %v1148
      %v1629 = vpack.c.b16 %v1157, %v1149
      %v1630 = vpack.c.b16 %v1158, %v1150
      %v1631 = vpack.c.b16 %v1159, %v1151
      %v1632 = vpack.c.b16 %v1168, %v1160
      %v1633 = vpack.c.b16 %v1169, %v1161
      %v1634 = vpack.c.b16 %v1170, %v1162
      %v1635 = vpack.c.b16 %v1171, %v1163
      %v1636 = vpack.c.b16 %v1172, %v1164
      %v1637 = vpack.c.b16 %v1173, %v1165
      %v1638 = vpack.c.b16 %v1174, %v1166
      %v1639 = vpack.c.b16 %v1175, %v1167
      %v1640 = vpack.c.b16 %v1184, %v1176
      %v1641 = vpack.c.b16 %v1185, %v1177
      %v1642 = vpack.c.b16 %v1186, %v1178
      %v1643 = vpack.c.b16 %v1187, %v1179
      %v1644 = vpack.c.b16 %v1188, %v1180
      %v1645 = vpack.c.b16 %v1189, %v1181
      %v1646 = vpack.c.b16 %v1190, %v1182
      %v1647 = vpack.c.b16 %v1191, %v1183
      %v1648 = vpack.c.b16 %v1200, %v1192
      %v1649 = vpack.c.b16 %v1201, %v1193
      %v1650 = vpack.c.b16 %v1202, %v1194
      %v1651 = vpack.c.b16 %v1203, %v1195
      %v1652 = vpack.c.b16 %v1204, %v1196
      %v1653 = vpack.c.b16 %v1205, %v1197
      %v1654 = vpack.c.b16 %v1206, %v1198
      %v1655 = vpack.c.b16 %v1207, %v1199
      %v1656 = vpack.c.b16 %v1216, %v1208
      %v1657 = vpack.c.b16 %v1217, %v1209
      %v1658 = vpack.c.b16 %v1218, %v1210
      %v1659 = vpack.c.b16 %v1219, %v1211
      %v1660 = vpack.c.b16 %v1220, %v1212
      %v1661 = vpack.c.b16 %v1221, %v1213
      %v1662 = vpack.c.b16 %v1222, %v1214
      %v1663 = vpack.c.b16 %v1223, %v1215
      %v1664 = vpack.c.b16 %v1232, %v1224
      %v1665 = vpack.c.b16 %v1233, %v1225
      %v1666 = vpack.c.b16 %v1234, %v1226
      %v1667 = vpack.c.b16 %v1235, %v1227
      %v1668 = vpack.c.b16 %v1236, %v1228
      %v1669 = vpack.c.b16 %v1237, %v1229
      %v1670 = vpack.c.b16 %v1238, %v1230
      %v1671 = vpack.c.b16 %v1239, %v1231
      %v1672 = vpack.c.b16 %v1248, %v1240
      %v1673 = vpack.c.b16 %v1249, %v1241
      %v1674 = vpack.c.b16 %v1250, %v1242
      %v1675 = vpack.c.b16 %v1251, %v1243
      %v1676 = vpack.c.b16 %v1252, %v1244
      %v1677 = vpack.c.b16 %v1253, %v1245
      %v1678 = vpack.c.b16 %v1254, %v1246
      %v1679 = vpack.c.b16 %v1255, %v1247
      %v1680 = vpack.c.b16 %v1264, %v1256
      %v1681 = vpack.c.b16 %v1265, %v1257
      %v1682 = vpack.c.b16 %v1266, %v1258
      %v1683 = vpack.c.b16 %v1267, %v1259
      %v1684 = vpack.c.b16 %v1268, %v1260
      %v1685 = vpack.c.b16 %v1269, %v1261
      %v1686 = vpack.c.b16 %v1270, %v1262
      %v1687 = vpack.c.b16 %v1271, %v1263
      %v1688 = vpack.c.b16 %v1280, %v1272
      %v1689 = vpack.c.b16 %v1281, %v1273
      %v1690 = vpack.c.b16 %v1282, %v1274
      %v1691 = vpack.c.b16 %v1283, %v1275
      %v1692 = vpack.c.b16 %v1284, %v1276
      %v1693 = vpack.c.b16 %v1285, %v1277
      %v1694 = vpack.c.b16 %v1286, %v1278
      %v1695 = vpack.c.b16 %v1287, %v1279
      %v1696 = vpack.c.b16 %v1296, %v1288
      %v1697 = vpack.c.b16 %v1297, %v1289
      %v1698 = vpack.c.b16 %v1298, %v1290
      %v1699 = vpack.c.b16 %v1299, %v1291
      %v1700 = vpack.c.b16 %v1300, %v1292
      %v1701 = vpack.c.b16 %v1301, %v1293
      %v1702 = vpack.c.b16 %v1302, %v1294
      %v1703 = vpack.c.b16 %v1303, %v1295
      %v1704 = vpack.c.b16 %v1312, %v1304
      %v1705 = vpack.c.b16 %v1313, %v1305
      %v1706 = vpack.c.b16 %v1314, %v1306
      %v1707 = vpack.c.b16 %v1315, %v1307
      %v1708 = vpack.c.b16 %v1316, %v1308
      %v1709 = vpack.c.b16 %v1317, %v1309
      %v1710 = vpack.c.b16 %v1318, %v1310
      %v1711 = vpack.c.b16 %v1319, %v1311
      %v1712 = vpack.c.b16 %v1328, %v1320
      %v1713 = vpack.c.b16 %v1329, %v1321
      %v1714 = vpack.c.b16 %v1330, %v1322
      %v1715 = vpack.c.b16 %v1331, %v1323
      %v1716 = vpack.c.b16 %v1332, %v1324
      %v1717 = vpack.c.b16 %v1333, %v1325
      %v1718 = vpack.c.b16 %v1334, %v1326
      %v1719 = vpack.c.b16 %v1335, %v1327
      %v1720 = vpack.c.b16 %v1344, %v1336
      %v1721 = vpack.c.b16 %v1345, %v1337
      %v1722 = vpack.c.b16 %v1346, %v1338
      %v1723 = vpack.c.b16 %v1347, %v1339
      %v1724 = vpack.c.b16 %v1348, %v1340
      %v1725 = vpack.c.b16 %v1349, %v1341
      %v1726 = vpack.c.b16 %v1350, %v1342
      %v1727 = vpack.c.b16 %v1351, %v1343
      %v1728 = vpack.c.b16 %v1360, %v1352
      %v1729 = vpack.c.b16 %v1361, %v1353
      %v1730 = vpack.c.b16 %v1362, %v1354
      %v1731 = vpack.c.b16 %v1363, %v1355
      %v1732 = vpack.c.b16 %v1364, %v1356
      %v1733 = vpack.c.b16 %v1365, %v1357
      %v1734 = vpack.c.b16 %v1366, %v1358
      %v1735 = vpack.c.b16 %v1367, %v1359
      %v1736 = vpack.c.b16 %v1376, %v1368
      %v1737 = vpack.c.b16 %v1377, %v1369
      %v1738 = vpack.c.b16 %v1378, %v1370
      %v1739 = vpack.c.b16 %v1379, %v1371
      %v1740 = vpack.c.b16 %v1380, %v1372
      %v1741 = vpack.c.b16 %v1381, %v1373
      %v1742 = vpack.c.b16 %v1382, %v1374
      %v1743 = vpack.c.b16 %v1383, %v1375
      %v1744 = vpack.c.b16 %v1392, %v1384
      %v1745 = vpack.c.b16 %v1393, %v1385
      %v1746 = vpack.c.b16 %v1394, %v1386
      %v1747 = vpack.c.b16 %v1395, %v1387
      %v1748 = vpack.c.b16 %v1396, %v1388
      %v1749 = vpack.c.b16 %v1397, %v1389
      %v1750 = vpack.c.b16 %v1398, %v1390
      %v1751 = vpack.c.b16 %v1399, %v1391
      %v1752 = vpack.c.b16 %v1408, %v1400
      %v1753 = vpack.c.b16 %v1409, %v1401
      %v1754 = vpack.c.b16 %v1410, %v1402
      %v1755 = vpack.c.b16 %v1411, %v1403
      %v1756 = vpack.c.b16 %v1412, %v1404
      %v1757 = vpack.c.b16 %v1413, %v1405
      %v1758 = vpack.c.b16 %v1414, %v1406
      %v1759 = vpack.c.b16 %v1415, %v1407
      %v1760 = vpack.c.b16 %v1424, %v1416
      %v1761 = vpack.c.b16 %v1425, %v1417
      %v1762 = vpack.c.b16 %v1426, %v1418
      %v1763 = vpack.c.b16 %v1427, %v1419
      %v1764 = vpack.c.b16 %v1428, %v1420
      %v1765 = vpack.c.b16 %v1429, %v1421
      %v1766 = vpack.c.b16 %v1430, %v1422
      %v1767 = vpack.c.b16 %v1431, %v1423
      %v1768 = vpack.c.b16 %v1440, %v1432
      %v1769 = vpack.c.b16 %v1441, %v1433
      %v1770 = vpack.c.b16 %v1442, %v1434
      %v1771 = vpack.c.b16 %v1443, %v1435
      %v1772 = vpack.c.b16 %v1444, %v1436
      %v1773 = vpack.c.b16 %v1445, %v1437
      %v1774 = vpack.c.b16 %v1446, %v1438
      %v1775 = vpack.c.b16 %v1447, %v1439
      %v1776 = vpack.c.b16 %v1456, %v1448
      %v1777 = vpack.c.b16 %v1457, %v1449
      %v1778 = vpack.c.b16 %v1458, %v1450
      %v1779 = vpack.c.b16 %v1459, %v1451
      %v1780 = vpack.c.b16 %v1460, %v1452
      %v1781 = vpack.c.b16 %v1461, %v1453
      %v1782 = vpack.c.b16 %v1462, %v1454
      %v1783 = vpack.c.b16 %v1463, %v1455
      %2104 = vmatpush.bf16.msra.mxu0 %v1520
      %2105 = vmatpush.bf16.msra.mxu0 %v1512
      %2106 = vmatpush.bf16.msra.mxu0 %v1504
      %2107 = vmatpush.bf16.msra.mxu0 %v1496
      %2108 = vmatpush.bf16.msra.mxu0 %v1488
      %2109 = vmatpush.bf16.msra.mxu0 %v1480
      %2110 = vmatpush.bf16.msra.mxu0 %v1472
      %2111 = vmatpush.bf16.msra.mxu0 %v1464
      %2112 = vmatmul.bf16.gmra.mxu0 %v494
      %v2113 = vpop.f32.mrf.mxu0
      %v2114 = vadd.f32 0.0, %v2113
      %v2115 = vpop.f32.mrf.mxu0
      %v2116 = vadd.f32 0.0, %v2115
      %2117 = vdwg.mxu0
      %2118 = vmatpush.bf16.msra.mxu0 %v1584
      %2119 = vmatpush.bf16.msra.mxu0 %v1576
      %2120 = vmatpush.bf16.msra.mxu0 %v1568
      %2121 = vmatpush.bf16.msra.mxu0 %v1560
      %2122 = vmatpush.bf16.msra.mxu0 %v1552
      %2123 = vmatpush.bf16.msra.mxu0 %v1544
      %2124 = vmatpush.bf16.msra.mxu0 %v1536
      %2125 = vmatpush.bf16.msra.mxu0 %v1528
      %2126 = vmatmul.bf16.gmra.mxu0 %v495
      %v2127 = vpop.f32.mrf.mxu0
      %v2128 = vadd.f32 %v2114, %v2127
      %v2129 = vpop.f32.mrf.mxu0
      %v2130 = vadd.f32 %v2116, %v2129
      %2131 = vdwg.mxu0
      %2132 = vmatpush.bf16.msra.mxu0 %v1648
      %2133 = vmatpush.bf16.msra.mxu0 %v1640
      %2134 = vmatpush.bf16.msra.mxu0 %v1632
      %2135 = vmatpush.bf16.msra.mxu0 %v1624
      %2136 = vmatpush.bf16.msra.mxu0 %v1616
      %2137 = vmatpush.bf16.msra.mxu0 %v1608
      %2138 = vmatpush.bf16.msra.mxu0 %v1600
      %2139 = vmatpush.bf16.msra.mxu0 %v1592
      %2140 = vmatmul.bf16.gmra.mxu0 %v496
      %v2141 = vpop.f32.mrf.mxu0
      %v2142 = vadd.f32 %v2128, %v2141
      %v2143 = vpop.f32.mrf.mxu0
      %v2144 = vadd.f32 %v2130, %v2143
      %2145 = vdwg.mxu0
      %2146 = vmatpush.bf16.msra.mxu0 %v1712
      %2147 = vmatpush.bf16.msra.mxu0 %v1704
      %2148 = vmatpush.bf16.msra.mxu0 %v1696
      %2149 = vmatpush.bf16.msra.mxu0 %v1688
      %2150 = vmatpush.bf16.msra.mxu0 %v1680
      %2151 = vmatpush.bf16.msra.mxu0 %v1672
      %2152 = vmatpush.bf16.msra.mxu0 %v1664
      %2153 = vmatpush.bf16.msra.mxu0 %v1656
      %2154 = vmatmul.bf16.gmra.mxu0 %v497
      %v2155 = vpop.f32.mrf.mxu0
      %v2156 = vadd.f32 %v2142, %v2155
      %v2157 = vpop.f32.mrf.mxu0
      %v2158 = vadd.f32 %v2144, %v2157
      %2159 = vdwg.mxu0
      %2160 = vmatpush.bf16.msra.mxu0 %v1776
      %2161 = vmatpush.bf16.msra.mxu0 %v1768
      %2162 = vmatpush.bf16.msra.mxu0 %v1760
      %2163 = vmatpush.bf16.msra.mxu0 %v1752
      %2164 = vmatpush.bf16.msra.mxu0 %v1744
      %2165 = vmatpush.bf16.msra.mxu0 %v1736
      %2166 = vmatpush.bf16.msra.mxu0 %v1728
      %2167 = vmatpush.bf16.msra.mxu0 %v1720
      %2168 = vmatmul.bf16.gmra.mxu0 %v498
      %v2169 = vpop.f32.mrf.mxu0
      %v2170 = vadd.f32 %v2156, %v2169
      %v2171 = vpop.f32.mrf.mxu0
      %v2172 = vadd.f32 %v2158, %v2171
      %2173 = vdwg.mxu0
      %2174 = vmatpush.bf16.msra.mxu0 %v1521
      %2175 = vmatpush.bf16.msra.mxu0 %v1513
      %2176 = vmatpush.bf16.msra.mxu0 %v1505
      %2177 = vmatpush.bf16.msra.mxu0 %v1497
      %2178 = vmatpush.bf16.msra.mxu0 %v1489
      %2179 = vmatpush.bf16.msra.mxu0 %v1481
      %2180 = vmatpush.bf16.msra.mxu0 %v1473
      %2181 = vmatpush.bf16.msra.mxu0 %v1465
      %2182 = vmatmul.bf16.gmra.mxu0 %v494
      %v2183 = vpop.f32.mrf.mxu0
      %v2184 = vadd.f32 0.0, %v2183
      %v2185 = vpop.f32.mrf.mxu0
      %v2186 = vadd.f32 0.0, %v2185
      %2187 = vdwg.mxu0
      %2188 = vmatpush.bf16.msra.mxu0 %v1585
      %2189 = vmatpush.bf16.msra.mxu0 %v1577
      %2190 = vmatpush.bf16.msra.mxu0 %v1569
      %2191 = vmatpush.bf16.msra.mxu0 %v1561
      %2192 = vmatpush.bf16.msra.mxu0 %v1553
      %2193 = vmatpush.bf16.msra.mxu0 %v1545
      %2194 = vmatpush.bf16.msra.mxu0 %v1537
      %2195 = vmatpush.bf16.msra.mxu0 %v1529
      %2196 = vmatmul.bf16.gmra.mxu0 %v495
      %v2197 = vpop.f32.mrf.mxu0
      %v2198 = vadd.f32 %v2184, %v2197
      %v2199 = vpop.f32.mrf.mxu0
      %v2200 = vadd.f32 %v2186, %v2199
      %2201 = vdwg.mxu0
      %2202 = vmatpush.bf16.msra.mxu0 %v1649
      %2203 = vmatpush.bf16.msra.mxu0 %v1641
      %2204 = vmatpush.bf16.msra.mxu0 %v1633
      %2205 = vmatpush.bf16.msra.mxu0 %v1625
      %2206 = vmatpush.bf16.msra.mxu0 %v1617
      %2207 = vmatpush.bf16.msra.mxu0 %v1609
      %2208 = vmatpush.bf16.msra.mxu0 %v1601
      %2209 = vmatpush.bf16.msra.mxu0 %v1593
      %2210 = vmatmul.bf16.gmra.mxu0 %v496
      %v2211 = vpop.f32.mrf.mxu0
      %v2212 = vadd.f32 %v2198, %v2211
      %v2213 = vpop.f32.mrf.mxu0
      %v2214 = vadd.f32 %v2200, %v2213
      %2215 = vdwg.mxu0
      %2216 = vmatpush.bf16.msra.mxu0 %v1713
      %2217 = vmatpush.bf16.msra.mxu0 %v1705
      %2218 = vmatpush.bf16.msra.mxu0 %v1697
      %2219 = vmatpush.bf16.msra.mxu0 %v1689
      %2220 = vmatpush.bf16.msra.mxu0 %v1681
      %2221 = vmatpush.bf16.msra.mxu0 %v1673
      %2222 = vmatpush.bf16.msra.mxu0 %v1665
      %2223 = vmatpush.bf16.msra.mxu0 %v1657
      %2224 = vmatmul.bf16.gmra.mxu0 %v497
      %v2225 = vpop.f32.mrf.mxu0
      %v2226 = vadd.f32 %v2212, %v2225
      %v2227 = vpop.f32.mrf.mxu0
      %v2228 = vadd.f32 %v2214, %v2227
      %2229 = vdwg.mxu0
      %2230 = vmatpush.bf16.msra.mxu0 %v1777
      %2231 = vmatpush.bf16.msra.mxu0 %v1769
      %2232 = vmatpush.bf16.msra.mxu0 %v1761
      %2233 = vmatpush.bf16.msra.mxu0 %v1753
      %2234 = vmatpush.bf16.msra.mxu0 %v1745
      %2235 = vmatpush.bf16.msra.mxu0 %v1737
      %2236 = vmatpush.bf16.msra.mxu0 %v1729
      %2237 = vmatpush.bf16.msra.mxu0 %v1721
      %2238 = vmatmul.bf16.gmra.mxu0 %v498
      %v2239 = vpop.f32.mrf.mxu0
      %v2240 = vadd.f32 %v2226, %v2239
      %v2241 = vpop.f32.mrf.mxu0
      %v2242 = vadd.f32 %v2228, %v2241
      %2243 = vdwg.mxu0
      %2244 = vmatpush.bf16.msra.mxu0 %v1522
      %2245 = vmatpush.bf16.msra.mxu0 %v1514
      %2246 = vmatpush.bf16.msra.mxu0 %v1506
      %2247 = vmatpush.bf16.msra.mxu0 %v1498
      %2248 = vmatpush.bf16.msra.mxu0 %v1490
      %2249 = vmatpush.bf16.msra.mxu0 %v1482
      %2250 = vmatpush.bf16.msra.mxu0 %v1474
      %2251 = vmatpush.bf16.msra.mxu0 %v1466
      %2252 = vmatmul.bf16.gmra.mxu0 %v494
      %v2253 = vpop.f32.mrf.mxu0
      %v2254 = vadd.f32 0.0, %v2253
      %v2255 = vpop.f32.mrf.mxu0
      %v2256 = vadd.f32 0.0, %v2255
      %2257 = vdwg.mxu0
      %2258 = vmatpush.bf16.msra.mxu0 %v1586
      %2259 = vmatpush.bf16.msra.mxu0 %v1578
      %2260 = vmatpush.bf16.msra.mxu0 %v1570
      %2261 = vmatpush.bf16.msra.mxu0 %v1562
      %2262 = vmatpush.bf16.msra.mxu0 %v1554
      %2263 = vmatpush.bf16.msra.mxu0 %v1546
      %2264 = vmatpush.bf16.msra.mxu0 %v1538
      %2265 = vmatpush.bf16.msra.mxu0 %v1530
      %2266 = vmatmul.bf16.gmra.mxu0 %v495
      %v2267 = vpop.f32.mrf.mxu0
      %v2268 = vadd.f32 %v2254, %v2267
      %v2269 = vpop.f32.mrf.mxu0
      %v2270 = vadd.f32 %v2256, %v2269
      %2271 = vdwg.mxu0
      %2272 = vmatpush.bf16.msra.mxu0 %v1650
      %2273 = vmatpush.bf16.msra.mxu0 %v1642
      %2274 = vmatpush.bf16.msra.mxu0 %v1634
      %2275 = vmatpush.bf16.msra.mxu0 %v1626
      %2276 = vmatpush.bf16.msra.mxu0 %v1618
      %2277 = vmatpush.bf16.msra.mxu0 %v1610
      %2278 = vmatpush.bf16.msra.mxu0 %v1602
      %2279 = vmatpush.bf16.msra.mxu0 %v1594
      %2280 = vmatmul.bf16.gmra.mxu0 %v496
      %v2281 = vpop.f32.mrf.mxu0
      %v2282 = vadd.f32 %v2268, %v2281
      %v2283 = vpop.f32.mrf.mxu0
      %v2284 = vadd.f32 %v2270, %v2283
      %2285 = vdwg.mxu0
      %2286 = vmatpush.bf16.msra.mxu0 %v1714
      %2287 = vmatpush.bf16.msra.mxu0 %v1706
      %2288 = vmatpush.bf16.msra.mxu0 %v1698
      %2289 = vmatpush.bf16.msra.mxu0 %v1690
      %2290 = vmatpush.bf16.msra.mxu0 %v1682
      %2291 = vmatpush.bf16.msra.mxu0 %v1674
      %2292 = vmatpush.bf16.msra.mxu0 %v1666
      %2293 = vmatpush.bf16.msra.mxu0 %v1658
      %2294 = vmatmul.bf16.gmra.mxu0 %v497
      %v2295 = vpop.f32.mrf.mxu0
      %v2296 = vadd.f32 %v2282, %v2295
      %v2297 = vpop.f32.mrf.mxu0
      %v2298 = vadd.f32 %v2284, %v2297
      %2299 = vdwg.mxu0
      %2300 = vmatpush.bf16.msra.mxu0 %v1778
      %2301 = vmatpush.bf16.msra.mxu0 %v1770
      %2302 = vmatpush.bf16.msra.mxu0 %v1762
      %2303 = vmatpush.bf16.msra.mxu0 %v1754
      %2304 = vmatpush.bf16.msra.mxu0 %v1746
      %2305 = vmatpush.bf16.msra.mxu0 %v1738
      %2306 = vmatpush.bf16.msra.mxu0 %v1730
      %2307 = vmatpush.bf16.msra.mxu0 %v1722
      %2308 = vmatmul.bf16.gmra.mxu0 %v498
      %v2309 = vpop.f32.mrf.mxu0
      %v2310 = vadd.f32 %v2296, %v2309
      %v2311 = vpop.f32.mrf.mxu0
      %v2312 = vadd.f32 %v2298, %v2311
      %2313 = vdwg.mxu0
      %2314 = vmatpush.bf16.msra.mxu0 %v1523
      %2315 = vmatpush.bf16.msra.mxu0 %v1515
      %2316 = vmatpush.bf16.msra.mxu0 %v1507
      %2317 = vmatpush.bf16.msra.mxu0 %v1499
      %2318 = vmatpush.bf16.msra.mxu0 %v1491
      %2319 = vmatpush.bf16.msra.mxu0 %v1483
      %2320 = vmatpush.bf16.msra.mxu0 %v1475
      %2321 = vmatpush.bf16.msra.mxu0 %v1467
      %2322 = vmatmul.bf16.gmra.mxu0 %v494
      %v2323 = vpop.f32.mrf.mxu0
      %v2324 = vadd.f32 0.0, %v2323
      %v2325 = vpop.f32.mrf.mxu0
      %v2326 = vadd.f32 0.0, %v2325
      %2327 = vdwg.mxu0
      %2328 = vmatpush.bf16.msra.mxu0 %v1587
      %2329 = vmatpush.bf16.msra.mxu0 %v1579
      %2330 = vmatpush.bf16.msra.mxu0 %v1571
      %2331 = vmatpush.bf16.msra.mxu0 %v1563
      %2332 = vmatpush.bf16.msra.mxu0 %v1555
      %2333 = vmatpush.bf16.msra.mxu0 %v1547
      %2334 = vmatpush.bf16.msra.mxu0 %v1539
      %2335 = vmatpush.bf16.msra.mxu0 %v1531
      %2336 = vmatmul.bf16.gmra.mxu0 %v495
      %v2337 = vpop.f32.mrf.mxu0
      %v2338 = vadd.f32 %v2324, %v2337
      %v2339 = vpop.f32.mrf.mxu0
      %v2340 = vadd.f32 %v2326, %v2339
      %2341 = vdwg.mxu0
      %2342 = vmatpush.bf16.msra.mxu0 %v1651
      %2343 = vmatpush.bf16.msra.mxu0 %v1643
      %2344 = vmatpush.bf16.msra.mxu0 %v1635
      %2345 = vmatpush.bf16.msra.mxu0 %v1627
      %2346 = vmatpush.bf16.msra.mxu0 %v1619
      %2347 = vmatpush.bf16.msra.mxu0 %v1611
      %2348 = vmatpush.bf16.msra.mxu0 %v1603
      %2349 = vmatpush.bf16.msra.mxu0 %v1595
      %2350 = vmatmul.bf16.gmra.mxu0 %v496
      %v2351 = vpop.f32.mrf.mxu0
      %v2352 = vadd.f32 %v2338, %v2351
      %v2353 = vpop.f32.mrf.mxu0
      %v2354 = vadd.f32 %v2340, %v2353
      %2355 = vdwg.mxu0
      %2356 = vmatpush.bf16.msra.mxu0 %v1715
      %2357 = vmatpush.bf16.msra.mxu0 %v1707
      %2358 = vmatpush.bf16.msra.mxu0 %v1699
      %2359 = vmatpush.bf16.msra.mxu0 %v1691
      %2360 = vmatpush.bf16.msra.mxu0 %v1683
      %2361 = vmatpush.bf16.msra.mxu0 %v1675
      %2362 = vmatpush.bf16.msra.mxu0 %v1667
      %2363 = vmatpush.bf16.msra.mxu0 %v1659
      %2364 = vmatmul.bf16.gmra.mxu0 %v497
      %v2365 = vpop.f32.mrf.mxu0
      %v2366 = vadd.f32 %v2352, %v2365
      %v2367 = vpop.f32.mrf.mxu0
      %v2368 = vadd.f32 %v2354, %v2367
      %2369 = vdwg.mxu0
      %2370 = vmatpush.bf16.msra.mxu0 %v1779
      %2371 = vmatpush.bf16.msra.mxu0 %v1771
      %2372 = vmatpush.bf16.msra.mxu0 %v1763
      %2373 = vmatpush.bf16.msra.mxu0 %v1755
      %2374 = vmatpush.bf16.msra.mxu0 %v1747
      %2375 = vmatpush.bf16.msra.mxu0 %v1739
      %2376 = vmatpush.bf16.msra.mxu0 %v1731
      %2377 = vmatpush.bf16.msra.mxu0 %v1723
      %2378 = vmatmul.bf16.gmra.mxu0 %v498
      %v2379 = vpop.f32.mrf.mxu0
      %v2380 = vadd.f32 %v2366, %v2379
      %v2381 = vpop.f32.mrf.mxu0
      %v2382 = vadd.f32 %v2368, %v2381
      %2383 = vdwg.mxu0
      %2384 = vmatpush.bf16.msra.mxu0 %v1524
      %2385 = vmatpush.bf16.msra.mxu0 %v1516
      %2386 = vmatpush.bf16.msra.mxu0 %v1508
      %2387 = vmatpush.bf16.msra.mxu0 %v1500
      %2388 = vmatpush.bf16.msra.mxu0 %v1492
      %2389 = vmatpush.bf16.msra.mxu0 %v1484
      %2390 = vmatpush.bf16.msra.mxu0 %v1476
      %2391 = vmatpush.bf16.msra.mxu0 %v1468
      %2392 = vmatmul.bf16.gmra.mxu0 %v494
      %v2393 = vpop.f32.mrf.mxu0
      %v2394 = vadd.f32 0.0, %v2393
      %v2395 = vpop.f32.mrf.mxu0
      %v2396 = vadd.f32 0.0, %v2395
      %2397 = vdwg.mxu0
      %2398 = vmatpush.bf16.msra.mxu0 %v1588
      %2399 = vmatpush.bf16.msra.mxu0 %v1580
      %2400 = vmatpush.bf16.msra.mxu0 %v1572
      %2401 = vmatpush.bf16.msra.mxu0 %v1564
      %2402 = vmatpush.bf16.msra.mxu0 %v1556
      %2403 = vmatpush.bf16.msra.mxu0 %v1548
      %2404 = vmatpush.bf16.msra.mxu0 %v1540
      %2405 = vmatpush.bf16.msra.mxu0 %v1532
      %2406 = vmatmul.bf16.gmra.mxu0 %v495
      %v2407 = vpop.f32.mrf.mxu0
      %v2408 = vadd.f32 %v2394, %v2407
      %v2409 = vpop.f32.mrf.mxu0
      %v2410 = vadd.f32 %v2396, %v2409
      %2411 = vdwg.mxu0
      %2412 = vmatpush.bf16.msra.mxu0 %v1652
      %2413 = vmatpush.bf16.msra.mxu0 %v1644
      %2414 = vmatpush.bf16.msra.mxu0 %v1636
      %2415 = vmatpush.bf16.msra.mxu0 %v1628
      %2416 = vmatpush.bf16.msra.mxu0 %v1620
      %2417 = vmatpush.bf16.msra.mxu0 %v1612
      %2418 = vmatpush.bf16.msra.mxu0 %v1604
      %2419 = vmatpush.bf16.msra.mxu0 %v1596
      %2420 = vmatmul.bf16.gmra.mxu0 %v496
      %v2421 = vpop.f32.mrf.mxu0
      %v2422 = vadd.f32 %v2408, %v2421
      %v2423 = vpop.f32.mrf.mxu0
      %v2424 = vadd.f32 %v2410, %v2423
      %2425 = vdwg.mxu0
      %2426 = vmatpush.bf16.msra.mxu0 %v1716
      %2427 = vmatpush.bf16.msra.mxu0 %v1708
      %2428 = vmatpush.bf16.msra.mxu0 %v1700
      %2429 = vmatpush.bf16.msra.mxu0 %v1692
      %2430 = vmatpush.bf16.msra.mxu0 %v1684
      %2431 = vmatpush.bf16.msra.mxu0 %v1676
      %2432 = vmatpush.bf16.msra.mxu0 %v1668
      %2433 = vmatpush.bf16.msra.mxu0 %v1660
      %2434 = vmatmul.bf16.gmra.mxu0 %v497
      %v2435 = vpop.f32.mrf.mxu0
      %v2436 = vadd.f32 %v2422, %v2435
      %v2437 = vpop.f32.mrf.mxu0
      %v2438 = vadd.f32 %v2424, %v2437
      %2439 = vdwg.mxu0
      %2440 = vmatpush.bf16.msra.mxu0 %v1780
      %2441 = vmatpush.bf16.msra.mxu0 %v1772
      %2442 = vmatpush.bf16.msra.mxu0 %v1764
      %2443 = vmatpush.bf16.msra.mxu0 %v1756
      %2444 = vmatpush.bf16.msra.mxu0 %v1748
      %2445 = vmatpush.bf16.msra.mxu0 %v1740
      %2446 = vmatpush.bf16.msra.mxu0 %v1732
      %2447 = vmatpush.bf16.msra.mxu0 %v1724
      %2448 = vmatmul.bf16.gmra.mxu0 %v498
      %v2449 = vpop.f32.mrf.mxu0
      %v2450 = vadd.f32 %v2436, %v2449
      %v2451 = vpop.f32.mrf.mxu0
      %v2452 = vadd.f32 %v2438, %v2451
      %2453 = vdwg.mxu0
      %2454 = vmatpush.bf16.msra.mxu0 %v1525
      %2455 = vmatpush.bf16.msra.mxu0 %v1517
      %2456 = vmatpush.bf16.msra.mxu0 %v1509
      %2457 = vmatpush.bf16.msra.mxu0 %v1501
      %2458 = vmatpush.bf16.msra.mxu0 %v1493
      %2459 = vmatpush.bf16.msra.mxu0 %v1485
      %2460 = vmatpush.bf16.msra.mxu0 %v1477
      %2461 = vmatpush.bf16.msra.mxu0 %v1469
      %2462 = vmatmul.bf16.gmra.mxu0 %v494
      %v2463 = vpop.f32.mrf.mxu0
      %v2464 = vadd.f32 0.0, %v2463
      %v2465 = vpop.f32.mrf.mxu0
      %v2466 = vadd.f32 0.0, %v2465
      %2467 = vdwg.mxu0
      %2468 = vmatpush.bf16.msra.mxu0 %v1589
      %2469 = vmatpush.bf16.msra.mxu0 %v1581
      %2470 = vmatpush.bf16.msra.mxu0 %v1573
      %2471 = vmatpush.bf16.msra.mxu0 %v1565
      %2472 = vmatpush.bf16.msra.mxu0 %v1557
      %2473 = vmatpush.bf16.msra.mxu0 %v1549
      %2474 = vmatpush.bf16.msra.mxu0 %v1541
      %2475 = vmatpush.bf16.msra.mxu0 %v1533
      %2476 = vmatmul.bf16.gmra.mxu0 %v495
      %v2477 = vpop.f32.mrf.mxu0
      %v2478 = vadd.f32 %v2464, %v2477
      %v2479 = vpop.f32.mrf.mxu0
      %v2480 = vadd.f32 %v2466, %v2479
      %2481 = vdwg.mxu0
      %2482 = vmatpush.bf16.msra.mxu0 %v1653
      %2483 = vmatpush.bf16.msra.mxu0 %v1645
      %2484 = vmatpush.bf16.msra.mxu0 %v1637
      %2485 = vmatpush.bf16.msra.mxu0 %v1629
      %2486 = vmatpush.bf16.msra.mxu0 %v1621
      %2487 = vmatpush.bf16.msra.mxu0 %v1613
      %2488 = vmatpush.bf16.msra.mxu0 %v1605
      %2489 = vmatpush.bf16.msra.mxu0 %v1597
      %2490 = vmatmul.bf16.gmra.mxu0 %v496
      %v2491 = vpop.f32.mrf.mxu0
      %v2492 = vadd.f32 %v2478, %v2491
      %v2493 = vpop.f32.mrf.mxu0
      %v2494 = vadd.f32 %v2480, %v2493
      %2495 = vdwg.mxu0
      %2496 = vmatpush.bf16.msra.mxu0 %v1717
      %2497 = vmatpush.bf16.msra.mxu0 %v1709
      %2498 = vmatpush.bf16.msra.mxu0 %v1701
      %2499 = vmatpush.bf16.msra.mxu0 %v1693
      %2500 = vmatpush.bf16.msra.mxu0 %v1685
      %2501 = vmatpush.bf16.msra.mxu0 %v1677
      %2502 = vmatpush.bf16.msra.mxu0 %v1669
      %2503 = vmatpush.bf16.msra.mxu0 %v1661
      %2504 = vmatmul.bf16.gmra.mxu0 %v497
      %v2505 = vpop.f32.mrf.mxu0
      %v2506 = vadd.f32 %v2492, %v2505
      %v2507 = vpop.f32.mrf.mxu0
      %v2508 = vadd.f32 %v2494, %v2507
      %2509 = vdwg.mxu0
      %2510 = vmatpush.bf16.msra.mxu0 %v1781
      %2511 = vmatpush.bf16.msra.mxu0 %v1773
      %2512 = vmatpush.bf16.msra.mxu0 %v1765
      %2513 = vmatpush.bf16.msra.mxu0 %v1757
      %2514 = vmatpush.bf16.msra.mxu0 %v1749
      %2515 = vmatpush.bf16.msra.mxu0 %v1741
      %2516 = vmatpush.bf16.msra.mxu0 %v1733
      %2517 = vmatpush.bf16.msra.mxu0 %v1725
      %2518 = vmatmul.bf16.gmra.mxu0 %v498
      %v2519 = vpop.f32.mrf.mxu0
      %v2520 = vadd.f32 %v2506, %v2519
      %v2521 = vpop.f32.mrf.mxu0
      %v2522 = vadd.f32 %v2508, %v2521
      %2523 = vdwg.mxu0
      %2524 = vmatpush.bf16.msra.mxu0 %v1526
      %2525 = vmatpush.bf16.msra.mxu0 %v1518
      %2526 = vmatpush.bf16.msra.mxu0 %v1510
      %2527 = vmatpush.bf16.msra.mxu0 %v1502
      %2528 = vmatpush.bf16.msra.mxu0 %v1494
      %2529 = vmatpush.bf16.msra.mxu0 %v1486
      %2530 = vmatpush.bf16.msra.mxu0 %v1478
      %2531 = vmatpush.bf16.msra.mxu0 %v1470
      %2532 = vmatmul.bf16.gmra.mxu0 %v494
      %v2533 = vpop.f32.mrf.mxu0
      %v2534 = vadd.f32 0.0, %v2533
      %v2535 = vpop.f32.mrf.mxu0
      %v2536 = vadd.f32 0.0, %v2535
      %2537 = vdwg.mxu0
      %2538 = vmatpush.bf16.msra.mxu0 %v1590
      %2539 = vmatpush.bf16.msra.mxu0 %v1582
      %2540 = vmatpush.bf16.msra.mxu0 %v1574
      %2541 = vmatpush.bf16.msra.mxu0 %v1566
      %2542 = vmatpush.bf16.msra.mxu0 %v1558
      %2543 = vmatpush.bf16.msra.mxu0 %v1550
      %2544 = vmatpush.bf16.msra.mxu0 %v1542
      %2545 = vmatpush.bf16.msra.mxu0 %v1534
      %2546 = vmatmul.bf16.gmra.mxu0 %v495
      %v2547 = vpop.f32.mrf.mxu0
      %v2548 = vadd.f32 %v2534, %v2547
      %v2549 = vpop.f32.mrf.mxu0
      %v2550 = vadd.f32 %v2536, %v2549
      %2551 = vdwg.mxu0
      %2552 = vmatpush.bf16.msra.mxu0 %v1654
      %2553 = vmatpush.bf16.msra.mxu0 %v1646
      %2554 = vmatpush.bf16.msra.mxu0 %v1638
      %2555 = vmatpush.bf16.msra.mxu0 %v1630
      %2556 = vmatpush.bf16.msra.mxu0 %v1622
      %2557 = vmatpush.bf16.msra.mxu0 %v1614
      %2558 = vmatpush.bf16.msra.mxu0 %v1606
      %2559 = vmatpush.bf16.msra.mxu0 %v1598
      %2560 = vmatmul.bf16.gmra.mxu0 %v496
      %v2561 = vpop.f32.mrf.mxu0
      %v2562 = vadd.f32 %v2548, %v2561
      %v2563 = vpop.f32.mrf.mxu0
      %v2564 = vadd.f32 %v2550, %v2563
      %2565 = vdwg.mxu0
      %2566 = vmatpush.bf16.msra.mxu0 %v1718
      %2567 = vmatpush.bf16.msra.mxu0 %v1710
      %2568 = vmatpush.bf16.msra.mxu0 %v1702
      %2569 = vmatpush.bf16.msra.mxu0 %v1694
      %2570 = vmatpush.bf16.msra.mxu0 %v1686
      %2571 = vmatpush.bf16.msra.mxu0 %v1678
      %2572 = vmatpush.bf16.msra.mxu0 %v1670
      %2573 = vmatpush.bf16.msra.mxu0 %v1662
      %2574 = vmatmul.bf16.gmra.mxu0 %v497
      %v2575 = vpop.f32.mrf.mxu0
      %v2576 = vadd.f32 %v2562, %v2575
      %v2577 = vpop.f32.mrf.mxu0
      %v2578 = vadd.f32 %v2564, %v2577
      %2579 = vdwg.mxu0
      %2580 = vmatpush.bf16.msra.mxu0 %v1782
      %2581 = vmatpush.bf16.msra.mxu0 %v1774
      %2582 = vmatpush.bf16.msra.mxu0 %v1766
      %2583 = vmatpush.bf16.msra.mxu0 %v1758
      %2584 = vmatpush.bf16.msra.mxu0 %v1750
      %2585 = vmatpush.bf16.msra.mxu0 %v1742
      %2586 = vmatpush.bf16.msra.mxu0 %v1734
      %2587 = vmatpush.bf16.msra.mxu0 %v1726
      %2588 = vmatmul.bf16.gmra.mxu0 %v498
      %v2589 = vpop.f32.mrf.mxu0
      %v2590 = vadd.f32 %v2576, %v2589
      %v2591 = vpop.f32.mrf.mxu0
      %v2592 = vadd.f32 %v2578, %v2591
      %2593 = vdwg.mxu0
      %2594 = vmatpush.bf16.msra.mxu0 %v1527
      %2595 = vmatpush.bf16.msra.mxu0 %v1519
      %2596 = vmatpush.bf16.msra.mxu0 %v1511
      %2597 = vmatpush.bf16.msra.mxu0 %v1503
      %2598 = vmatpush.bf16.msra.mxu0 %v1495
      %2599 = vmatpush.bf16.msra.mxu0 %v1487
      %2600 = vmatpush.bf16.msra.mxu0 %v1479
      %2601 = vmatpush.bf16.msra.mxu0 %v1471
      %2602 = vmatmul.bf16.gmra.mxu0 %v494
      %v2603 = vpop.f32.mrf.mxu0
      %v2604 = vadd.f32 0.0, %v2603
      %v2605 = vpop.f32.mrf.mxu0
      %v2606 = vadd.f32 0.0, %v2605
      %2607 = vdwg.mxu0
      %2608 = vmatpush.bf16.msra.mxu0 %v1591
      %2609 = vmatpush.bf16.msra.mxu0 %v1583
      %2610 = vmatpush.bf16.msra.mxu0 %v1575
      %2611 = vmatpush.bf16.msra.mxu0 %v1567
      %2612 = vmatpush.bf16.msra.mxu0 %v1559
      %2613 = vmatpush.bf16.msra.mxu0 %v1551
      %2614 = vmatpush.bf16.msra.mxu0 %v1543
      %2615 = vmatpush.bf16.msra.mxu0 %v1535
      %2616 = vmatmul.bf16.gmra.mxu0 %v495
      %v2617 = vpop.f32.mrf.mxu0
      %v2618 = vadd.f32 %v2604, %v2617
      %v2619 = vpop.f32.mrf.mxu0
      %v2620 = vadd.f32 %v2606, %v2619
      %2621 = vdwg.mxu0
      %2622 = vmatpush.bf16.msra.mxu0 %v1655
      %2623 = vmatpush.bf16.msra.mxu0 %v1647
      %2624 = vmatpush.bf16.msra.mxu0 %v1639
      %2625 = vmatpush.bf16.msra.mxu0 %v1631
      %2626 = vmatpush.bf16.msra.mxu0 %v1623
      %2627 = vmatpush.bf16.msra.mxu0 %v1615
      %2628 = vmatpush.bf16.msra.mxu0 %v1607
      %2629 = vmatpush.bf16.msra.mxu0 %v1599
      %2630 = vmatmul.bf16.gmra.mxu0 %v496
      %v2631 = vpop.f32.mrf.mxu0
      %v2632 = vadd.f32 %v2618, %v2631
      %v2633 = vpop.f32.mrf.mxu0
      %v2634 = vadd.f32 %v2620, %v2633
      %2635 = vdwg.mxu0
      %2636 = vmatpush.bf16.msra.mxu0 %v1719
      %2637 = vmatpush.bf16.msra.mxu0 %v1711
      %2638 = vmatpush.bf16.msra.mxu0 %v1703
      %2639 = vmatpush.bf16.msra.mxu0 %v1695
      %2640 = vmatpush.bf16.msra.mxu0 %v1687
      %2641 = vmatpush.bf16.msra.mxu0 %v1679
      %2642 = vmatpush.bf16.msra.mxu0 %v1671
      %2643 = vmatpush.bf16.msra.mxu0 %v1663
      %2644 = vmatmul.bf16.gmra.mxu0 %v497
      %v2645 = vpop.f32.mrf.mxu0
      %v2646 = vadd.f32 %v2632, %v2645
      %v2647 = vpop.f32.mrf.mxu0
      %v2648 = vadd.f32 %v2634, %v2647
      %2649 = vdwg.mxu0
      %2650 = vmatpush.bf16.msra.mxu0 %v1783
      %2651 = vmatpush.bf16.msra.mxu0 %v1775
      %2652 = vmatpush.bf16.msra.mxu0 %v1767
      %2653 = vmatpush.bf16.msra.mxu0 %v1759
      %2654 = vmatpush.bf16.msra.mxu0 %v1751
      %2655 = vmatpush.bf16.msra.mxu0 %v1743
      %2656 = vmatpush.bf16.msra.mxu0 %v1735
      %2657 = vmatpush.bf16.msra.mxu0 %v1727
      %2658 = vmatmul.bf16.gmra.mxu0 %v498
      %v2659 = vpop.f32.mrf.mxu0
      %v2660 = vadd.f32 %v2646, %v2659
      %v2661 = vpop.f32.mrf.mxu0
      %v2662 = vadd.f32 %v2648, %v2661
      %2663 = vdwg.mxu0
      %v2664 = vpack.c.bf16 %v2240, %v2170
      %v2665 = vpack.c.bf16 %v2380, %v2310
      %v2666 = vpack.c.bf16 %v2520, %v2450
      %v2667 = vpack.c.bf16 %v2660, %v2590
      %v2668 = vpack.c.bf16 %v2242, %v2172
      %v2669 = vpack.c.bf16 %v2382, %v2312
      %v2670 = vpack.c.bf16 %v2522, %v2452
      %v2671 = vpack.c.bf16 %v2662, %v2592
      %2672 = vst [vmem:[%s150] sm:$0xff] %v2664
      %2673 = vst [vmem:[%s150 + $0x8] sm:$0xff] %v2665
      %2674 = vst [vmem:[%s150 + $0x10] sm:$0xff] %v2666
      %2675 = vst [vmem:[%s150 + $0x18] sm:$0xff] %v2667
      %2676 = vst [vmem:[%s150 + $0x20] sm:$0xff] %v2668
      %2677 = vst [vmem:[%s150 + $0x28] sm:$0xff] %v2669
      %2678 = vst [vmem:[%s150 + $0x30] sm:$0xff] %v2670
      %2679 = vst [vmem:[%s150 + $0x38] sm:$0xff] %v2671
      %s2680 = smul.u32 2, %s13
      %p2681 = scmp.lt.s32.totalorder %s2680, 3
      %s2682 = scalar_select %p2681, %s2680, 3
      %s2683 = smul.addr %s2682, 8
      %s2684 = smul.addr %s2683, 4
      %s2685 = scalar_lea.vmem %s2, %s2684
      // Predicated region
      $region29: #{gcn_forward.6} parent=27 // pred_check
        %p2686 = pneg %p78
      $region30: #{gcn_forward.6} parent=27 // pred_check_branch
        %2688 = sbr.rel (%p2686) target = $region32
      $region31: #{gcn_forward.6} parent=27 // pred_region
        %s2689 = smul.u32 2, %s13
      $region32: #{gcn_forward.6} parent=27 // pred_fallthru
        _
    $region28: #{gcn_forward.6} parent=5 // pred_fallthru
      _
    %p2690 = scmp.le.s32.totalorder 2, %s8
    // Predicated region
    $region33: #{gcn_forward.6} parent=5 // pred_check
      %p2691 = pneg %p2690
    $region34: #{gcn_forward.6} parent=5 // pred_check_branch
      %2693 = sbr.rel (%p2691) target = $region36
    $region35: #{gcn_forward.6} parent=5 // pred_region
      %s2694 = ssub.s32 %s8, 2
      // Predicated region
      $region37: #{gcn_forward.6} parent=35 // pred_check
        %p2695 = pneg %p84
      $region38: #{gcn_forward.6} parent=35 // pred_check_branch
        %2697 = sbr.rel (%p2695) target = $region40
      $region39: #{gcn_forward.6} parent=35 // pred_region
        %s2698 = smul.u32 2, %s14
        %p2699 = scmp.lt.s32.totalorder %s2698, 3
        %s2700 = scalar_select %p2699, %s2698, 3
        %s2701 = smul.addr %s2700, 8
        %s2702 = smul.addr %s2701, 4
        %s2703 = scalar_lea.vmem %s2, %s2702
      $region40: #{gcn_forward.6} parent=35 // pred_fallthru
        _
    $region36: #{gcn_forward.6} parent=5 // pred_fallthru
      _
  $region6: #{gcn_forward.6} parent=0 // loop_footer
    %s12 = sadd.s32 1, %s8
  $region7: #{gcn_forward.6} parent=0 // loop_footer_branch
    %7 = sbr.rel target = $region3
  $region8: #{gcn_forward.6} parent=0 // loop_exit
    _

</llo_original>
